<compile_context>
chip_gen: v7x
topology: tpu7x:2x2x1
jax: 0.10.0
libtpu: 0.0.40
codegen_flags: <defaults>
</compile_context>

<pallas_src>
import jax
import jax.numpy as jnp
from jax.experimental import pallas as pl
from jax.experimental.pallas import tpu as pltpu

# Small, module-consistent shapes
N = 64          # nodes per graph
F = 16          # n_features
H = 32          # hidden_dims
C = 8           # n_classes
LAYERS = 3      # GatedGraphConv propagation steps
B = 4           # graphs per batch


def ggnn_kernel(x_ref, adj_ref, w_in_ref, ggc_w_ref, w_gi_ref, w_gh_ref,
                b_gate_ref, w_out_ref, out_ref):
    rows = x_ref.shape[0]                     # BT*N rows stacked along M (static)

    # input transform: x @ weight_in           (rows, F) @ (F, H) -> (rows, H)
    h = jnp.dot(x_ref[...], w_in_ref[...], preferred_element_type=jnp.float32)

    adj = adj_ref[...].astype(jnp.float32)    # block-diag (rows, rows); bf16 in HBM (0/1 exact)
    ggc_w = ggc_w_ref[...]                    # (H, LAYERS*H) lane-packed per-step weights
    w_gi = w_gi_ref[...]                      # (H, 4H)  gate weights acting on messages
    w_gh = w_gh_ref[...]                      # (H, 4H)  gate weights acting on hidden state
    # Hoisted: one (1,4H)->(rows,4H) broadcast for all layers.
    b_b = jnp.broadcast_to(b_gate_ref[...], (rows, 4 * H))

    # GatedGraphConv: LAYERS steps (static unroll)
    for l in range(LAYERS):
        # msg = adj @ (h @ W_l)   -- sum aggregation over incoming edges
        w_l = ggc_w[:, l * H:(l + 1) * H]                                     # (H, H)
        msg = jnp.dot(h, w_l, preferred_element_type=jnp.float32)             # (rows, H)
        msg = jnp.dot(adj, msg, preferred_element_type=jnp.float32)           # (rows, H)

        # Fused GRUCell(msg, h): row-split gate matmul (no lane concat).
        g = (jnp.dot(msg, w_gi, preferred_element_type=jnp.float32)
             + jnp.dot(h, w_gh, preferred_element_type=jnp.float32)
             + b_b)                                                           # (rows, 4H)

        r = jax.nn.sigmoid(g[:, 0:H])                                 # reset gate
        z = jax.nn.sigmoid(g[:, H:2 * H])                             # update gate
        n = jnp.tanh(g[:, 2 * H:3 * H] + r * g[:, 3 * H:4 * H])       # new gate
        h = (1.0 - z) * n + z * h

    # output transform: h @ weight_out          (rows, H) @ (H, C) -> (rows, C)
    # (C=8 < 128 lanes -> masked stores; output is tiny so not worth re-plumbing.)
    out_ref[...] = jnp.dot(h, w_out_ref[...], preferred_element_type=jnp.float32)


def _block_diag_adj(adj, bt):
    """(B, N, N) -> (B//bt, bt*N, bt*N) block-diagonal adjacency per grid step."""
    batch, n, _ = adj.shape
    steps = batch // bt
    a = adj.reshape(steps, bt, n, n)
    eye = jnp.eye(bt, dtype=adj.dtype)
    bd = jnp.einsum('sinm,ij->sinjm', a, eye)
    return bd.reshape(steps, bt * n, bt * n)


def ggnn_forward(x, adj, packed, graphs_per_step=None):
    """x: (B, N, F), adj: (B, N, N) -> (B, N, C)."""
    w_in, ggc_w, w_gi, w_gh, b_gate, w_out = packed
    batch = x.shape[0]
    if graphs_per_step is None:
        # grid=(2,): keeps both v7x TensorCores busy. On v5e/v6e (1 TC) pass
        # graphs_per_step=batch to fully collapse the grid.
        graphs_per_step = max(1, batch // 2)
    assert batch % graphs_per_step == 0
    steps = batch // graphs_per_step
    rows = graphs_per_step * N

    x_s = x.reshape(steps, rows, F)
    adj_bd = _block_diag_adj(adj, graphs_per_step).astype(jnp.bfloat16)  # 0/1 exact in bf16

    out = pl.pallas_call(
        ggnn_kernel,
        out_shape=jax.ShapeDtypeStruct((steps, rows, C), jnp.float32),
        grid=(steps,),
        in_specs=[
            # per-step tensors: BT graphs per grid step (leading dim squeezed)
            pl.BlockSpec((None, rows, F), lambda s: (s, 0, 0)),
            pl.BlockSpec((None, rows, rows), lambda s: (s, 0, 0)),
            # weights: full-array blocks, same block every step (no re-fetch)
            pl.BlockSpec((F, H), lambda s: (0, 0)),
            pl.BlockSpec((H, LAYERS * H), lambda s: (0, 0)),
            pl.BlockSpec((H, 4 * H), lambda s: (0, 0)),
            pl.BlockSpec((H, 4 * H), lambda s: (0, 0)),
            pl.BlockSpec((1, 4 * H), lambda s: (0, 0)),
            pl.BlockSpec((H, C), lambda s: (0, 0)),
        ],
        out_specs=pl.BlockSpec((None, rows, C), lambda s: (s, 0, 0)),
        compiler_params=pltpu.CompilerParams(
            dimension_semantics=("parallel",)),
    )(x_s, adj_bd, w_in, ggc_w, w_gi, w_gh, b_gate, w_out)
    return out.reshape(batch, N, C)


# ----------------------------- reference & params -----------------------------

def ggnn_reference_single(x, adj, params):
    """Pure-JAX mirror of the PyTorch forward (one graph), for correctness."""
    w_in, ggc_w, gru_wi, gru_wh, gru_bi, gru_bh, w_out = params
    h = x @ w_in
    for l in range(LAYERS):
        m = adj @ (h @ ggc_w[l])
        i_r, h_r = m @ gru_wi[0] + gru_bi[0], h @ gru_wh[0] + gru_bh[0]
        i_z, h_z = m @ gru_wi[1] + gru_bi[1], h @ gru_wh[1] + gru_bh[1]
        i_n, h_n = m @ gru_wi[2] + gru_bi[2], h @ gru_wh[2] + gru_bh[2]
        r = jax.nn.sigmoid(i_r + h_r)
        z = jax.nn.sigmoid(i_z + h_z)
        n = jnp.tanh(i_n + r * h_n)
        h = (1.0 - z) * n + z * h
    return h @ w_out


def glorot(key, shape):
    # PyG glorot: U(-a, a), a = sqrt(6 / (fan_in + fan_out)) over last two dims
    a = (6.0 / (shape[-2] + shape[-1])) ** 0.5
    return jax.random.uniform(key, shape, jnp.float32, -a, a)


def make_params(key):
    ks = jax.random.split(key, 7)
    w_in = glorot(ks[0], (F, H))
    w_out = glorot(ks[1], (H, C))
    ggc_w = glorot(ks[2], (LAYERS, H, H))
    # torch.nn.GRUCell init: U(-1/sqrt(H), 1/sqrt(H)); stored split per gate (r, z, n),
    # already transposed so the kernel only does row-major [M,*] @ [*,*] matmuls.
    s = 1.0 / (H ** 0.5)
    gru_wi = jax.random.uniform(ks[3], (3, H, H), jnp.float32, -s, s)
    gru_wh = jax.random.uniform(ks[4], (3, H, H), jnp.float32, -s, s)
    gru_bi = jax.random.uniform(ks[5], (3, 1, H), jnp.float32, -s, s)
    gru_bh = jax.random.uniform(ks[6], (3, 1, H), jnp.float32, -s, s)
    return (w_in, ggc_w, gru_wi, gru_wh, gru_bi, gru_bh, w_out)


def pack_params(params):
    """Lane-dense packing for the kernel (done once in the wrapper)."""
    w_in, ggc_w, gru_wi, gru_wh, gru_bi, gru_bh, w_out = params
    # GGC per-step weights concatenated along lanes: (H, LAYERS*H)
    ggc_w_packed = jnp.concatenate([ggc_w[l] for l in range(LAYERS)], axis=-1)
    # Row-split fused gate weights, each (H, 4H), columns = [r | z | n_input | n_hidden].
    # Zero blocks keep the n contributions separate so r*(Wh_n h + bh_n) stays exact.
    zeros = jnp.zeros((H, H), jnp.float32)
    w_gi = jnp.concatenate([gru_wi[0], gru_wi[1], gru_wi[2], zeros], axis=-1)  # acts on msg
    w_gh = jnp.concatenate([gru_wh[0], gru_wh[1], zeros, gru_wh[2]], axis=-1)  # acts on h
    # Fused bias (1, 4H): r/z biases pre-summed; n keeps bi_n and bh_n separate
    # because torch GRUCell applies r only to (Wh_n h + bh_n).
    b_gate = jnp.concatenate([gru_bi[0] + gru_bh[0],
                              gru_bi[1] + gru_bh[1],
                              gru_bi[2],
                              gru_bh[2]], axis=-1)                             # (1, 4H)
    return (w_in, ggc_w_packed, w_gi, w_gh, b_gate, w_out)


if __name__ == "__main__":
    key = jax.random.PRNGKey(0)
    k_x, k_adj, k_p = jax.random.split(key, 3)

    x = jax.random.normal(k_x, (B, N, F), jnp.float32)
    # random directed 0/1 adjacencies
    adj = (jax.random.uniform(k_adj, (B, N, N)) < 0.1).astype(jnp.float32)

    params = make_params(k_p)
    packed = pack_params(params)

    out = jax.block_until_ready(ggnn_forward(x, adj, packed))
    ref = jax.block_until_ready(
        jax.vmap(lambda xb, ab: ggnn_reference_single(xb, ab, params))(x, adj))

    assert out.shape == (B, N, C) and out.dtype == jnp.float32
    assert jnp.allclose(out, ref, atol=1e-3, rtol=1e-3), "mismatch vs reference"

    # nvtx_push / nvtx_pop / log_memory in the PyTorch module are profiling no-ops.
    # TODO(synk): the .inference() subgraph-loader path (mini-batched CPU loader) has no
    # in-kernel equivalent; only the dense forward() is implemented.
    print("KERNEL_OK")
</pallas_src>

<mosaic_0001>
module attributes {stable_mosaic.version = 11 : i64} {
  func.func @ggnn_kernel(%arg0: i32, %arg1: memref<1x128x16xf32, #tpu.memory_space<vmem>>, %arg2: memref<1x128x128xbf16, #tpu.memory_space<vmem>>, %arg3: memref<16x32xf32, #tpu.memory_space<vmem>>, %arg4: memref<32x96xf32, #tpu.memory_space<vmem>>, %arg5: memref<32x128xf32, #tpu.memory_space<vmem>>, %arg6: memref<32x128xf32, #tpu.memory_space<vmem>>, %arg7: memref<1x128xf32, #tpu.memory_space<vmem>>, %arg8: memref<32x8xf32, #tpu.memory_space<vmem>>, %arg9: memref<1x128x8xf32, #tpu.memory_space<vmem>>) attributes {dimension_semantics = [#tpu.dimension_semantics<parallel>], iteration_bounds = array<i64: 2>, scalar_prefetch = 0 : i64, scratch_operands = 0 : i64, tpu.core_type = #tpu.core_type<tc>, window_params = [{transform_indices = @transform_0, window_bounds = array<i64: 1, 128, 16>}, {transform_indices = @transform_1, window_bounds = array<i64: 1, 128, 128>}, {pipeline_mode = #tpu.pipeline_mode<synchronous>, transform_indices = @transform_2, window_bounds = array<i64: 16, 32>}, {pipeline_mode = #tpu.pipeline_mode<synchronous>, transform_indices = @transform_3, window_bounds = array<i64: 32, 96>}, {pipeline_mode = #tpu.pipeline_mode<synchronous>, transform_indices = @transform_4, window_bounds = array<i64: 32, 128>}, {pipeline_mode = #tpu.pipeline_mode<synchronous>, transform_indices = @transform_5, window_bounds = array<i64: 32, 128>}, {pipeline_mode = #tpu.pipeline_mode<synchronous>, transform_indices = @transform_6, window_bounds = array<i64: 1, 128>}, {pipeline_mode = #tpu.pipeline_mode<synchronous>, transform_indices = @transform_7, window_bounds = array<i64: 32, 8>}, {transform_indices = @transform_8, window_bounds = array<i64: 1, 128, 8>}]} {
    %c0 = arith.constant 0 : index
    %c0_0 = arith.constant 0 : index
    %c0_1 = arith.constant 0 : index
    %0 = vector.load %arg1[%c0, %c0_0, %c0_1] : memref<1x128x16xf32, #tpu.memory_space<vmem>>, vector<1x128x16xf32>
    %1 = vector.shape_cast %0 : vector<1x128x16xf32> to vector<128x16xf32>
    %c0_2 = arith.constant 0 : index
    %c0_3 = arith.constant 0 : index
    %2 = vector.load %arg3[%c0_2, %c0_3] : memref<16x32xf32, #tpu.memory_space<vmem>>, vector<16x32xf32>
    %cst = arith.constant dense<0.000000e+00> : vector<128x32xf32>
    %3 = tpu.matmul %1, %2, %cst {dimension_numbers = #tpu.dot_dimension_numbers<[1], [0], [0], [1], [0, 0, 1, 1], [], []>} : vector<128x16xf32>, vector<16x32xf32>, vector<128x32xf32> -> vector<128x32xf32>
    %c0_4 = arith.constant 0 : index
    %c0_5 = arith.constant 0 : index
    %c0_6 = arith.constant 0 : index
    %4 = vector.load %arg2[%c0_4, %c0_5, %c0_6] : memref<1x128x128xbf16, #tpu.memory_space<vmem>>, vector<1x128x128xbf16>
    %5 = vector.shape_cast %4 : vector<1x128x128xbf16> to vector<128x128xbf16>
    %6 = arith.extf %5 : vector<128x128xbf16> to vector<128x128xf32>
    %c0_7 = arith.constant 0 : index
    %c0_8 = arith.constant 0 : index
    %7 = vector.load %arg4[%c0_7, %c0_8] : memref<32x96xf32, #tpu.memory_space<vmem>>, vector<32x96xf32>
    %c0_9 = arith.constant 0 : index
    %c0_10 = arith.constant 0 : index
    %8 = vector.load %arg5[%c0_9, %c0_10] : memref<32x128xf32, #tpu.memory_space<vmem>>, vector<32x128xf32>
    %c0_11 = arith.constant 0 : index
    %c0_12 = arith.constant 0 : index
    %9 = vector.load %arg6[%c0_11, %c0_12] : memref<32x128xf32, #tpu.memory_space<vmem>>, vector<32x128xf32>
    %c0_13 = arith.constant 0 : index
    %c0_14 = arith.constant 0 : index
    %10 = vector.load %arg7[%c0_13, %c0_14] : memref<1x128xf32, #tpu.memory_space<vmem>>, vector<1x128xf32>
    %11 = vector.shape_cast %10 : vector<1x128xf32> to vector<1x128xf32>
    %12 = vector.broadcast %11 : vector<1x128xf32> to vector<128x128xf32>
    %13 = vector.extract_strided_slice %7 {offsets = [0, 0], sizes = [32, 32], strides = [1, 1]} : vector<32x96xf32> to vector<32x32xf32>
    %cst_15 = arith.constant dense<0.000000e+00> : vector<128x32xf32>
    %14 = tpu.matmul %3, %13, %cst_15 {dimension_numbers = #tpu.dot_dimension_numbers<[1], [0], [0], [1], [0, 0, 1, 1], [], []>} : vector<128x32xf32>, vector<32x32xf32>, vector<128x32xf32> -> vector<128x32xf32>
    %cst_16 = arith.constant dense<0.000000e+00> : vector<128x32xf32>
    %15 = tpu.matmul %6, %14, %cst_16 {dimension_numbers = #tpu.dot_dimension_numbers<[1], [0], [0], [1], [0, 0, 1, 1], [], []>} : vector<128x128xf32>, vector<128x32xf32>, vector<128x32xf32> -> vector<128x32xf32>
    %cst_17 = arith.constant dense<0.000000e+00> : vector<128x128xf32>
    %16 = tpu.matmul %15, %8, %cst_17 {dimension_numbers = #tpu.dot_dimension_numbers<[1], [0], [0], [1], [0, 0, 1, 1], [], []>} : vector<128x32xf32>, vector<32x128xf32>, vector<128x128xf32> -> vector<128x128xf32>
    %cst_18 = arith.constant dense<0.000000e+00> : vector<128x128xf32>
    %17 = tpu.matmul %3, %9, %cst_18 {dimension_numbers = #tpu.dot_dimension_numbers<[1], [0], [0], [1], [0, 0, 1, 1], [], []>} : vector<128x32xf32>, vector<32x128xf32>, vector<128x128xf32> -> vector<128x128xf32>
    %18 = arith.addf %16, %17 : vector<128x128xf32>
    %19 = arith.addf %18, %12 : vector<128x128xf32>
    %20 = vector.extract_strided_slice %19 {offsets = [0, 0], sizes = [128, 32], strides = [1, 1]} : vector<128x128xf32> to vector<128x32xf32>
    %21 = arith.negf %20 : vector<128x32xf32>
    %22 = math.exp %21 : vector<128x32xf32>
    %cst_19 = arith.constant 1.000000e+00 : f32
    %23 = vector.broadcast %cst_19 : f32 to vector<128x32xf32>
    %24 = arith.addf %23, %22 : vector<128x32xf32>
    %25 = arith.divf %23, %24 : vector<128x32xf32>
    %26 = vector.extract_strided_slice %19 {offsets = [0, 32], sizes = [128, 32], strides = [1, 1]} : vector<128x128xf32> to vector<128x32xf32>
    %27 = arith.negf %26 : vector<128x32xf32>
    %28 = math.exp %27 : vector<128x32xf32>
    %cst_20 = arith.constant 1.000000e+00 : f32
    %29 = vector.broadcast %cst_20 : f32 to vector<128x32xf32>
    %30 = arith.addf %29, %28 : vector<128x32xf32>
    %31 = arith.divf %29, %30 : vector<128x32xf32>
    %32 = vector.extract_strided_slice %19 {offsets = [0, 64], sizes = [128, 32], strides = [1, 1]} : vector<128x128xf32> to vector<128x32xf32>
    %33 = vector.extract_strided_slice %19 {offsets = [0, 96], sizes = [128, 32], strides = [1, 1]} : vector<128x128xf32> to vector<128x32xf32>
    %34 = arith.mulf %25, %33 : vector<128x32xf32>
    %35 = arith.addf %32, %34 : vector<128x32xf32>
    %36 = math.tanh %35 : vector<128x32xf32>
    %cst_21 = arith.constant 1.000000e+00 : f32
    %37 = vector.broadcast %cst_21 : f32 to vector<128x32xf32>
    %38 = arith.subf %37, %31 : vector<128x32xf32>
    %39 = arith.mulf %38, %36 : vector<128x32xf32>
    %40 = arith.mulf %31, %3 : vector<128x32xf32>
    %41 = arith.addf %39, %40 : vector<128x32xf32>
    %42 = vector.extract_strided_slice %7 {offsets = [0, 32], sizes = [32, 32], strides = [1, 1]} : vector<32x96xf32> to vector<32x32xf32>
    %cst_22 = arith.constant dense<0.000000e+00> : vector<128x32xf32>
    %43 = tpu.matmul %41, %42, %cst_22 {dimension_numbers = #tpu.dot_dimension_numbers<[1], [0], [0], [1], [0, 0, 1, 1], [], []>} : vector<128x32xf32>, vector<32x32xf32>, vector<128x32xf32> -> vector<128x32xf32>
    %cst_23 = arith.constant dense<0.000000e+00> : vector<128x32xf32>
    %44 = tpu.matmul %6, %43, %cst_23 {dimension_numbers = #tpu.dot_dimension_numbers<[1], [0], [0], [1], [0, 0, 1, 1], [], []>} : vector<128x128xf32>, vector<128x32xf32>, vector<128x32xf32> -> vector<128x32xf32>
    %cst_24 = arith.constant dense<0.000000e+00> : vector<128x128xf32>
    %45 = tpu.matmul %44, %8, %cst_24 {dimension_numbers = #tpu.dot_dimension_numbers<[1], [0], [0], [1], [0, 0, 1, 1], [], []>} : vector<128x32xf32>, vector<32x128xf32>, vector<128x128xf32> -> vector<128x128xf32>
    %cst_25 = arith.constant dense<0.000000e+00> : vector<128x128xf32>
    %46 = tpu.matmul %41, %9, %cst_25 {dimension_numbers = #tpu.dot_dimension_numbers<[1], [0], [0], [1], [0, 0, 1, 1], [], []>} : vector<128x32xf32>, vector<32x128xf32>, vector<128x128xf32> -> vector<128x128xf32>
    %47 = arith.addf %45, %46 : vector<128x128xf32>
    %48 = arith.addf %47, %12 : vector<128x128xf32>
    %49 = vector.extract_strided_slice %48 {offsets = [0, 0], sizes = [128, 32], strides = [1, 1]} : vector<128x128xf32> to vector<128x32xf32>
    %50 = arith.negf %49 : vector<128x32xf32>
    %51 = math.exp %50 : vector<128x32xf32>
    %cst_26 = arith.constant 1.000000e+00 : f32
    %52 = vector.broadcast %cst_26 : f32 to vector<128x32xf32>
    %53 = arith.addf %52, %51 : vector<128x32xf32>
    %54 = arith.divf %52, %53 : vector<128x32xf32>
    %55 = vector.extract_strided_slice %48 {offsets = [0, 32], sizes = [128, 32], strides = [1, 1]} : vector<128x128xf32> to vector<128x32xf32>
    %56 = arith.negf %55 : vector<128x32xf32>
    %57 = math.exp %56 : vector<128x32xf32>
    %cst_27 = arith.constant 1.000000e+00 : f32
    %58 = vector.broadcast %cst_27 : f32 to vector<128x32xf32>
    %59 = arith.addf %58, %57 : vector<128x32xf32>
    %60 = arith.divf %58, %59 : vector<128x32xf32>
    %61 = vector.extract_strided_slice %48 {offsets = [0, 64], sizes = [128, 32], strides = [1, 1]} : vector<128x128xf32> to vector<128x32xf32>
    %62 = vector.extract_strided_slice %48 {offsets = [0, 96], sizes = [128, 32], strides = [1, 1]} : vector<128x128xf32> to vector<128x32xf32>
    %63 = arith.mulf %54, %62 : vector<128x32xf32>
    %64 = arith.addf %61, %63 : vector<128x32xf32>
    %65 = math.tanh %64 : vector<128x32xf32>
    %cst_28 = arith.constant 1.000000e+00 : f32
    %66 = vector.broadcast %cst_28 : f32 to vector<128x32xf32>
    %67 = arith.subf %66, %60 : vector<128x32xf32>
    %68 = arith.mulf %67, %65 : vector<128x32xf32>
    %69 = arith.mulf %60, %41 : vector<128x32xf32>
    %70 = arith.addf %68, %69 : vector<128x32xf32>
    %71 = vector.extract_strided_slice %7 {offsets = [0, 64], sizes = [32, 32], strides = [1, 1]} : vector<32x96xf32> to vector<32x32xf32>
    %cst_29 = arith.constant dense<0.000000e+00> : vector<128x32xf32>
    %72 = tpu.matmul %70, %71, %cst_29 {dimension_numbers = #tpu.dot_dimension_numbers<[1], [0], [0], [1], [0, 0, 1, 1], [], []>} : vector<128x32xf32>, vector<32x32xf32>, vector<128x32xf32> -> vector<128x32xf32>
    %cst_30 = arith.constant dense<0.000000e+00> : vector<128x32xf32>
    %73 = tpu.matmul %6, %72, %cst_30 {dimension_numbers = #tpu.dot_dimension_numbers<[1], [0], [0], [1], [0, 0, 1, 1], [], []>} : vector<128x128xf32>, vector<128x32xf32>, vector<128x32xf32> -> vector<128x32xf32>
    %cst_31 = arith.constant dense<0.000000e+00> : vector<128x128xf32>
    %74 = tpu.matmul %73, %8, %cst_31 {dimension_numbers = #tpu.dot_dimension_numbers<[1], [0], [0], [1], [0, 0, 1, 1], [], []>} : vector<128x32xf32>, vector<32x128xf32>, vector<128x128xf32> -> vector<128x128xf32>
    %cst_32 = arith.constant dense<0.000000e+00> : vector<128x128xf32>
    %75 = tpu.matmul %70, %9, %cst_32 {dimension_numbers = #tpu.dot_dimension_numbers<[1], [0], [0], [1], [0, 0, 1, 1], [], []>} : vector<128x32xf32>, vector<32x128xf32>, vector<128x128xf32> -> vector<128x128xf32>
    %76 = arith.addf %74, %75 : vector<128x128xf32>
    %77 = arith.addf %76, %12 : vector<128x128xf32>
    %78 = vector.extract_strided_slice %77 {offsets = [0, 0], sizes = [128, 32], strides = [1, 1]} : vector<128x128xf32> to vector<128x32xf32>
    %79 = arith.negf %78 : vector<128x32xf32>
    %80 = math.exp %79 : vector<128x32xf32>
    %cst_33 = arith.constant 1.000000e+00 : f32
    %81 = vector.broadcast %cst_33 : f32 to vector<128x32xf32>
    %82 = arith.addf %81, %80 : vector<128x32xf32>
    %83 = arith.divf %81, %82 : vector<128x32xf32>
    %84 = vector.extract_strided_slice %77 {offsets = [0, 32], sizes = [128, 32], strides = [1, 1]} : vector<128x128xf32> to vector<128x32xf32>
    %85 = arith.negf %84 : vector<128x32xf32>
    %86 = math.exp %85 : vector<128x32xf32>
    %cst_34 = arith.constant 1.000000e+00 : f32
    %87 = vector.broadcast %cst_34 : f32 to vector<128x32xf32>
    %88 = arith.addf %87, %86 : vector<128x32xf32>
    %89 = arith.divf %87, %88 : vector<128x32xf32>
    %90 = vector.extract_strided_slice %77 {offsets = [0, 64], sizes = [128, 32], strides = [1, 1]} : vector<128x128xf32> to vector<128x32xf32>
    %91 = vector.extract_strided_slice %77 {offsets = [0, 96], sizes = [128, 32], strides = [1, 1]} : vector<128x128xf32> to vector<128x32xf32>
    %92 = arith.mulf %83, %91 : vector<128x32xf32>
    %93 = arith.addf %90, %92 : vector<128x32xf32>
    %94 = math.tanh %93 : vector<128x32xf32>
    %cst_35 = arith.constant 1.000000e+00 : f32
    %95 = vector.broadcast %cst_35 : f32 to vector<128x32xf32>
    %96 = arith.subf %95, %89 : vector<128x32xf32>
    %97 = arith.mulf %96, %94 : vector<128x32xf32>
    %98 = arith.mulf %89, %70 : vector<128x32xf32>
    %99 = arith.addf %97, %98 : vector<128x32xf32>
    %c0_36 = arith.constant 0 : index
    %c0_37 = arith.constant 0 : index
    %100 = vector.load %arg8[%c0_36, %c0_37] : memref<32x8xf32, #tpu.memory_space<vmem>>, vector<32x8xf32>
    %cst_38 = arith.constant dense<0.000000e+00> : vector<128x8xf32>
    %101 = tpu.matmul %99, %100, %cst_38 {dimension_numbers = #tpu.dot_dimension_numbers<[1], [0], [0], [1], [0, 0, 1, 1], [], []>} : vector<128x32xf32>, vector<32x8xf32>, vector<128x8xf32> -> vector<128x8xf32>
    %c0_39 = arith.constant 0 : index
    %c0_40 = arith.constant 0 : index
    %c0_41 = arith.constant 0 : index
    %102 = vector.load %arg9[%c0_39, %c0_40, %c0_41] : memref<1x128x8xf32, #tpu.memory_space<vmem>>, vector<1x128x8xf32>
    %103 = vector.shape_cast %102 : vector<1x128x8xf32> to vector<128x8xf32>
    %104 = vector.shape_cast %101 : vector<128x8xf32> to vector<1x128x8xf32>
    tpu.vector_store %arg9[%c0_39, %c0_40, %c0_41], %104 {strides = array<i32>} : memref<1x128x8xf32, #tpu.memory_space<vmem>>, vector<1x128x8xf32>,
    return
  }
  func.func @transform_0(%arg0: i32) -> (i32, i32, i32) {
    %c0_i32 = arith.constant 0 : i32
    %c0_i32_0 = arith.constant 0 : i32
    %c0_i32_1 = arith.constant 0 : i32
    return %arg0, %c0_i32, %c0_i32_0 : i32, i32, i32
  }
  func.func @transform_1(%arg0: i32) -> (i32, i32, i32) {
    %c0_i32 = arith.constant 0 : i32
    %c0_i32_0 = arith.constant 0 : i32
    %c0_i32_1 = arith.constant 0 : i32
    return %arg0, %c0_i32, %c0_i32_0 : i32, i32, i32
  }
  func.func @transform_2(%arg0: i32) -> (i32, i32) {
    %c0_i32 = arith.constant 0 : i32
    %c0_i32_0 = arith.constant 0 : i32
    %c0_i32_1 = arith.constant 0 : i32
    return %c0_i32, %c0_i32_0 : i32, i32
  }
  func.func @transform_3(%arg0: i32) -> (i32, i32) {
    %c0_i32 = arith.constant 0 : i32
    %c0_i32_0 = arith.constant 0 : i32
    %c0_i32_1 = arith.constant 0 : i32
    return %c0_i32, %c0_i32_0 : i32, i32
  }
  func.func @transform_4(%arg0: i32) -> (i32, i32) {
    %c0_i32 = arith.constant 0 : i32
    %c0_i32_0 = arith.constant 0 : i32
    %c0_i32_1 = arith.constant 0 : i32
    return %c0_i32, %c0_i32_0 : i32, i32
  }
  func.func @transform_5(%arg0: i32) -> (i32, i32) {
    %c0_i32 = arith.constant 0 : i32
    %c0_i32_0 = arith.constant 0 : i32
    %c0_i32_1 = arith.constant 0 : i32
    return %c0_i32, %c0_i32_0 : i32, i32
  }
  func.func @transform_6(%arg0: i32) -> (i32, i32) {
    %c0_i32 = arith.constant 0 : i32
    %c0_i32_0 = arith.constant 0 : i32
    %c0_i32_1 = arith.constant 0 : i32
    return %c0_i32, %c0_i32_0 : i32, i32
  }
  func.func @transform_7(%arg0: i32) -> (i32, i32) {
    %c0_i32 = arith.constant 0 : i32
    %c0_i32_0 = arith.constant 0 : i32
    %c0_i32_1 = arith.constant 0 : i32
    return %c0_i32, %c0_i32_0 : i32, i32
  }
  func.func @transform_8(%arg0: i32) -> (i32, i32, i32) {
    %c0_i32 = arith.constant 0 : i32
    %c0_i32_0 = arith.constant 0 : i32
    %c0_i32_1 = arith.constant 0 : i32
    return %arg0, %c0_i32, %c0_i32_0 : i32, i32, i32
  }
}

</mosaic_0001>

<llo_original>
// kernel: tpu_custom_call.1
$region0: #{tpu_custom_call.1}
  #allocation0 [shape = 'u32[]', space=smem, size = 0x4, offset = 0x4, fixed_abs, tag = 'smem constant byte address 0x4 - core index']
  #allocation1 [shape = 'u32[144,128]{1,0:T(1,128)}', space=vmem, size = 0x12000, scoped, tag = 'internal scratch']
  %s0 = inlined_call_operand.vmem [shape: f32[2,128,16], index: 0, kind: input, shape index: {}]
  %s1 = inlined_call_operand.vmem [shape: bf16[2,128,128], index: 1, kind: input, shape index: {}]
  %s2 = inlined_call_operand.vmem [shape: f32[16,32], index: 2, kind: input, shape index: {}]
  %s3 = inlined_call_operand.vmem [shape: f32[32,96], index: 3, kind: input, shape index: {}]
  %s4 = inlined_call_operand.vmem [shape: f32[32,128], index: 4, kind: input, shape index: {}]
  %s5 = inlined_call_operand.vmem [shape: f32[32,128], index: 5, kind: input, shape index: {}]
  %s6 = inlined_call_operand.vmem [shape: f32[1,128], index: 6, kind: input, shape index: {}]
  %s7 = inlined_call_operand.vmem [shape: f32[32,8], index: 7, kind: input, shape index: {}]
  %s8 = inlined_call_operand.vmem [shape: f32[2,128,8], index: 8, kind: output, shape index: {}]
  %s9 = sld [smem:[#allocation0]]
  $region65: #{tpu_custom_call.1} parent=0
    _
  %s11 = ssub.s32 1, %s9
  %s12 = scalar_select 0, %s11, %s9
  loop: start=0, step=1, limit=4
  $region2: #{tpu_custom_call.1} parent=0 // loop_pre_header
    _
  $region3: #{tpu_custom_call.1} parent=0 // loop_header
    %s14 = sphi 0, %s18
    %p15 = scmp.ge.s32.totalorder %s14, 4
    %s24 = sphi 0, %s26
    %s27 = sphi 0, %s24
    %s28 = sphi 0, %s27
    %s44 = sphi 0, %s28
    %s50 = sphi 0, %s52
    %s53 = sphi 0, %s50
    %s54 = sphi 0, %s53
    %s70 = sphi 0, %s54
    %s74 = sphi 0, %s74
    %s76 = sphi 0, %s74
    %s77 = sphi 0, %s76
    %s91 = sphi 0, %s77
    %s95 = sphi 0, %s95
    %s97 = sphi 0, %s95
    %s98 = sphi 0, %s97
    %s112 = sphi 0, %s98
    %s116 = sphi 0, %s116
    %s118 = sphi 0, %s116
    %s119 = sphi 0, %s118
    %s133 = sphi 0, %s119
    %s137 = sphi 0, %s137
    %s139 = sphi 0, %s137
    %s140 = sphi 0, %s139
    %s154 = sphi 0, %s140
    %s158 = sphi 0, %s158
    %s160 = sphi 0, %s158
    %s161 = sphi 0, %s160
    %s175 = sphi 0, %s161
    %s179 = sphi 0, %s179
    %s181 = sphi 0, %s179
    %s182 = sphi 0, %s181
    %s196 = sphi 0, %s182
    %s202 = sphi 0, %s204
    %s205 = sphi 0, %s202
    %s206 = sphi 0, %s205
    %s222 = sphi 0, %s206
  $region4: #{tpu_custom_call.1} parent=0 // loop_header_branch
    %17 = sbr.rel (%p15) target = $region8
  $region5: #{tpu_custom_call.1} parent=0 // loop_body
    %s19 = ssub.s32 %s14, 1
    %s20 = ssub.s32 %s14, 2
    %s21 = sadd.s32 %s14, 1
    %s22 = ssub.s32 %s14, %s21
    %p23 = scmp.eq.s32.totalorder %s22, 0
    %s25 = sadd.s32 %s24, 1
    %s26 = scalar_select %p23, %s24, %s25
    %p29 = pneg %p23
    %p30 = scmp.eq.s32.totalorder %s14, 1
    %p31 = por %p29, %p30
    %p32 = scmp.ne.s32.totalorder %s24, %s27
    %p33 = scmp.eq.s32.totalorder %s14, 0
    %p34 = por %p32, %p33
    %p35 = scmp.ne.s32.totalorder %s24, %s27
    %p36 = scmp.eq.s32.totalorder %s19, 1
    %p37 = por %p35, %p36
    %p38 = scmp.ne.s32.totalorder %s27, %s28
    %p39 = scmp.eq.s32.totalorder %s19, 0
    %p40 = por %p38, %p39
    %p41 = scmp.ne.s32.totalorder %s27, %s28
    %p42 = scmp.eq.s32.totalorder %s20, 1
    %p43 = por %p41, %p42
    %p45 = scmp.ne.s32.totalorder %s28, %s44
    %p46 = scmp.eq.s32.totalorder %s20, 0
    %p47 = por %p45, %p46
    %s48 = ssub.s32 %s14, %s21
    %p49 = scmp.eq.s32.totalorder %s48, 0
    %s51 = sadd.s32 %s50, 1
    %s52 = scalar_select %p49, %s50, %s51
    %p55 = pneg %p49
    %p56 = scmp.eq.s32.totalorder %s14, 1
    %p57 = por %p55, %p56
    %p58 = scmp.ne.s32.totalorder %s50, %s53
    %p59 = scmp.eq.s32.totalorder %s14, 0
    %p60 = por %p58, %p59
    %p61 = scmp.ne.s32.totalorder %s50, %s53
    %p62 = scmp.eq.s32.totalorder %s19, 1
    %p63 = por %p61, %p62
    %p64 = scmp.ne.s32.totalorder %s53, %s54
    %p65 = scmp.eq.s32.totalorder %s19, 0
    %p66 = por %p64, %p65
    %p67 = scmp.ne.s32.totalorder %s53, %s54
    %p68 = scmp.eq.s32.totalorder %s20, 1
    %p69 = por %p67, %p68
    %p71 = scmp.ne.s32.totalorder %s54, %s70
    %p72 = scmp.eq.s32.totalorder %s20, 0
    %p73 = por %p71, %p72
    %s75 = sadd.s32 %s74, 1
    %p78 = scmp.eq.s32.totalorder %s14, 1
    %p79 = scmp.ne.s32.totalorder %s74, %s76
    %p80 = scmp.eq.s32.totalorder %s14, 0
    %p81 = por %p79, %p80
    %p82 = scmp.ne.s32.totalorder %s74, %s76
    %p83 = scmp.eq.s32.totalorder %s19, 1
    %p84 = por %p82, %p83
    %p85 = scmp.ne.s32.totalorder %s76, %s77
    %p86 = scmp.eq.s32.totalorder %s19, 0
    %p87 = por %p85, %p86
    %p88 = scmp.ne.s32.totalorder %s76, %s77
    %p89 = scmp.eq.s32.totalorder %s20, 1
    %p90 = por %p88, %p89
    %p92 = scmp.ne.s32.totalorder %s77, %s91
    %p93 = scmp.eq.s32.totalorder %s20, 0
    %p94 = por %p92, %p93
    %s96 = sadd.s32 %s95, 1
    %p99 = scmp.eq.s32.totalorder %s14, 1
    %p100 = scmp.ne.s32.totalorder %s95, %s97
    %p101 = scmp.eq.s32.totalorder %s14, 0
    %p102 = por %p100, %p101
    %p103 = scmp.ne.s32.totalorder %s95, %s97
    %p104 = scmp.eq.s32.totalorder %s19, 1
    %p105 = por %p103, %p104
    %p106 = scmp.ne.s32.totalorder %s97, %s98
    %p107 = scmp.eq.s32.totalorder %s19, 0
    %p108 = por %p106, %p107
    %p109 = scmp.ne.s32.totalorder %s97, %s98
    %p110 = scmp.eq.s32.totalorder %s20, 1
    %p111 = por %p109, %p110
    %p113 = scmp.ne.s32.totalorder %s98, %s112
    %p114 = scmp.eq.s32.totalorder %s20, 0
    %p115 = por %p113, %p114
    %s117 = sadd.s32 %s116, 1
    %p120 = scmp.eq.s32.totalorder %s14, 1
    %p121 = scmp.ne.s32.totalorder %s116, %s118
    %p122 = scmp.eq.s32.totalorder %s14, 0
    %p123 = por %p121, %p122
    %p124 = scmp.ne.s32.totalorder %s116, %s118
    %p125 = scmp.eq.s32.totalorder %s19, 1
    %p126 = por %p124, %p125
    %p127 = scmp.ne.s32.totalorder %s118, %s119
    %p128 = scmp.eq.s32.totalorder %s19, 0
    %p129 = por %p127, %p128
    %p130 = scmp.ne.s32.totalorder %s118, %s119
    %p131 = scmp.eq.s32.totalorder %s20, 1
    %p132 = por %p130, %p131
    %p134 = scmp.ne.s32.totalorder %s119, %s133
    %p135 = scmp.eq.s32.totalorder %s20, 0
    %p136 = por %p134, %p135
    %s138 = sadd.s32 %s137, 1
    %p141 = scmp.eq.s32.totalorder %s14, 1
    %p142 = scmp.ne.s32.totalorder %s137, %s139
    %p143 = scmp.eq.s32.totalorder %s14, 0
    %p144 = por %p142, %p143
    %p145 = scmp.ne.s32.totalorder %s137, %s139
    %p146 = scmp.eq.s32.totalorder %s19, 1
    %p147 = por %p145, %p146
    %p148 = scmp.ne.s32.totalorder %s139, %s140
    %p149 = scmp.eq.s32.totalorder %s19, 0
    %p150 = por %p148, %p149
    %p151 = scmp.ne.s32.totalorder %s139, %s140
    %p152 = scmp.eq.s32.totalorder %s20, 1
    %p153 = por %p151, %p152
    %p155 = scmp.ne.s32.totalorder %s140, %s154
    %p156 = scmp.eq.s32.totalorder %s20, 0
    %p157 = por %p155, %p156
    %s159 = sadd.s32 %s158, 1
    %p162 = scmp.eq.s32.totalorder %s14, 1
    %p163 = scmp.ne.s32.totalorder %s158, %s160
    %p164 = scmp.eq.s32.totalorder %s14, 0
    %p165 = por %p163, %p164
    %p166 = scmp.ne.s32.totalorder %s158, %s160
    %p167 = scmp.eq.s32.totalorder %s19, 1
    %p168 = por %p166, %p167
    %p169 = scmp.ne.s32.totalorder %s160, %s161
    %p170 = scmp.eq.s32.totalorder %s19, 0
    %p171 = por %p169, %p170
    %p172 = scmp.ne.s32.totalorder %s160, %s161
    %p173 = scmp.eq.s32.totalorder %s20, 1
    %p174 = por %p172, %p173
    %p176 = scmp.ne.s32.totalorder %s161, %s175
    %p177 = scmp.eq.s32.totalorder %s20, 0
    %p178 = por %p176, %p177
    %s180 = sadd.s32 %s179, 1
    %p183 = scmp.eq.s32.totalorder %s14, 1
    %p184 = scmp.ne.s32.totalorder %s179, %s181
    %p185 = scmp.eq.s32.totalorder %s14, 0
    %p186 = por %p184, %p185
    %p187 = scmp.ne.s32.totalorder %s179, %s181
    %p188 = scmp.eq.s32.totalorder %s19, 1
    %p189 = por %p187, %p188
    %p190 = scmp.ne.s32.totalorder %s181, %s182
    %p191 = scmp.eq.s32.totalorder %s19, 0
    %p192 = por %p190, %p191
    %p193 = scmp.ne.s32.totalorder %s181, %s182
    %p194 = scmp.eq.s32.totalorder %s20, 1
    %p195 = por %p193, %p194
    %p197 = scmp.ne.s32.totalorder %s182, %s196
    %p198 = scmp.eq.s32.totalorder %s20, 0
    %p199 = por %p197, %p198
    %s200 = ssub.s32 %s14, %s21
    %p201 = scmp.eq.s32.totalorder %s200, 0
    %s203 = sadd.s32 %s202, 1
    %s204 = scalar_select %p201, %s202, %s203
    %p207 = pneg %p201
    %p208 = scmp.eq.s32.totalorder %s14, 1
    %p209 = por %p207, %p208
    %p210 = scmp.ne.s32.totalorder %s202, %s205
    %p211 = scmp.eq.s32.totalorder %s14, 0
    %p212 = por %p210, %p211
    %p213 = scmp.ne.s32.totalorder %s202, %s205
    %p214 = scmp.eq.s32.totalorder %s19, 1
    %p215 = por %p213, %p214
    %p216 = scmp.ne.s32.totalorder %s205, %s206
    %p217 = scmp.eq.s32.totalorder %s19, 0
    %p218 = por %p216, %p217
    %p219 = scmp.ne.s32.totalorder %s205, %s206
    %p220 = scmp.eq.s32.totalorder %s20, 1
    %p221 = por %p219, %p220
    %p223 = scmp.ne.s32.totalorder %s206, %s222
    %p224 = scmp.eq.s32.totalorder %s20, 0
    %p225 = por %p223, %p224
    %p226 = scmp.le.s32.totalorder 1, %s14
    %p227 = scmp.lt.s32.totalorder %s14, 3
    %p228 = pnand %p226, %p227
    %p229 = pneg %p228
    // Predicated region
    $region9: #{tpu_custom_call.1} parent=5 // pred_check
      _
    $region10: #{tpu_custom_call.1} parent=5 // pred_check_branch
      %231 = sbr.rel (%p228) target = $region12
    $region11: #{tpu_custom_call.1} parent=5 // pred_region
      %s232 = ssub.s32 %s14, 1
      // Predicated region
      $region13: #{tpu_custom_call.1} parent=11 // pred_check
        %p233 = pneg %p87
      $region14: #{tpu_custom_call.1} parent=11 // pred_check_branch
        %235 = sbr.rel (%p233) target = $region16
      $region15: #{tpu_custom_call.1} parent=11 // pred_region
        _
      $region16: #{tpu_custom_call.1} parent=11 // pred_fallthru
        _
      // Predicated region
      $region17: #{tpu_custom_call.1} parent=11 // pred_check
        %p236 = pneg %p108
      $region18: #{tpu_custom_call.1} parent=11 // pred_check_branch
        %238 = sbr.rel (%p236) target = $region20
      $region19: #{tpu_custom_call.1} parent=11 // pred_region
        _
      $region20: #{tpu_custom_call.1} parent=11 // pred_fallthru
        _
      // Predicated region
      $region21: #{tpu_custom_call.1} parent=11 // pred_check
        %p239 = pneg %p129
      $region22: #{tpu_custom_call.1} parent=11 // pred_check_branch
        %241 = sbr.rel (%p239) target = $region24
      $region23: #{tpu_custom_call.1} parent=11 // pred_region
        _
      $region24: #{tpu_custom_call.1} parent=11 // pred_fallthru
        _
      // Predicated region
      $region25: #{tpu_custom_call.1} parent=11 // pred_check
        %p242 = pneg %p150
      $region26: #{tpu_custom_call.1} parent=11 // pred_check_branch
        %244 = sbr.rel (%p242) target = $region28
      $region27: #{tpu_custom_call.1} parent=11 // pred_region
        _
      $region28: #{tpu_custom_call.1} parent=11 // pred_fallthru
        _
      // Predicated region
      $region29: #{tpu_custom_call.1} parent=11 // pred_check
        %p245 = pneg %p171
      $region30: #{tpu_custom_call.1} parent=11 // pred_check_branch
        %247 = sbr.rel (%p245) target = $region32
      $region31: #{tpu_custom_call.1} parent=11 // pred_region
        _
      $region32: #{tpu_custom_call.1} parent=11 // pred_fallthru
        _
      // Predicated region
      $region33: #{tpu_custom_call.1} parent=11 // pred_check
        %p248 = pneg %p192
      $region34: #{tpu_custom_call.1} parent=11 // pred_check_branch
        %250 = sbr.rel (%p248) target = $region36
      $region35: #{tpu_custom_call.1} parent=11 // pred_region
        _
      $region36: #{tpu_custom_call.1} parent=11 // pred_fallthru
        _
    $region12: #{tpu_custom_call.1} parent=5 // pred_fallthru
      _
    %p251 = scmp.lt.s32.totalorder %s14, 2
    // Predicated region
    $region37: #{tpu_custom_call.1} parent=5 // pred_check
      %p252 = pneg %p251
    $region38: #{tpu_custom_call.1} parent=5 // pred_check_branch
      %254 = sbr.rel (%p252) target = $region40
    $region39: #{tpu_custom_call.1} parent=5 // pred_region
      // Predicated region
      $region41: #{tpu_custom_call.1} parent=39 // pred_check
        %p255 = pneg %p34
      $region42: #{tpu_custom_call.1} parent=39 // pred_check_branch
        %257 = sbr.rel (%p255) target = $region44
      $region43: #{tpu_custom_call.1} parent=39 // pred_region
        %p258 = scmp.lt.s32.totalorder %s14, 1
        %s259 = scalar_select %p258, %s14, 1
        %s260 = smul.addr %s259, 16
        %s261 = smul.addr %s260, 8
        %s262 = scalar_lea.vmem %s0, %s261
      $region44: #{tpu_custom_call.1} parent=39 // pred_fallthru
        _
      // Predicated region
      $region45: #{tpu_custom_call.1} parent=39 // pred_check
        %p263 = pneg %p60
      $region46: #{tpu_custom_call.1} parent=39 // pred_check_branch
        %265 = sbr.rel (%p263) target = $region48
      $region47: #{tpu_custom_call.1} parent=39 // pred_region
        %p266 = scmp.lt.s32.totalorder %s14, 1
        %s267 = scalar_select %p266, %s14, 1
        %s268 = smul.addr %s267, 16
        %s269 = smul.addr %s268, 4
        %s270 = scalar_lea.vmem %s1, %s269
      $region48: #{tpu_custom_call.1} parent=39 // pred_fallthru
        _
    $region40: #{tpu_custom_call.1} parent=5 // pred_fallthru
      _
    %p271 = scmp.le.s32.totalorder 1, %s14
    %p272 = scmp.lt.s32.totalorder %s14, 3
    %p273 = pnand %p271, %p272
    %p274 = pneg %p273
    // Predicated region
    $region49: #{tpu_custom_call.1} parent=5 // pred_check
      _
    $region50: #{tpu_custom_call.1} parent=5 // pred_check_branch
      %276 = sbr.rel (%p273) target = $region52
    $region51: #{tpu_custom_call.1} parent=5 // pred_region
      %s277 = ssub.s32 %s14, 1
      %p278 = scmp.lt.s32.totalorder %s19, 1
      %s279 = scalar_select %p278, %s19, 1
      %s280 = smul.addr %s279, 16
      %s281 = smul.addr %s280, 8
      %s282 = scalar_lea.vmem %s0, %s281
      %p283 = pneg %p40
      %p284 = pneg %p37
      %p285 = scmp.lt.s32.totalorder %s19, 1
      %s286 = scalar_select %p285, %s19, 1
      %s287 = smul.addr %s286, 16
      %s288 = smul.addr %s287, 4
      %s289 = scalar_lea.vmem %s1, %s288
      %p290 = pneg %p66
      %p291 = pneg %p63
      %p292 = pneg %p87
      %p293 = pneg %p84
      %p294 = pneg %p108
      %p295 = pneg %p105
      %p296 = pneg %p129
      %p297 = pneg %p126
      %p298 = pneg %p150
      %p299 = pneg %p147
      %p300 = pneg %p171
      %p301 = pneg %p168
      %p302 = pneg %p192
      %p303 = pneg %p189
      %p304 = pneg %p218
      %p305 = pneg %p215
      %p306 = scmp.lt.s32.totalorder %s19, 1
      %s307 = scalar_select %p306, %s19, 1
      %s308 = smul.addr %s307, 16
      %s309 = smul.addr %s308, 8
      %s310 = scalar_lea.vmem %s8, %s309
      %p311 = scmp.lt.s32.totalorder %s19, 1
      %s312 = scalar_select %p311, %s19, 1
      %s313 = smul.addr %s312, 16
      %s314 = smul.addr %s313, 8
      %s315 = scalar_lea.vmem %s0, %s314
      %p316 = scmp.lt.s32.totalorder %s19, 1
      %s317 = scalar_select %p316, %s19, 1
      %s318 = smul.addr %s317, 16
      %s319 = smul.addr %s318, 4
      %s320 = scalar_lea.vmem %s1, %s319
      %p321 = scmp.lt.s32.totalorder %s19, 1
      %s322 = scalar_select %p321, %s19, 1
      %s323 = smul.addr %s322, 16
      %s324 = smul.addr %s323, 8
      %s325 = scalar_lea.vmem %s8, %s324
      %v326 = vld [vmem:[%s315] sm:$0xff]
      %v327 = vld [vmem:[%s315 + $0x8] sm:$0xff]
      %v328 = vld [vmem:[%s315 + $0x10] sm:$0xff]
      %v329 = vld [vmem:[%s315 + $0x18] sm:$0xff]
      %v330 = vld [vmem:[%s315 + $0x20] sm:$0xff]
      %v331 = vld [vmem:[%s315 + $0x28] sm:$0xff]
      %v332 = vld [vmem:[%s315 + $0x30] sm:$0xff]
      %v333 = vld [vmem:[%s315 + $0x38] sm:$0xff]
      %v334 = vld [vmem:[%s315 + $0x40] sm:$0xff]
      %v335 = vld [vmem:[%s315 + $0x48] sm:$0xff]
      %v336 = vld [vmem:[%s315 + $0x50] sm:$0xff]
      %v337 = vld [vmem:[%s315 + $0x58] sm:$0xff]
      %v338 = vld [vmem:[%s315 + $0x60] sm:$0xff]
      %v339 = vld [vmem:[%s315 + $0x68] sm:$0xff]
      %v340 = vld [vmem:[%s315 + $0x70] sm:$0xff]
      %v341 = vld [vmem:[%s315 + $0x78] sm:$0xff]
      %v342 = vld [vmem:[%s2] sm:$0xff]
      %v343 = vld [vmem:[%s2 + $0x8] sm:$0xff]
      %vm344 = vcmask 130048
      %v346 = vsel %vm344, %v326, 0
      %v349 = vsel %vm344, %v327, 0
      %v352 = vsel %vm344, %v328, 0
      %v355 = vsel %vm344, %v329, 0
      %v358 = vsel %vm344, %v330, 0
      %v361 = vsel %vm344, %v331, 0
      %v364 = vsel %vm344, %v332, 0
      %v367 = vsel %vm344, %v333, 0
      %v370 = vsel %vm344, %v334, 0
      %v373 = vsel %vm344, %v335, 0
      %v376 = vsel %vm344, %v336, 0
      %v379 = vsel %vm344, %v337, 0
      %v382 = vsel %vm344, %v338, 0
      %v385 = vsel %vm344, %v339, 0
      %v388 = vsel %vm344, %v340, 0
      %v391 = vsel %vm344, %v341, 0
      %393 = vmatprep.subr.mxu0 0.0
      %394 = vmatpush1.msra.mxu0 %v342
      %395 = vmatprep.subr.mxu0 0.0
      %396 = vmatpush1.msra.mxu0 %v343
      %397 = vmatprep.subr.mxu0 0.0
      %398 = vmatpush1.msra.mxu0 0.0
      %399 = vmatprep.subr.mxu0 0.0
      %400 = vmatpush1.msra.mxu0 0.0
      %401 = vmatprep.subr.mxu0 0.0
      %402 = vmatpush1.msra.mxu0 0.0
      %403 = vmatprep.subr.mxu0 0.0
      %404 = vmatpush1.msra.mxu0 0.0
      %405 = vmatprep.subr.mxu0 0.0
      %406 = vmatpush1.msra.mxu0 0.0
      %407 = vmatprep.subr.mxu0 0.0
      %408 = vmatpush1.msra.mxu0 0.0
      %409 = vmatprep.subr.mxu0 0.0
      %410 = vmatpush1.msra.mxu0 0.0
      %411 = vmatprep.subr.mxu0 0.0
      %412 = vmatpush1.msra.mxu0 0.0
      %413 = vmatprep.subr.mxu0 0.0
      %414 = vmatpush1.msra.mxu0 0.0
      %415 = vmatprep.subr.mxu0 0.0
      %416 = vmatpush1.msra.mxu0 0.0
      %417 = vmatprep.subr.mxu0 0.0
      %418 = vmatpush1.msra.mxu0 0.0
      %419 = vmatprep.subr.mxu0 0.0
      %420 = vmatpush1.msra.mxu0 0.0
      %421 = vmatprep.subr.mxu0 0.0
      %422 = vmatpush1.msra.mxu0 0.0
      %423 = vmatprep.subr.mxu0 0.0
      %424 = vmatpush1.msra.mxu0 0.0
      %425 = vmatprep.subr.mxu0 0.0
      %426 = vmatpush1.msra.mxu0 0.0
      %427 = vmatprep.subr.mxu0 0.0
      %428 = vmatpush1.msra.mxu0 0.0
      %429 = vmatprep.subr.mxu0 0.0
      %430 = vmatpush1.msra.mxu0 0.0
      %431 = vmatprep.subr.mxu0 0.0
      %432 = vmatpush1.msra.mxu0 0.0
      %433 = vmatprep.subr.mxu0 0.0
      %434 = vmatpush1.msra.mxu0 0.0
      %435 = vmatprep.subr.mxu0 0.0
      %436 = vmatpush1.msra.mxu0 0.0
      %437 = vmatprep.subr.mxu0 0.0
      %438 = vmatpush1.msra.mxu0 0.0
      %439 = vmatprep.subr.mxu0 0.0
      %440 = vmatpush1.msra.mxu0 0.0
      %441 = vmatprep.subr.mxu0 0.0
      %442 = vmatpush1.msra.mxu0 0.0
      %443 = vmatprep.subr.mxu0 0.0
      %444 = vmatpush1.msra.mxu0 0.0
      %445 = vmatprep.subr.mxu0 0.0
      %446 = vmatpush1.msra.mxu0 0.0
      %447 = vmatprep.subr.mxu0 0.0
      %448 = vmatpush1.msra.mxu0 0.0
      %449 = vmatprep.subr.mxu0 0.0
      %450 = vmatpush1.msra.mxu0 0.0
      %451 = vmatprep.subr.mxu0 0.0
      %452 = vmatpush1.msra.mxu0 0.0
      %453 = vmatprep.subr.mxu0 0.0
      %454 = vmatpush1.msra.mxu0 0.0
      %455 = vmatprep.subr.mxu0 0.0
      %456 = vmatpush1.msra.mxu0 0.0
      %457 = vmatprep.mubr.f32.mxu0 0.0
      %458 = vmatmul.mubr.f32.gmra.mrb[0].mxu0 %v346
      %v459 = vpop.f32.mrb[0].mxu0
      %v460 = vadd.f32 0.0, %v459
      %v461 = vpop.f32.mrb[0].mxu0
      %462 = vmatprep.mubr.f32.mxu0 0.0
      %463 = vmatmul.mubr.f32.gmra.mrb[0].mxu0 %v349
      %v464 = vpop.f32.mrb[0].mxu0
      %v465 = vadd.f32 0.0, %v464
      %v466 = vpop.f32.mrb[0].mxu0
      %467 = vmatprep.mubr.f32.mxu0 0.0
      %468 = vmatmul.mubr.f32.gmra.mrb[0].mxu0 %v352
      %v469 = vpop.f32.mrb[0].mxu0
      %v470 = vadd.f32 0.0, %v469
      %v471 = vpop.f32.mrb[0].mxu0
      %472 = vmatprep.mubr.f32.mxu0 0.0
      %473 = vmatmul.mubr.f32.gmra.mrb[0].mxu0 %v355
      %v474 = vpop.f32.mrb[0].mxu0
      %v475 = vadd.f32 0.0, %v474
      %v476 = vpop.f32.mrb[0].mxu0
      %477 = vmatprep.mubr.f32.mxu0 0.0
      %478 = vmatmul.mubr.f32.gmra.mrb[0].mxu0 %v358
      %v479 = vpop.f32.mrb[0].mxu0
      %v480 = vadd.f32 0.0, %v479
      %v481 = vpop.f32.mrb[0].mxu0
      %482 = vmatprep.mubr.f32.mxu0 0.0
      %483 = vmatmul.mubr.f32.gmra.mrb[0].mxu0 %v361
      %v484 = vpop.f32.mrb[0].mxu0
      %v485 = vadd.f32 0.0, %v484
      %v486 = vpop.f32.mrb[0].mxu0
      %487 = vmatprep.mubr.f32.mxu0 0.0
      %488 = vmatmul.mubr.f32.gmra.mrb[0].mxu0 %v364
      %v489 = vpop.f32.mrb[0].mxu0
      %v490 = vadd.f32 0.0, %v489
      %v491 = vpop.f32.mrb[0].mxu0
      %492 = vmatprep.mubr.f32.mxu0 0.0
      %493 = vmatmul.mubr.f32.gmra.mrb[0].mxu0 %v367
      %v494 = vpop.f32.mrb[0].mxu0
      %v495 = vadd.f32 0.0, %v494
      %v496 = vpop.f32.mrb[0].mxu0
      %497 = vmatprep.mubr.f32.mxu0 0.0
      %498 = vmatmul.mubr.f32.gmra.mrb[0].mxu0 %v370
      %v499 = vpop.f32.mrb[0].mxu0
      %v500 = vadd.f32 0.0, %v499
      %v501 = vpop.f32.mrb[0].mxu0
      %502 = vmatprep.mubr.f32.mxu0 0.0
      %503 = vmatmul.mubr.f32.gmra.mrb[0].mxu0 %v373
      %v504 = vpop.f32.mrb[0].mxu0
      %v505 = vadd.f32 0.0, %v504
      %v506 = vpop.f32.mrb[0].mxu0
      %507 = vmatprep.mubr.f32.mxu0 0.0
      %508 = vmatmul.mubr.f32.gmra.mrb[0].mxu0 %v376
      %v509 = vpop.f32.mrb[0].mxu0
      %v510 = vadd.f32 0.0, %v509
      %v511 = vpop.f32.mrb[0].mxu0
      %512 = vmatprep.mubr.f32.mxu0 0.0
      %513 = vmatmul.mubr.f32.gmra.mrb[0].mxu0 %v379
      %v514 = vpop.f32.mrb[0].mxu0
      %v515 = vadd.f32 0.0, %v514
      %v516 = vpop.f32.mrb[0].mxu0
      %517 = vmatprep.mubr.f32.mxu0 0.0
      %518 = vmatmul.mubr.f32.gmra.mrb[0].mxu0 %v382
      %v519 = vpop.f32.mrb[0].mxu0
      %v520 = vadd.f32 0.0, %v519
      %v521 = vpop.f32.mrb[0].mxu0
      %522 = vmatprep.mubr.f32.mxu0 0.0
      %523 = vmatmul.mubr.f32.gmra.mrb[0].mxu0 %v385
      %v524 = vpop.f32.mrb[0].mxu0
      %v525 = vadd.f32 0.0, %v524
      %v526 = vpop.f32.mrb[0].mxu0
      %527 = vmatprep.mubr.f32.mxu0 0.0
      %528 = vmatmul.mubr.f32.gmra.mrb[0].mxu0 %v388
      %v529 = vpop.f32.mrb[0].mxu0
      %v530 = vadd.f32 0.0, %v529
      %v531 = vpop.f32.mrb[0].mxu0
      %532 = vmatprep.mubr.f32.mxu0 0.0
      %533 = vmatmul.mubr.f32.gmra.mrb[0].mxu0 %v391
      %v534 = vpop.f32.mrb[0].mxu0
      %v535 = vadd.f32 0.0, %v534
      %v536 = vpop.f32.mrb[0].mxu0
      %537 = vdwg.mxu0
      %v538 = vld [vmem:[%s320] sm:$0xf]
      %v539 = vld [vmem:[%s320 + $0x4] sm:$0xf]
      %v540 = vld [vmem:[%s320 + $0x8] sm:$0xf]
      %v541 = vld [vmem:[%s320 + $0xc] sm:$0xf]
      %v542 = vld [vmem:[%s320 + $0x10] sm:$0xf]
      %v543 = vld [vmem:[%s320 + $0x14] sm:$0xf]
      %v544 = vld [vmem:[%s320 + $0x18] sm:$0xf]
      %v545 = vld [vmem:[%s320 + $0x1c] sm:$0xf]
      %v546 = vld [vmem:[%s320 + $0x20] sm:$0xf]
      %v547 = vld [vmem:[%s320 + $0x24] sm:$0xf]
      %v548 = vld [vmem:[%s320 + $0x28] sm:$0xf]
      %v549 = vld [vmem:[%s320 + $0x2c] sm:$0xf]
      %v550 = vld [vmem:[%s320 + $0x30] sm:$0xf]
      %v551 = vld [vmem:[%s320 + $0x34] sm:$0xf]
      %v552 = vld [vmem:[%s320 + $0x38] sm:$0xf]
      %v553 = vld [vmem:[%s320 + $0x3c] sm:$0xf]
      %v554 = vunpack.c.l.bf16 %v538
      %v555 = vunpack.c.l.bf16 %v539
      %v556 = vunpack.c.l.bf16 %v540
      %v557 = vunpack.c.l.bf16 %v541
      %v558 = vunpack.c.l.bf16 %v542
      %v559 = vunpack.c.l.bf16 %v543
      %v560 = vunpack.c.l.bf16 %v544
      %v561 = vunpack.c.l.bf16 %v545
      %v562 = vunpack.c.l.bf16 %v546
      %v563 = vunpack.c.l.bf16 %v547
      %v564 = vunpack.c.l.bf16 %v548
      %v565 = vunpack.c.l.bf16 %v549
      %v566 = vunpack.c.l.bf16 %v550
      %v567 = vunpack.c.l.bf16 %v551
      %v568 = vunpack.c.l.bf16 %v552
      %v569 = vunpack.c.l.bf16 %v553
      %v570 = vld [vmem:[%s3] sm:$0xff]
      %v571 = vld [vmem:[%s3 + $0x8] sm:$0xff]
      %v572 = vld [vmem:[%s3 + $0x10] sm:$0xff]
      %v573 = vld [vmem:[%s3 + $0x18] sm:$0xff]
      %v574 = vld [vmem:[%s4] sm:$0xff]
      %v575 = vld [vmem:[%s4 + $0x8] sm:$0xff]
      %v576 = vld [vmem:[%s4 + $0x10] sm:$0xff]
      %v577 = vld [vmem:[%s4 + $0x18] sm:$0xff]
      %v578 = vld [vmem:[%s5] sm:$0xff]
      %v579 = vld [vmem:[%s5 + $0x8] sm:$0xff]
      %v580 = vld [vmem:[%s5 + $0x10] sm:$0xff]
      %v581 = vld [vmem:[%s5 + $0x18] sm:$0xff]
      %v582 = vld [vmem:[%s6] sm:$0x1]
      %v584 = vlaneseq
      %v585 = vshrl.u32 %v584, 7
      %v586 = vsub.s32 0, %v585
      %v587 = vrot.slane %v582, %v586
      %vm589 = vcmask 261120
      %v591 = vsel %vm589, %v460, 0
      %v594 = vsel %vm589, %v465, 0
      %v597 = vsel %vm589, %v470, 0
      %v600 = vsel %vm589, %v475, 0
      %v603 = vsel %vm589, %v480, 0
      %v606 = vsel %vm589, %v485, 0
      %v609 = vsel %vm589, %v490, 0
      %v612 = vsel %vm589, %v495, 0
      %v615 = vsel %vm589, %v500, 0
      %v618 = vsel %vm589, %v505, 0
      %v621 = vsel %vm589, %v510, 0
      %v624 = vsel %vm589, %v515, 0
      %v627 = vsel %vm589, %v520, 0
      %v630 = vsel %vm589, %v525, 0
      %v633 = vsel %vm589, %v530, 0
      %v636 = vsel %vm589, %v535, 0
      %638 = vmatprep.subr.mxu0 0.0
      %639 = vmatpush1.msra.mxu0 %v570
      %640 = vmatprep.subr.mxu0 0.0
      %641 = vmatpush1.msra.mxu0 %v571
      %642 = vmatprep.subr.mxu0 0.0
      %643 = vmatpush1.msra.mxu0 %v572
      %644 = vmatprep.subr.mxu0 0.0
      %645 = vmatpush1.msra.mxu0 %v573
      %646 = vmatprep.subr.mxu0 0.0
      %647 = vmatpush1.msra.mxu0 0.0
      %648 = vmatprep.subr.mxu0 0.0
      %649 = vmatpush1.msra.mxu0 0.0
      %650 = vmatprep.subr.mxu0 0.0
      %651 = vmatpush1.msra.mxu0 0.0
      %652 = vmatprep.subr.mxu0 0.0
      %653 = vmatpush1.msra.mxu0 0.0
      %654 = vmatprep.subr.mxu0 0.0
      %655 = vmatpush1.msra.mxu0 0.0
      %656 = vmatprep.subr.mxu0 0.0
      %657 = vmatpush1.msra.mxu0 0.0
      %658 = vmatprep.subr.mxu0 0.0
      %659 = vmatpush1.msra.mxu0 0.0
      %660 = vmatprep.subr.mxu0 0.0
      %661 = vmatpush1.msra.mxu0 0.0
      %662 = vmatprep.subr.mxu0 0.0
      %663 = vmatpush1.msra.mxu0 0.0
      %664 = vmatprep.subr.mxu0 0.0
      %665 = vmatpush1.msra.mxu0 0.0
      %666 = vmatprep.subr.mxu0 0.0
      %667 = vmatpush1.msra.mxu0 0.0
      %668 = vmatprep.subr.mxu0 0.0
      %669 = vmatpush1.msra.mxu0 0.0
      %670 = vmatprep.subr.mxu0 0.0
      %671 = vmatpush1.msra.mxu0 0.0
      %672 = vmatprep.subr.mxu0 0.0
      %673 = vmatpush1.msra.mxu0 0.0
      %674 = vmatprep.subr.mxu0 0.0
      %675 = vmatpush1.msra.mxu0 0.0
      %676 = vmatprep.subr.mxu0 0.0
      %677 = vmatpush1.msra.mxu0 0.0
      %678 = vmatprep.subr.mxu0 0.0
      %679 = vmatpush1.msra.mxu0 0.0
      %680 = vmatprep.subr.mxu0 0.0
      %681 = vmatpush1.msra.mxu0 0.0
      %682 = vmatprep.subr.mxu0 0.0
      %683 = vmatpush1.msra.mxu0 0.0
      %684 = vmatprep.subr.mxu0 0.0
      %685 = vmatpush1.msra.mxu0 0.0
      %686 = vmatprep.subr.mxu0 0.0
      %687 = vmatpush1.msra.mxu0 0.0
      %688 = vmatprep.subr.mxu0 0.0
      %689 = vmatpush1.msra.mxu0 0.0
      %690 = vmatprep.subr.mxu0 0.0
      %691 = vmatpush1.msra.mxu0 0.0
      %692 = vmatprep.subr.mxu0 0.0
      %693 = vmatpush1.msra.mxu0 0.0
      %694 = vmatprep.subr.mxu0 0.0
      %695 = vmatpush1.msra.mxu0 0.0
      %696 = vmatprep.subr.mxu0 0.0
      %697 = vmatpush1.msra.mxu0 0.0
      %698 = vmatprep.subr.mxu0 0.0
      %699 = vmatpush1.msra.mxu0 0.0
      %700 = vmatprep.subr.mxu0 0.0
      %701 = vmatpush1.msra.mxu0 0.0
      %702 = vmatprep.mubr.f32.mxu0 0.0
      %703 = vmatmul.mubr.f32.gmra.mrb[0].mxu0 %v591
      %v704 = vpop.f32.mrb[0].mxu0
      %v705 = vadd.f32 0.0, %v704
      %v706 = vpop.f32.mrb[0].mxu0
      %707 = vmatprep.mubr.f32.mxu0 0.0
      %708 = vmatmul.mubr.f32.gmra.mrb[0].mxu0 %v594
      %v709 = vpop.f32.mrb[0].mxu0
      %v710 = vadd.f32 0.0, %v709
      %v711 = vpop.f32.mrb[0].mxu0
      %712 = vmatprep.mubr.f32.mxu0 0.0
      %713 = vmatmul.mubr.f32.gmra.mrb[0].mxu0 %v597
      %v714 = vpop.f32.mrb[0].mxu0
      %v715 = vadd.f32 0.0, %v714
      %v716 = vpop.f32.mrb[0].mxu0
      %717 = vmatprep.mubr.f32.mxu0 0.0
      %718 = vmatmul.mubr.f32.gmra.mrb[0].mxu0 %v600
      %v719 = vpop.f32.mrb[0].mxu0
      %v720 = vadd.f32 0.0, %v719
      %v721 = vpop.f32.mrb[0].mxu0
      %722 = vmatprep.mubr.f32.mxu0 0.0
      %723 = vmatmul.mubr.f32.gmra.mrb[0].mxu0 %v603
      %v724 = vpop.f32.mrb[0].mxu0
      %v725 = vadd.f32 0.0, %v724
      %v726 = vpop.f32.mrb[0].mxu0
      %727 = vmatprep.mubr.f32.mxu0 0.0
      %728 = vmatmul.mubr.f32.gmra.mrb[0].mxu0 %v606
      %v729 = vpop.f32.mrb[0].mxu0
      %v730 = vadd.f32 0.0, %v729
      %v731 = vpop.f32.mrb[0].mxu0
      %732 = vmatprep.mubr.f32.mxu0 0.0
      %733 = vmatmul.mubr.f32.gmra.mrb[0].mxu0 %v609
      %v734 = vpop.f32.mrb[0].mxu0
      %v735 = vadd.f32 0.0, %v734
      %v736 = vpop.f32.mrb[0].mxu0
      %737 = vmatprep.mubr.f32.mxu0 0.0
      %738 = vmatmul.mubr.f32.gmra.mrb[0].mxu0 %v612
      %v739 = vpop.f32.mrb[0].mxu0
      %v740 = vadd.f32 0.0, %v739
      %v741 = vpop.f32.mrb[0].mxu0
      %742 = vmatprep.mubr.f32.mxu0 0.0
      %743 = vmatmul.mubr.f32.gmra.mrb[0].mxu0 %v615
      %v744 = vpop.f32.mrb[0].mxu0
      %v745 = vadd.f32 0.0, %v744
      %v746 = vpop.f32.mrb[0].mxu0
      %747 = vmatprep.mubr.f32.mxu0 0.0
      %748 = vmatmul.mubr.f32.gmra.mrb[0].mxu0 %v618
      %v749 = vpop.f32.mrb[0].mxu0
      %v750 = vadd.f32 0.0, %v749
      %v751 = vpop.f32.mrb[0].mxu0
      %752 = vmatprep.mubr.f32.mxu0 0.0
      %753 = vmatmul.mubr.f32.gmra.mrb[0].mxu0 %v621
      %v754 = vpop.f32.mrb[0].mxu0
      %v755 = vadd.f32 0.0, %v754
      %v756 = vpop.f32.mrb[0].mxu0
      %757 = vmatprep.mubr.f32.mxu0 0.0
      %758 = vmatmul.mubr.f32.gmra.mrb[0].mxu0 %v624
      %v759 = vpop.f32.mrb[0].mxu0
      %v760 = vadd.f32 0.0, %v759
      %v761 = vpop.f32.mrb[0].mxu0
      %762 = vmatprep.mubr.f32.mxu0 0.0
      %763 = vmatmul.mubr.f32.gmra.mrb[0].mxu0 %v627
      %v764 = vpop.f32.mrb[0].mxu0
      %v765 = vadd.f32 0.0, %v764
      %v766 = vpop.f32.mrb[0].mxu0
      %767 = vmatprep.mubr.f32.mxu0 0.0
      %768 = vmatmul.mubr.f32.gmra.mrb[0].mxu0 %v630
      %v769 = vpop.f32.mrb[0].mxu0
      %v770 = vadd.f32 0.0, %v769
      %v771 = vpop.f32.mrb[0].mxu0
      %772 = vmatprep.mubr.f32.mxu0 0.0
      %773 = vmatmul.mubr.f32.gmra.mrb[0].mxu0 %v633
      %v774 = vpop.f32.mrb[0].mxu0
      %v775 = vadd.f32 0.0, %v774
      %v776 = vpop.f32.mrb[0].mxu0
      %777 = vmatprep.mubr.f32.mxu0 0.0
      %778 = vmatmul.mubr.f32.gmra.mrb[0].mxu0 %v636
      %v779 = vpop.f32.mrb[0].mxu0
      %v780 = vadd.f32 0.0, %v779
      %v781 = vpop.f32.mrb[0].mxu0
      %782 = vdwg.mxu0
      %783 = vmatprep.subr.mxu0 0.0
      %784 = vmatpush1.msra.mxu0 %v705
      %785 = vmatprep.subr.mxu0 0.0
      %786 = vmatpush1.msra.mxu0 %v710
      %787 = vmatprep.subr.mxu0 0.0
      %788 = vmatpush1.msra.mxu0 %v715
      %789 = vmatprep.subr.mxu0 0.0
      %790 = vmatpush1.msra.mxu0 %v720
      %791 = vmatprep.subr.mxu0 0.0
      %792 = vmatpush1.msra.mxu0 %v725
      %793 = vmatprep.subr.mxu0 0.0
      %794 = vmatpush1.msra.mxu0 %v730
      %795 = vmatprep.subr.mxu0 0.0
      %796 = vmatpush1.msra.mxu0 %v735
      %797 = vmatprep.subr.mxu0 0.0
      %798 = vmatpush1.msra.mxu0 %v740
      %799 = vmatprep.subr.mxu0 0.0
      %800 = vmatpush1.msra.mxu0 %v745
      %801 = vmatprep.subr.mxu0 0.0
      %802 = vmatpush1.msra.mxu0 %v750
      %803 = vmatprep.subr.mxu0 0.0
      %804 = vmatpush1.msra.mxu0 %v755
      %805 = vmatprep.subr.mxu0 0.0
      %806 = vmatpush1.msra.mxu0 %v760
      %807 = vmatprep.subr.mxu0 0.0
      %808 = vmatpush1.msra.mxu0 %v765
      %809 = vmatprep.subr.mxu0 0.0
      %810 = vmatpush1.msra.mxu0 %v770
      %811 = vmatprep.subr.mxu0 0.0
      %812 = vmatpush1.msra.mxu0 %v775
      %813 = vmatprep.subr.mxu0 0.0
      %814 = vmatpush1.msra.mxu0 %v780
      %815 = vmatprep.subr.mxu0 0.0
      %816 = vmatpush1.msra.mxu0 0.0
      %817 = vmatprep.subr.mxu0 0.0
      %818 = vmatpush1.msra.mxu0 0.0
      %819 = vmatprep.subr.mxu0 0.0
      %820 = vmatpush1.msra.mxu0 0.0
      %821 = vmatprep.subr.mxu0 0.0
      %822 = vmatpush1.msra.mxu0 0.0
      %823 = vmatprep.subr.mxu0 0.0
      %824 = vmatpush1.msra.mxu0 0.0
      %825 = vmatprep.subr.mxu0 0.0
      %826 = vmatpush1.msra.mxu0 0.0
      %827 = vmatprep.subr.mxu0 0.0
      %828 = vmatpush1.msra.mxu0 0.0
      %829 = vmatprep.subr.mxu0 0.0
      %830 = vmatpush1.msra.mxu0 0.0
      %831 = vmatprep.subr.mxu0 0.0
      %832 = vmatpush1.msra.mxu0 0.0
      %833 = vmatprep.subr.mxu0 0.0
      %834 = vmatpush1.msra.mxu0 0.0
      %835 = vmatprep.subr.mxu0 0.0
      %836 = vmatpush1.msra.mxu0 0.0
      %837 = vmatprep.subr.mxu0 0.0
      %838 = vmatpush1.msra.mxu0 0.0
      %839 = vmatprep.subr.mxu0 0.0
      %840 = vmatpush1.msra.mxu0 0.0
      %841 = vmatprep.subr.mxu0 0.0
      %842 = vmatpush1.msra.mxu0 0.0
      %843 = vmatprep.subr.mxu0 0.0
      %844 = vmatpush1.msra.mxu0 0.0
      %845 = vmatprep.subr.mxu0 0.0
      %846 = vmatpush1.msra.mxu0 0.0
      %847 = vmatprep.mubr.f32.mxu0 0.0
      %848 = vmatmul.mubr.f32.gmra.mrb[0].mxu0 %v554
      %v849 = vpop.f32.mrb[0].mxu0
      %v850 = vadd.f32 0.0, %v849
      %v851 = vpop.f32.mrb[0].mxu0
      %852 = vmatprep.mubr.f32.mxu0 0.0
      %853 = vmatmul.mubr.f32.gmra.mrb[0].mxu0 %v555
      %v854 = vpop.f32.mrb[0].mxu0
      %v855 = vadd.f32 0.0, %v854
      %v856 = vpop.f32.mrb[0].mxu0
      %857 = vmatprep.mubr.f32.mxu0 0.0
      %858 = vmatmul.mubr.f32.gmra.mrb[0].mxu0 %v556
      %v859 = vpop.f32.mrb[0].mxu0
      %v860 = vadd.f32 0.0, %v859
      %v861 = vpop.f32.mrb[0].mxu0
      %862 = vmatprep.mubr.f32.mxu0 0.0
      %863 = vmatmul.mubr.f32.gmra.mrb[0].mxu0 %v557
      %v864 = vpop.f32.mrb[0].mxu0
      %v865 = vadd.f32 0.0, %v864
      %v866 = vpop.f32.mrb[0].mxu0
      %867 = vmatprep.mubr.f32.mxu0 0.0
      %868 = vmatmul.mubr.f32.gmra.mrb[0].mxu0 %v558
      %v869 = vpop.f32.mrb[0].mxu0
      %v870 = vadd.f32 0.0, %v869
      %v871 = vpop.f32.mrb[0].mxu0
      %872 = vmatprep.mubr.f32.mxu0 0.0
      %873 = vmatmul.mubr.f32.gmra.mrb[0].mxu0 %v559
      %v874 = vpop.f32.mrb[0].mxu0
      %v875 = vadd.f32 0.0, %v874
      %v876 = vpop.f32.mrb[0].mxu0
      %877 = vmatprep.mubr.f32.mxu0 0.0
      %878 = vmatmul.mubr.f32.gmra.mrb[0].mxu0 %v560
      %v879 = vpop.f32.mrb[0].mxu0
      %v880 = vadd.f32 0.0, %v879
      %v881 = vpop.f32.mrb[0].mxu0
      %882 = vmatprep.mubr.f32.mxu0 0.0
      %883 = vmatmul.mubr.f32.gmra.mrb[0].mxu0 %v561
      %v884 = vpop.f32.mrb[0].mxu0
      %v885 = vadd.f32 0.0, %v884
      %v886 = vpop.f32.mrb[0].mxu0
      %887 = vmatprep.mubr.f32.mxu0 0.0
      %888 = vmatmul.mubr.f32.gmra.mrb[0].mxu0 %v562
      %v889 = vpop.f32.mrb[0].mxu0
      %v890 = vadd.f32 0.0, %v889
      %v891 = vpop.f32.mrb[0].mxu0
      %892 = vmatprep.mubr.f32.mxu0 0.0
      %893 = vmatmul.mubr.f32.gmra.mrb[0].mxu0 %v563
      %v894 = vpop.f32.mrb[0].mxu0
      %v895 = vadd.f32 0.0, %v894
      %v896 = vpop.f32.mrb[0].mxu0
      %897 = vmatprep.mubr.f32.mxu0 0.0
      %898 = vmatmul.mubr.f32.gmra.mrb[0].mxu0 %v564
      %v899 = vpop.f32.mrb[0].mxu0
      %v900 = vadd.f32 0.0, %v899
      %v901 = vpop.f32.mrb[0].mxu0
      %902 = vmatprep.mubr.f32.mxu0 0.0
      %903 = vmatmul.mubr.f32.gmra.mrb[0].mxu0 %v565
      %v904 = vpop.f32.mrb[0].mxu0
      %v905 = vadd.f32 0.0, %v904
      %v906 = vpop.f32.mrb[0].mxu0
      %907 = vmatprep.mubr.f32.mxu0 0.0
      %908 = vmatmul.mubr.f32.gmra.mrb[0].mxu0 %v566
      %v909 = vpop.f32.mrb[0].mxu0
      %v910 = vadd.f32 0.0, %v909
      %v911 = vpop.f32.mrb[0].mxu0
      %912 = vmatprep.mubr.f32.mxu0 0.0
      %913 = vmatmul.mubr.f32.gmra.mrb[0].mxu0 %v567
      %v914 = vpop.f32.mrb[0].mxu0
      %v915 = vadd.f32 0.0, %v914
      %v916 = vpop.f32.mrb[0].mxu0
      %917 = vmatprep.mubr.f32.mxu0 0.0
      %918 = vmatmul.mubr.f32.gmra.mrb[0].mxu0 %v568
      %v919 = vpop.f32.mrb[0].mxu0
      %v920 = vadd.f32 0.0, %v919
      %v921 = vpop.f32.mrb[0].mxu0
      %922 = vmatprep.mubr.f32.mxu0 0.0
      %923 = vmatmul.mubr.f32.gmra.mrb[0].mxu0 %v569
      %v924 = vpop.f32.mrb[0].mxu0
      %v925 = vadd.f32 0.0, %v924
      %v926 = vpop.f32.mrb[0].mxu0
      %927 = vdwg.mxu0
      %928 = vmatprep.subr.mxu0 0.0
      %929 = vmatpush1.msra.mxu0 %v578
      %930 = vmatprep.subr.mxu0 0.0
      %931 = vmatpush1.msra.mxu0 %v579
      %932 = vmatprep.subr.mxu0 0.0
      %933 = vmatpush1.msra.mxu0 %v580
      %934 = vmatprep.subr.mxu0 0.0
      %935 = vmatpush1.msra.mxu0 %v581
      %936 = vmatprep.subr.mxu0 0.0
      %937 = vmatpush1.msra.mxu0 0.0
      %938 = vmatprep.subr.mxu0 0.0
      %939 = vmatpush1.msra.mxu0 0.0
      %940 = vmatprep.subr.mxu0 0.0
      %941 = vmatpush1.msra.mxu0 0.0
      %942 = vmatprep.subr.mxu0 0.0
      %943 = vmatpush1.msra.mxu0 0.0
      %944 = vmatprep.subr.mxu0 0.0
      %945 = vmatpush1.msra.mxu0 0.0
      %946 = vmatprep.subr.mxu0 0.0
      %947 = vmatpush1.msra.mxu0 0.0
      %948 = vmatprep.subr.mxu0 0.0
      %949 = vmatpush1.msra.mxu0 0.0
      %950 = vmatprep.subr.mxu0 0.0
      %951 = vmatpush1.msra.mxu0 0.0
      %952 = vmatprep.subr.mxu0 0.0
      %953 = vmatpush1.msra.mxu0 0.0
      %954 = vmatprep.subr.mxu0 0.0
      %955 = vmatpush1.msra.mxu0 0.0
      %956 = vmatprep.subr.mxu0 0.0
      %957 = vmatpush1.msra.mxu0 0.0
      %958 = vmatprep.subr.mxu0 0.0
      %959 = vmatpush1.msra.mxu0 0.0
      %960 = vmatprep.subr.mxu0 0.0
      %961 = vmatpush1.msra.mxu0 0.0
      %962 = vmatprep.subr.mxu0 0.0
      %963 = vmatpush1.msra.mxu0 0.0
      %964 = vmatprep.subr.mxu0 0.0
      %965 = vmatpush1.msra.mxu0 0.0
      %966 = vmatprep.subr.mxu0 0.0
      %967 = vmatpush1.msra.mxu0 0.0
      %968 = vmatprep.subr.mxu0 0.0
      %969 = vmatpush1.msra.mxu0 0.0
      %970 = vmatprep.subr.mxu0 0.0
      %971 = vmatpush1.msra.mxu0 0.0
      %972 = vmatprep.subr.mxu0 0.0
      %973 = vmatpush1.msra.mxu0 0.0
      %974 = vmatprep.subr.mxu0 0.0
      %975 = vmatpush1.msra.mxu0 0.0
      %976 = vmatprep.subr.mxu0 0.0
      %977 = vmatpush1.msra.mxu0 0.0
      %978 = vmatprep.subr.mxu0 0.0
      %979 = vmatpush1.msra.mxu0 0.0
      %980 = vmatprep.subr.mxu0 0.0
      %981 = vmatpush1.msra.mxu0 0.0
      %982 = vmatprep.subr.mxu0 0.0
      %983 = vmatpush1.msra.mxu0 0.0
      %984 = vmatprep.subr.mxu0 0.0
      %985 = vmatpush1.msra.mxu0 0.0
      %986 = vmatprep.subr.mxu0 0.0
      %987 = vmatpush1.msra.mxu0 0.0
      %988 = vmatprep.subr.mxu0 0.0
      %989 = vmatpush1.msra.mxu0 0.0
      %990 = vmatprep.subr.mxu0 0.0
      %991 = vmatpush1.msra.mxu0 0.0
      %992 = vmatprep.mubr.f32.mxu0 0.0
      %993 = vmatmul.mubr.f32.gmra.mrb[0].mxu0 %v591
      %v994 = vpop.f32.mrb[0].mxu0
      %v995 = vadd.f32 0.0, %v994
      %v996 = vpop.f32.mrb[0].mxu0
      %997 = vmatprep.mubr.f32.mxu0 0.0
      %998 = vmatmul.mubr.f32.gmra.mrb[0].mxu0 %v594
      %v999 = vpop.f32.mrb[0].mxu0
      %v1000 = vadd.f32 0.0, %v999
      %v1001 = vpop.f32.mrb[0].mxu0
      %1002 = vmatprep.mubr.f32.mxu0 0.0
      %1003 = vmatmul.mubr.f32.gmra.mrb[0].mxu0 %v597
      %v1004 = vpop.f32.mrb[0].mxu0
      %v1005 = vadd.f32 0.0, %v1004
      %v1006 = vpop.f32.mrb[0].mxu0
      %1007 = vmatprep.mubr.f32.mxu0 0.0
      %1008 = vmatmul.mubr.f32.gmra.mrb[0].mxu0 %v600
      %v1009 = vpop.f32.mrb[0].mxu0
      %v1010 = vadd.f32 0.0, %v1009
      %v1011 = vpop.f32.mrb[0].mxu0
      %1012 = vmatprep.mubr.f32.mxu0 0.0
      %1013 = vmatmul.mubr.f32.gmra.mrb[0].mxu0 %v603
      %v1014 = vpop.f32.mrb[0].mxu0
      %v1015 = vadd.f32 0.0, %v1014
      %v1016 = vpop.f32.mrb[0].mxu0
      %1017 = vmatprep.mubr.f32.mxu0 0.0
      %1018 = vmatmul.mubr.f32.gmra.mrb[0].mxu0 %v606
      %v1019 = vpop.f32.mrb[0].mxu0
      %v1020 = vadd.f32 0.0, %v1019
      %v1021 = vpop.f32.mrb[0].mxu0
      %1022 = vmatprep.mubr.f32.mxu0 0.0
      %1023 = vmatmul.mubr.f32.gmra.mrb[0].mxu0 %v609
      %v1024 = vpop.f32.mrb[0].mxu0
      %v1025 = vadd.f32 0.0, %v1024
      %v1026 = vpop.f32.mrb[0].mxu0
      %1027 = vmatprep.mubr.f32.mxu0 0.0
      %1028 = vmatmul.mubr.f32.gmra.mrb[0].mxu0 %v612
      %v1029 = vpop.f32.mrb[0].mxu0
      %v1030 = vadd.f32 0.0, %v1029
      %v1031 = vpop.f32.mrb[0].mxu0
      %1032 = vmatprep.mubr.f32.mxu0 0.0
      %1033 = vmatmul.mubr.f32.gmra.mrb[0].mxu0 %v615
      %v1034 = vpop.f32.mrb[0].mxu0
      %v1035 = vadd.f32 0.0, %v1034
      %v1036 = vpop.f32.mrb[0].mxu0
      %1037 = vmatprep.mubr.f32.mxu0 0.0
      %1038 = vmatmul.mubr.f32.gmra.mrb[0].mxu0 %v618
      %v1039 = vpop.f32.mrb[0].mxu0
      %v1040 = vadd.f32 0.0, %v1039
      %v1041 = vpop.f32.mrb[0].mxu0
      %1042 = vmatprep.mubr.f32.mxu0 0.0
      %1043 = vmatmul.mubr.f32.gmra.mrb[0].mxu0 %v621
      %v1044 = vpop.f32.mrb[0].mxu0
      %v1045 = vadd.f32 0.0, %v1044
      %v1046 = vpop.f32.mrb[0].mxu0
      %1047 = vmatprep.mubr.f32.mxu0 0.0
      %1048 = vmatmul.mubr.f32.gmra.mrb[0].mxu0 %v624
      %v1049 = vpop.f32.mrb[0].mxu0
      %v1050 = vadd.f32 0.0, %v1049
      %v1051 = vpop.f32.mrb[0].mxu0
      %1052 = vmatprep.mubr.f32.mxu0 0.0
      %1053 = vmatmul.mubr.f32.gmra.mrb[0].mxu0 %v627
      %v1054 = vpop.f32.mrb[0].mxu0
      %v1055 = vadd.f32 0.0, %v1054
      %v1056 = vpop.f32.mrb[0].mxu0
      %1057 = vmatprep.mubr.f32.mxu0 0.0
      %1058 = vmatmul.mubr.f32.gmra.mrb[0].mxu0 %v630
      %v1059 = vpop.f32.mrb[0].mxu0
      %v1060 = vadd.f32 0.0, %v1059
      %v1061 = vpop.f32.mrb[0].mxu0
      %1062 = vmatprep.mubr.f32.mxu0 0.0
      %1063 = vmatmul.mubr.f32.gmra.mrb[0].mxu0 %v633
      %v1064 = vpop.f32.mrb[0].mxu0
      %v1065 = vadd.f32 0.0, %v1064
      %v1066 = vpop.f32.mrb[0].mxu0
      %1067 = vmatprep.mubr.f32.mxu0 0.0
      %1068 = vmatmul.mubr.f32.gmra.mrb[0].mxu0 %v636
      %v1069 = vpop.f32.mrb[0].mxu0
      %v1070 = vadd.f32 0.0, %v1069
      %v1071 = vpop.f32.mrb[0].mxu0
      %1072 = vdwg.mxu0
      %v1074 = vsel %vm589, %v850, 0
      %v1077 = vsel %vm589, %v855, 0
      %v1080 = vsel %vm589, %v860, 0
      %v1083 = vsel %vm589, %v865, 0
      %v1086 = vsel %vm589, %v870, 0
      %v1089 = vsel %vm589, %v875, 0
      %v1092 = vsel %vm589, %v880, 0
      %v1095 = vsel %vm589, %v885, 0
      %v1098 = vsel %vm589, %v890, 0
      %v1101 = vsel %vm589, %v895, 0
      %v1104 = vsel %vm589, %v900, 0
      %v1107 = vsel %vm589, %v905, 0
      %v1110 = vsel %vm589, %v910, 0
      %v1113 = vsel %vm589, %v915, 0
      %v1116 = vsel %vm589, %v920, 0
      %v1119 = vsel %vm589, %v925, 0
      %1121 = vmatprep.subr.mxu0 0.0
      %1122 = vmatpush1.msra.mxu0 %v574
      %1123 = vmatprep.subr.mxu0 0.0
      %1124 = vmatpush1.msra.mxu0 %v575
      %1125 = vmatprep.subr.mxu0 0.0
      %1126 = vmatpush1.msra.mxu0 %v576
      %1127 = vmatprep.subr.mxu0 0.0
      %1128 = vmatpush1.msra.mxu0 %v577
      %1129 = vmatprep.subr.mxu0 0.0
      %1130 = vmatpush1.msra.mxu0 0.0
      %1131 = vmatprep.subr.mxu0 0.0
      %1132 = vmatpush1.msra.mxu0 0.0
      %1133 = vmatprep.subr.mxu0 0.0
      %1134 = vmatpush1.msra.mxu0 0.0
      %1135 = vmatprep.subr.mxu0 0.0
      %1136 = vmatpush1.msra.mxu0 0.0
      %1137 = vmatprep.subr.mxu0 0.0
      %1138 = vmatpush1.msra.mxu0 0.0
      %1139 = vmatprep.subr.mxu0 0.0
      %1140 = vmatpush1.msra.mxu0 0.0
      %1141 = vmatprep.subr.mxu0 0.0
      %1142 = vmatpush1.msra.mxu0 0.0
      %1143 = vmatprep.subr.mxu0 0.0
      %1144 = vmatpush1.msra.mxu0 0.0
      %1145 = vmatprep.subr.mxu0 0.0
      %1146 = vmatpush1.msra.mxu0 0.0
      %1147 = vmatprep.subr.mxu0 0.0
      %1148 = vmatpush1.msra.mxu0 0.0
      %1149 = vmatprep.subr.mxu0 0.0
      %1150 = vmatpush1.msra.mxu0 0.0
      %1151 = vmatprep.subr.mxu0 0.0
      %1152 = vmatpush1.msra.mxu0 0.0
      %1153 = vmatprep.subr.mxu0 0.0
      %1154 = vmatpush1.msra.mxu0 0.0
      %1155 = vmatprep.subr.mxu0 0.0
      %1156 = vmatpush1.msra.mxu0 0.0
      %1157 = vmatprep.subr.mxu0 0.0
      %1158 = vmatpush1.msra.mxu0 0.0
      %1159 = vmatprep.subr.mxu0 0.0
      %1160 = vmatpush1.msra.mxu0 0.0
      %1161 = vmatprep.subr.mxu0 0.0
      %1162 = vmatpush1.msra.mxu0 0.0
      %1163 = vmatprep.subr.mxu0 0.0
      %1164 = vmatpush1.msra.mxu0 0.0
      %1165 = vmatprep.subr.mxu0 0.0
      %1166 = vmatpush1.msra.mxu0 0.0
      %1167 = vmatprep.subr.mxu0 0.0
      %1168 = vmatpush1.msra.mxu0 0.0
      %1169 = vmatprep.subr.mxu0 0.0
      %1170 = vmatpush1.msra.mxu0 0.0
      %1171 = vmatprep.subr.mxu0 0.0
      %1172 = vmatpush1.msra.mxu0 0.0
      %1173 = vmatprep.subr.mxu0 0.0
      %1174 = vmatpush1.msra.mxu0 0.0
      %1175 = vmatprep.subr.mxu0 0.0
      %1176 = vmatpush1.msra.mxu0 0.0
      %1177 = vmatprep.subr.mxu0 0.0
      %1178 = vmatpush1.msra.mxu0 0.0
      %1179 = vmatprep.subr.mxu0 0.0
      %1180 = vmatpush1.msra.mxu0 0.0
      %1181 = vmatprep.subr.mxu0 0.0
      %1182 = vmatpush1.msra.mxu0 0.0
      %1183 = vmatprep.subr.mxu0 0.0
      %1184 = vmatpush1.msra.mxu0 0.0
      %1185 = vmatprep.mubr.f32.mxu0 0.0
      %1186 = vmatmul.mubr.f32.gmra.mrb[0].mxu0 %v1074
      %v1187 = vpop.f32.mrb[0].mxu0
      %v1188 = vadd.f32 %v995, %v1187
      %v1189 = vpop.f32.mrb[0].mxu0
      %1190 = vmatprep.mubr.f32.mxu0 0.0
      %1191 = vmatmul.mubr.f32.gmra.mrb[0].mxu0 %v1077
      %v1192 = vpop.f32.mrb[0].mxu0
      %v1193 = vadd.f32 %v1000, %v1192
      %v1194 = vpop.f32.mrb[0].mxu0
      %1195 = vmatprep.mubr.f32.mxu0 0.0
      %1196 = vmatmul.mubr.f32.gmra.mrb[0].mxu0 %v1080
      %v1197 = vpop.f32.mrb[0].mxu0
      %v1198 = vadd.f32 %v1005, %v1197
      %v1199 = vpop.f32.mrb[0].mxu0
      %1200 = vmatprep.mubr.f32.mxu0 0.0
      %1201 = vmatmul.mubr.f32.gmra.mrb[0].mxu0 %v1083
      %v1202 = vpop.f32.mrb[0].mxu0
      %v1203 = vadd.f32 %v1010, %v1202
      %v1204 = vpop.f32.mrb[0].mxu0
      %1205 = vmatprep.mubr.f32.mxu0 0.0
      %1206 = vmatmul.mubr.f32.gmra.mrb[0].mxu0 %v1086
      %v1207 = vpop.f32.mrb[0].mxu0
      %v1208 = vadd.f32 %v1015, %v1207
      %v1209 = vpop.f32.mrb[0].mxu0
      %1210 = vmatprep.mubr.f32.mxu0 0.0
      %1211 = vmatmul.mubr.f32.gmra.mrb[0].mxu0 %v1089
      %v1212 = vpop.f32.mrb[0].mxu0
      %v1213 = vadd.f32 %v1020, %v1212
      %v1214 = vpop.f32.mrb[0].mxu0
      %1215 = vmatprep.mubr.f32.mxu0 0.0
      %1216 = vmatmul.mubr.f32.gmra.mrb[0].mxu0 %v1092
      %v1217 = vpop.f32.mrb[0].mxu0
      %v1218 = vadd.f32 %v1025, %v1217
      %v1219 = vpop.f32.mrb[0].mxu0
      %1220 = vmatprep.mubr.f32.mxu0 0.0
      %1221 = vmatmul.mubr.f32.gmra.mrb[0].mxu0 %v1095
      %v1222 = vpop.f32.mrb[0].mxu0
      %v1223 = vadd.f32 %v1030, %v1222
      %v1224 = vpop.f32.mrb[0].mxu0
      %1225 = vmatprep.mubr.f32.mxu0 0.0
      %1226 = vmatmul.mubr.f32.gmra.mrb[0].mxu0 %v1098
      %v1227 = vpop.f32.mrb[0].mxu0
      %v1228 = vadd.f32 %v1035, %v1227
      %v1229 = vpop.f32.mrb[0].mxu0
      %1230 = vmatprep.mubr.f32.mxu0 0.0
      %1231 = vmatmul.mubr.f32.gmra.mrb[0].mxu0 %v1101
      %v1232 = vpop.f32.mrb[0].mxu0
      %v1233 = vadd.f32 %v1040, %v1232
      %v1234 = vpop.f32.mrb[0].mxu0
      %1235 = vmatprep.mubr.f32.mxu0 0.0
      %1236 = vmatmul.mubr.f32.gmra.mrb[0].mxu0 %v1104
      %v1237 = vpop.f32.mrb[0].mxu0
      %v1238 = vadd.f32 %v1045, %v1237
      %v1239 = vpop.f32.mrb[0].mxu0
      %1240 = vmatprep.mubr.f32.mxu0 0.0
      %1241 = vmatmul.mubr.f32.gmra.mrb[0].mxu0 %v1107
      %v1242 = vpop.f32.mrb[0].mxu0
      %v1243 = vadd.f32 %v1050, %v1242
      %v1244 = vpop.f32.mrb[0].mxu0
      %1245 = vmatprep.mubr.f32.mxu0 0.0
      %1246 = vmatmul.mubr.f32.gmra.mrb[0].mxu0 %v1110
      %v1247 = vpop.f32.mrb[0].mxu0
      %v1248 = vadd.f32 %v1055, %v1247
      %v1249 = vpop.f32.mrb[0].mxu0
      %1250 = vmatprep.mubr.f32.mxu0 0.0
      %1251 = vmatmul.mubr.f32.gmra.mrb[0].mxu0 %v1113
      %v1252 = vpop.f32.mrb[0].mxu0
      %v1253 = vadd.f32 %v1060, %v1252
      %v1254 = vpop.f32.mrb[0].mxu0
      %1255 = vmatprep.mubr.f32.mxu0 0.0
      %1256 = vmatmul.mubr.f32.gmra.mrb[0].mxu0 %v1116
      %v1257 = vpop.f32.mrb[0].mxu0
      %v1258 = vadd.f32 %v1065, %v1257
      %v1259 = vpop.f32.mrb[0].mxu0
      %1260 = vmatprep.mubr.f32.mxu0 0.0
      %1261 = vmatmul.mubr.f32.gmra.mrb[0].mxu0 %v1119
      %v1262 = vpop.f32.mrb[0].mxu0
      %v1263 = vadd.f32 %v1070, %v1262
      %v1264 = vpop.f32.mrb[0].mxu0
      %1265 = vdwg.mxu0
      %v1266 = vadd.f32 %v1188, %v587
      %v1267 = vadd.f32 %v1193, %v587
      %v1268 = vadd.f32 %v1198, %v587
      %v1269 = vadd.f32 %v1203, %v587
      %v1270 = vadd.f32 %v1208, %v587
      %v1271 = vadd.f32 %v1213, %v587
      %v1272 = vadd.f32 %v1218, %v587
      %v1273 = vadd.f32 %v1223, %v587
      %v1274 = vadd.f32 %v1228, %v587
      %v1275 = vadd.f32 %v1233, %v587
      %v1276 = vadd.f32 %v1238, %v587
      %v1277 = vadd.f32 %v1243, %v587
      %v1278 = vadd.f32 %v1248, %v587
      %v1279 = vadd.f32 %v1253, %v587
      %v1280 = vadd.f32 %v1258, %v587
      %v1281 = vadd.f32 %v1263, %v587
      %v1282 = vxor.u32 %v1266, 2147483648
      %v1283 = vxor.u32 %v1267, 2147483648
      %v1284 = vxor.u32 %v1268, 2147483648
      %v1285 = vxor.u32 %v1269, 2147483648
      %v1286 = vxor.u32 %v1270, 2147483648
      %v1287 = vxor.u32 %v1271, 2147483648
      %v1288 = vxor.u32 %v1272, 2147483648
      %v1289 = vxor.u32 %v1273, 2147483648
      %v1290 = vxor.u32 %v1274, 2147483648
      %v1291 = vxor.u32 %v1275, 2147483648
      %v1292 = vxor.u32 %v1276, 2147483648
      %v1293 = vxor.u32 %v1277, 2147483648
      %v1294 = vxor.u32 %v1278, 2147483648
      %v1295 = vxor.u32 %v1279, 2147483648
      %v1296 = vxor.u32 %v1280, 2147483648
      %v1297 = vxor.u32 %v1281, 2147483648
      %v1298 = vmul.f32 %v1282, 1.442695
      %v1299 = vpow.pop %v1298
      %v1300 = vmul.f32 %v1283, 1.442695
      %v1301 = vpow.pop %v1300
      %v1302 = vmul.f32 %v1284, 1.442695
      %v1303 = vpow.pop %v1302
      %v1304 = vmul.f32 %v1285, 1.442695
      %v1305 = vpow.pop %v1304
      %v1306 = vmul.f32 %v1286, 1.442695
      %v1307 = vpow.pop %v1306
      %v1308 = vmul.f32 %v1287, 1.442695
      %v1309 = vpow.pop %v1308
      %v1310 = vmul.f32 %v1288, 1.442695
      %v1311 = vpow.pop %v1310
      %v1312 = vmul.f32 %v1289, 1.442695
      %v1313 = vpow.pop %v1312
      %v1314 = vmul.f32 %v1290, 1.442695
      %v1315 = vpow.pop %v1314
      %v1316 = vmul.f32 %v1291, 1.442695
      %v1317 = vpow.pop %v1316
      %v1318 = vmul.f32 %v1292, 1.442695
      %v1319 = vpow.pop %v1318
      %v1320 = vmul.f32 %v1293, 1.442695
      %v1321 = vpow.pop %v1320
      %v1322 = vmul.f32 %v1294, 1.442695
      %v1323 = vpow.pop %v1322
      %v1324 = vmul.f32 %v1295, 1.442695
      %v1325 = vpow.pop %v1324
      %v1326 = vmul.f32 %v1296, 1.442695
      %v1327 = vpow.pop %v1326
      %v1328 = vmul.f32 %v1297, 1.442695
      %v1329 = vpow.pop %v1328
      %v1330 = vadd.f32 %v1299, 1.0
      %v1331 = vadd.f32 %v1301, 1.0
      %v1332 = vadd.f32 %v1303, 1.0
      %v1333 = vadd.f32 %v1305, 1.0
      %v1334 = vadd.f32 %v1307, 1.0
      %v1335 = vadd.f32 %v1309, 1.0
      %v1336 = vadd.f32 %v1311, 1.0
      %v1337 = vadd.f32 %v1313, 1.0
      %v1338 = vadd.f32 %v1315, 1.0
      %v1339 = vadd.f32 %v1317, 1.0
      %v1340 = vadd.f32 %v1319, 1.0
      %v1341 = vadd.f32 %v1321, 1.0
      %v1342 = vadd.f32 %v1323, 1.0
      %v1343 = vadd.f32 %v1325, 1.0
      %v1344 = vadd.f32 %v1327, 1.0
      %v1345 = vadd.f32 %v1329, 1.0
      %v1346 = vrcp.pop %v1330
      %v1347 = vmul.f32 1.0, %v1346
      %v1348 = vrcp.pop %v1331
      %v1349 = vmul.f32 1.0, %v1348
      %v1350 = vrcp.pop %v1332
      %v1351 = vmul.f32 1.0, %v1350
      %v1352 = vrcp.pop %v1333
      %v1353 = vmul.f32 1.0, %v1352
      %v1354 = vrcp.pop %v1334
      %v1355 = vmul.f32 1.0, %v1354
      %v1356 = vrcp.pop %v1335
      %v1357 = vmul.f32 1.0, %v1356
      %v1358 = vrcp.pop %v1336
      %v1359 = vmul.f32 1.0, %v1358
      %v1360 = vrcp.pop %v1337
      %v1361 = vmul.f32 1.0, %v1360
      %v1362 = vrcp.pop %v1338
      %v1363 = vmul.f32 1.0, %v1362
      %v1364 = vrcp.pop %v1339
      %v1365 = vmul.f32 1.0, %v1364
      %v1366 = vrcp.pop %v1340
      %v1367 = vmul.f32 1.0, %v1366
      %v1368 = vrcp.pop %v1341
      %v1369 = vmul.f32 1.0, %v1368
      %v1370 = vrcp.pop %v1342
      %v1371 = vmul.f32 1.0, %v1370
      %v1372 = vrcp.pop %v1343
      %v1373 = vmul.f32 1.0, %v1372
      %v1374 = vrcp.pop %v1344
      %v1375 = vmul.f32 1.0, %v1374
      %v1376 = vrcp.pop %v1345
      %v1377 = vmul.f32 1.0, %v1376
      %1394 = vrot.lane.b32.xlu0 %v1266, 32
      %v1395 = vpop.permute.xlu0 %1394
      %1396 = vrot.lane.b32.xlu0 %v1267, 32
      %v1397 = vpop.permute.xlu0 %1396
      %1398 = vrot.lane.b32.xlu0 %v1268, 32
      %v1399 = vpop.permute.xlu0 %1398
      %1400 = vrot.lane.b32.xlu0 %v1269, 32
      %v1401 = vpop.permute.xlu0 %1400
      %1402 = vrot.lane.b32.xlu0 %v1270, 32
      %v1403 = vpop.permute.xlu0 %1402
      %1404 = vrot.lane.b32.xlu0 %v1271, 32
      %v1405 = vpop.permute.xlu0 %1404
      %1406 = vrot.lane.b32.xlu0 %v1272, 32
      %v1407 = vpop.permute.xlu0 %1406
      %1408 = vrot.lane.b32.xlu0 %v1273, 32
      %v1409 = vpop.permute.xlu0 %1408
      %1410 = vrot.lane.b32.xlu0 %v1274, 32
      %v1411 = vpop.permute.xlu0 %1410
      %1412 = vrot.lane.b32.xlu0 %v1275, 32
      %v1413 = vpop.permute.xlu0 %1412
      %1414 = vrot.lane.b32.xlu0 %v1276, 32
      %v1415 = vpop.permute.xlu0 %1414
      %1416 = vrot.lane.b32.xlu0 %v1277, 32
      %v1417 = vpop.permute.xlu0 %1416
      %1418 = vrot.lane.b32.xlu0 %v1278, 32
      %v1419 = vpop.permute.xlu0 %1418
      %1420 = vrot.lane.b32.xlu0 %v1279, 32
      %v1421 = vpop.permute.xlu0 %1420
      %1422 = vrot.lane.b32.xlu0 %v1280, 32
      %v1423 = vpop.permute.xlu0 %1422
      %1424 = vrot.lane.b32.xlu0 %v1281, 32
      %v1425 = vpop.permute.xlu0 %1424
      %v1442 = vmul.f32 %v1347, %v1395
      %v1443 = vmul.f32 %v1349, %v1397
      %v1444 = vmul.f32 %v1351, %v1399
      %v1445 = vmul.f32 %v1353, %v1401
      %v1446 = vmul.f32 %v1355, %v1403
      %v1447 = vmul.f32 %v1357, %v1405
      %v1448 = vmul.f32 %v1359, %v1407
      %v1449 = vmul.f32 %v1361, %v1409
      %v1450 = vmul.f32 %v1363, %v1411
      %v1451 = vmul.f32 %v1365, %v1413
      %v1452 = vmul.f32 %v1367, %v1415
      %v1453 = vmul.f32 %v1369, %v1417
      %v1454 = vmul.f32 %v1371, %v1419
      %v1455 = vmul.f32 %v1373, %v1421
      %v1456 = vmul.f32 %v1375, %v1423
      %v1457 = vmul.f32 %v1377, %v1425
      %1474 = vrot.lane.b32.xlu0 %v1442, 64
      %v1475 = vpop.permute.xlu0 %1474
      %1476 = vrot.lane.b32.xlu0 %v1443, 64
      %v1477 = vpop.permute.xlu0 %1476
      %1478 = vrot.lane.b32.xlu0 %v1444, 64
      %v1479 = vpop.permute.xlu0 %1478
      %1480 = vrot.lane.b32.xlu0 %v1445, 64
      %v1481 = vpop.permute.xlu0 %1480
      %1482 = vrot.lane.b32.xlu0 %v1446, 64
      %v1483 = vpop.permute.xlu0 %1482
      %1484 = vrot.lane.b32.xlu0 %v1447, 64
      %v1485 = vpop.permute.xlu0 %1484
      %1486 = vrot.lane.b32.xlu0 %v1448, 64
      %v1487 = vpop.permute.xlu0 %1486
      %1488 = vrot.lane.b32.xlu0 %v1449, 64
      %v1489 = vpop.permute.xlu0 %1488
      %1490 = vrot.lane.b32.xlu0 %v1450, 64
      %v1491 = vpop.permute.xlu0 %1490
      %1492 = vrot.lane.b32.xlu0 %v1451, 64
      %v1493 = vpop.permute.xlu0 %1492
      %1494 = vrot.lane.b32.xlu0 %v1452, 64
      %v1495 = vpop.permute.xlu0 %1494
      %1496 = vrot.lane.b32.xlu0 %v1453, 64
      %v1497 = vpop.permute.xlu0 %1496
      %1498 = vrot.lane.b32.xlu0 %v1454, 64
      %v1499 = vpop.permute.xlu0 %1498
      %1500 = vrot.lane.b32.xlu0 %v1455, 64
      %v1501 = vpop.permute.xlu0 %1500
      %1502 = vrot.lane.b32.xlu0 %v1456, 64
      %v1503 = vpop.permute.xlu0 %1502
      %1504 = vrot.lane.b32.xlu0 %v1457, 64
      %v1505 = vpop.permute.xlu0 %1504
      %v1522 = vadd.f32 %v1266, %v1475
      %v1523 = vadd.f32 %v1267, %v1477
      %v1524 = vadd.f32 %v1268, %v1479
      %v1525 = vadd.f32 %v1269, %v1481
      %v1526 = vadd.f32 %v1270, %v1483
      %v1527 = vadd.f32 %v1271, %v1485
      %v1528 = vadd.f32 %v1272, %v1487
      %v1529 = vadd.f32 %v1273, %v1489
      %v1530 = vadd.f32 %v1274, %v1491
      %v1531 = vadd.f32 %v1275, %v1493
      %v1532 = vadd.f32 %v1276, %v1495
      %v1533 = vadd.f32 %v1277, %v1497
      %v1534 = vadd.f32 %v1278, %v1499
      %v1535 = vadd.f32 %v1279, %v1501
      %v1536 = vadd.f32 %v1280, %v1503
      %v1537 = vadd.f32 %v1281, %v1505
      %v1538 = vtanh.pop %v1522
      %v1539 = vtanh.pop %v1523
      %v1540 = vtanh.pop %v1524
      %v1541 = vtanh.pop %v1525
      %v1542 = vtanh.pop %v1526
      %v1543 = vtanh.pop %v1527
      %v1544 = vtanh.pop %v1528
      %v1545 = vtanh.pop %v1529
      %v1546 = vtanh.pop %v1530
      %v1547 = vtanh.pop %v1531
      %v1548 = vtanh.pop %v1532
      %v1549 = vtanh.pop %v1533
      %v1550 = vtanh.pop %v1534
      %v1551 = vtanh.pop %v1535
      %v1552 = vtanh.pop %v1536
      %v1553 = vtanh.pop %v1537
      %v1554 = vsub.f32 1.0, %v1347
      %v1555 = vsub.f32 1.0, %v1349
      %v1556 = vsub.f32 1.0, %v1351
      %v1557 = vsub.f32 1.0, %v1353
      %v1558 = vsub.f32 1.0, %v1355
      %v1559 = vsub.f32 1.0, %v1357
      %v1560 = vsub.f32 1.0, %v1359
      %v1561 = vsub.f32 1.0, %v1361
      %v1562 = vsub.f32 1.0, %v1363
      %v1563 = vsub.f32 1.0, %v1365
      %v1564 = vsub.f32 1.0, %v1367
      %v1565 = vsub.f32 1.0, %v1369
      %v1566 = vsub.f32 1.0, %v1371
      %v1567 = vsub.f32 1.0, %v1373
      %v1568 = vsub.f32 1.0, %v1375
      %v1569 = vsub.f32 1.0, %v1377
      %1586 = vrot.lane.b32.xlu0 %v1538, 96
      %v1587 = vpop.permute.xlu0 %1586
      %1588 = vrot.lane.b32.xlu0 %v1539, 96
      %v1589 = vpop.permute.xlu0 %1588
      %1590 = vrot.lane.b32.xlu0 %v1540, 96
      %v1591 = vpop.permute.xlu0 %1590
      %1592 = vrot.lane.b32.xlu0 %v1541, 96
      %v1593 = vpop.permute.xlu0 %1592
      %1594 = vrot.lane.b32.xlu0 %v1542, 96
      %v1595 = vpop.permute.xlu0 %1594
      %1596 = vrot.lane.b32.xlu0 %v1543, 96
      %v1597 = vpop.permute.xlu0 %1596
      %1598 = vrot.lane.b32.xlu0 %v1544, 96
      %v1599 = vpop.permute.xlu0 %1598
      %1600 = vrot.lane.b32.xlu0 %v1545, 96
      %v1601 = vpop.permute.xlu0 %1600
      %1602 = vrot.lane.b32.xlu0 %v1546, 96
      %v1603 = vpop.permute.xlu0 %1602
      %1604 = vrot.lane.b32.xlu0 %v1547, 96
      %v1605 = vpop.permute.xlu0 %1604
      %1606 = vrot.lane.b32.xlu0 %v1548, 96
      %v1607 = vpop.permute.xlu0 %1606
      %1608 = vrot.lane.b32.xlu0 %v1549, 96
      %v1609 = vpop.permute.xlu0 %1608
      %1610 = vrot.lane.b32.xlu0 %v1550, 96
      %v1611 = vpop.permute.xlu0 %1610
      %1612 = vrot.lane.b32.xlu0 %v1551, 96
      %v1613 = vpop.permute.xlu0 %1612
      %1614 = vrot.lane.b32.xlu0 %v1552, 96
      %v1615 = vpop.permute.xlu0 %1614
      %1616 = vrot.lane.b32.xlu0 %v1553, 96
      %v1617 = vpop.permute.xlu0 %1616
      %v1634 = vmul.f32 %v1554, %v1587
      %v1635 = vmul.f32 %v1555, %v1589
      %v1636 = vmul.f32 %v1556, %v1591
      %v1637 = vmul.f32 %v1557, %v1593
      %v1638 = vmul.f32 %v1558, %v1595
      %v1639 = vmul.f32 %v1559, %v1597
      %v1640 = vmul.f32 %v1560, %v1599
      %v1641 = vmul.f32 %v1561, %v1601
      %v1642 = vmul.f32 %v1562, %v1603
      %v1643 = vmul.f32 %v1563, %v1605
      %v1644 = vmul.f32 %v1564, %v1607
      %v1645 = vmul.f32 %v1565, %v1609
      %v1646 = vmul.f32 %v1566, %v1611
      %v1647 = vmul.f32 %v1567, %v1613
      %v1648 = vmul.f32 %v1568, %v1615
      %v1649 = vmul.f32 %v1569, %v1617
      %1650 = vrot.lane.b32.xlu0 %v460, 32
      %v1651 = vpop.permute.xlu0 %1650
      %1652 = vrot.lane.b32.xlu0 %v465, 32
      %v1653 = vpop.permute.xlu0 %1652
      %1654 = vrot.lane.b32.xlu0 %v470, 32
      %v1655 = vpop.permute.xlu0 %1654
      %1656 = vrot.lane.b32.xlu0 %v475, 32
      %v1657 = vpop.permute.xlu0 %1656
      %1658 = vrot.lane.b32.xlu0 %v480, 32
      %v1659 = vpop.permute.xlu0 %1658
      %1660 = vrot.lane.b32.xlu0 %v485, 32
      %v1661 = vpop.permute.xlu0 %1660
      %1662 = vrot.lane.b32.xlu0 %v490, 32
      %v1663 = vpop.permute.xlu0 %1662
      %1664 = vrot.lane.b32.xlu0 %v495, 32
      %v1665 = vpop.permute.xlu0 %1664
      %1666 = vrot.lane.b32.xlu0 %v500, 32
      %v1667 = vpop.permute.xlu0 %1666
      %1668 = vrot.lane.b32.xlu0 %v505, 32
      %v1669 = vpop.permute.xlu0 %1668
      %1670 = vrot.lane.b32.xlu0 %v510, 32
      %v1671 = vpop.permute.xlu0 %1670
      %1672 = vrot.lane.b32.xlu0 %v515, 32
      %v1673 = vpop.permute.xlu0 %1672
      %1674 = vrot.lane.b32.xlu0 %v520, 32
      %v1675 = vpop.permute.xlu0 %1674
      %1676 = vrot.lane.b32.xlu0 %v525, 32
      %v1677 = vpop.permute.xlu0 %1676
      %1678 = vrot.lane.b32.xlu0 %v530, 32
      %v1679 = vpop.permute.xlu0 %1678
      %1680 = vrot.lane.b32.xlu0 %v535, 32
      %v1681 = vpop.permute.xlu0 %1680
      %v1698 = vmul.f32 %v1347, %v1651
      %v1699 = vmul.f32 %v1349, %v1653
      %v1700 = vmul.f32 %v1351, %v1655
      %v1701 = vmul.f32 %v1353, %v1657
      %v1702 = vmul.f32 %v1355, %v1659
      %v1703 = vmul.f32 %v1357, %v1661
      %v1704 = vmul.f32 %v1359, %v1663
      %v1705 = vmul.f32 %v1361, %v1665
      %v1706 = vmul.f32 %v1363, %v1667
      %v1707 = vmul.f32 %v1365, %v1669
      %v1708 = vmul.f32 %v1367, %v1671
      %v1709 = vmul.f32 %v1369, %v1673
      %v1710 = vmul.f32 %v1371, %v1675
      %v1711 = vmul.f32 %v1373, %v1677
      %v1712 = vmul.f32 %v1375, %v1679
      %v1713 = vmul.f32 %v1377, %v1681
      %v1714 = vadd.f32 %v1634, %v1698
      %v1715 = vadd.f32 %v1635, %v1699
      %v1716 = vadd.f32 %v1636, %v1700
      %v1717 = vadd.f32 %v1637, %v1701
      %v1718 = vadd.f32 %v1638, %v1702
      %v1719 = vadd.f32 %v1639, %v1703
      %v1720 = vadd.f32 %v1640, %v1704
      %v1721 = vadd.f32 %v1641, %v1705
      %v1722 = vadd.f32 %v1642, %v1706
      %v1723 = vadd.f32 %v1643, %v1707
      %v1724 = vadd.f32 %v1644, %v1708
      %v1725 = vadd.f32 %v1645, %v1709
      %v1726 = vadd.f32 %v1646, %v1710
      %v1727 = vadd.f32 %v1647, %v1711
      %v1728 = vadd.f32 %v1648, %v1712
      %v1729 = vadd.f32 %v1649, %v1713
      %1746 = vrot.lane.b32.xlu0 %v1714, 96
      %v1747 = vpop.permute.xlu0 %1746
      %1748 = vrot.lane.b32.xlu0 %v1715, 96
      %v1749 = vpop.permute.xlu0 %1748
      %1750 = vrot.lane.b32.xlu0 %v1716, 96
      %v1751 = vpop.permute.xlu0 %1750
      %1752 = vrot.lane.b32.xlu0 %v1717, 96
      %v1753 = vpop.permute.xlu0 %1752
      %1754 = vrot.lane.b32.xlu0 %v1718, 96
      %v1755 = vpop.permute.xlu0 %1754
      %1756 = vrot.lane.b32.xlu0 %v1719, 96
      %v1757 = vpop.permute.xlu0 %1756
      %1758 = vrot.lane.b32.xlu0 %v1720, 96
      %v1759 = vpop.permute.xlu0 %1758
      %1760 = vrot.lane.b32.xlu0 %v1721, 96
      %v1761 = vpop.permute.xlu0 %1760
      %1762 = vrot.lane.b32.xlu0 %v1722, 96
      %v1763 = vpop.permute.xlu0 %1762
      %1764 = vrot.lane.b32.xlu0 %v1723, 96
      %v1765 = vpop.permute.xlu0 %1764
      %1766 = vrot.lane.b32.xlu0 %v1724, 96
      %v1767 = vpop.permute.xlu0 %1766
      %1768 = vrot.lane.b32.xlu0 %v1725, 96
      %v1769 = vpop.permute.xlu0 %1768
      %1770 = vrot.lane.b32.xlu0 %v1726, 96
      %v1771 = vpop.permute.xlu0 %1770
      %1772 = vrot.lane.b32.xlu0 %v1727, 96
      %v1773 = vpop.permute.xlu0 %1772
      %1774 = vrot.lane.b32.xlu0 %v1728, 96
      %v1775 = vpop.permute.xlu0 %1774
      %1776 = vrot.lane.b32.xlu0 %v1729, 96
      %v1777 = vpop.permute.xlu0 %1776
      %1782 = vrot.lane.b32.xlu0 %v570, 96
      %v1783 = vpop.permute.xlu0 %1782
      %1784 = vrot.lane.b32.xlu0 %v571, 96
      %v1785 = vpop.permute.xlu0 %1784
      %1786 = vrot.lane.b32.xlu0 %v572, 96
      %v1787 = vpop.permute.xlu0 %1786
      %1788 = vrot.lane.b32.xlu0 %v573, 96
      %v1789 = vpop.permute.xlu0 %1788
      %v1794 = vsel %vm589, %v1747, 0
      %v1796 = vsel %vm589, %v1749, 0
      %v1798 = vsel %vm589, %v1751, 0
      %v1800 = vsel %vm589, %v1753, 0
      %v1802 = vsel %vm589, %v1755, 0
      %v1804 = vsel %vm589, %v1757, 0
      %v1806 = vsel %vm589, %v1759, 0
      %v1808 = vsel %vm589, %v1761, 0
      %v1810 = vsel %vm589, %v1763, 0
      %v1812 = vsel %vm589, %v1765, 0
      %v1814 = vsel %vm589, %v1767, 0
      %v1816 = vsel %vm589, %v1769, 0
      %v1818 = vsel %vm589, %v1771, 0
      %v1820 = vsel %vm589, %v1773, 0
      %v1822 = vsel %vm589, %v1775, 0
      %v1824 = vsel %vm589, %v1777, 0
      %1826 = vmatprep.subr.mxu0 0.0
      %1827 = vmatpush1.msra.mxu0 %v1783
      %1828 = vmatprep.subr.mxu0 0.0
      %1829 = vmatpush1.msra.mxu0 %v1785
      %1830 = vmatprep.subr.mxu0 0.0
      %1831 = vmatpush1.msra.mxu0 %v1787
      %1832 = vmatprep.subr.mxu0 0.0
      %1833 = vmatpush1.msra.mxu0 %v1789
      %1834 = vmatprep.subr.mxu0 0.0
      %1835 = vmatpush1.msra.mxu0 0.0
      %1836 = vmatprep.subr.mxu0 0.0
      %1837 = vmatpush1.msra.mxu0 0.0
      %1838 = vmatprep.subr.mxu0 0.0
      %1839 = vmatpush1.msra.mxu0 0.0
      %1840 = vmatprep.subr.mxu0 0.0
      %1841 = vmatpush1.msra.mxu0 0.0
      %1842 = vmatprep.subr.mxu0 0.0
      %1843 = vmatpush1.msra.mxu0 0.0
      %1844 = vmatprep.subr.mxu0 0.0
      %1845 = vmatpush1.msra.mxu0 0.0
      %1846 = vmatprep.subr.mxu0 0.0
      %1847 = vmatpush1.msra.mxu0 0.0
      %1848 = vmatprep.subr.mxu0 0.0
      %1849 = vmatpush1.msra.mxu0 0.0
      %1850 = vmatprep.subr.mxu0 0.0
      %1851 = vmatpush1.msra.mxu0 0.0
      %1852 = vmatprep.subr.mxu0 0.0
      %1853 = vmatpush1.msra.mxu0 0.0
      %1854 = vmatprep.subr.mxu0 0.0
      %1855 = vmatpush1.msra.mxu0 0.0
      %1856 = vmatprep.subr.mxu0 0.0
      %1857 = vmatpush1.msra.mxu0 0.0
      %1858 = vmatprep.subr.mxu0 0.0
      %1859 = vmatpush1.msra.mxu0 0.0
      %1860 = vmatprep.subr.mxu0 0.0
      %1861 = vmatpush1.msra.mxu0 0.0
      %1862 = vmatprep.subr.mxu0 0.0
      %1863 = vmatpush1.msra.mxu0 0.0
      %1864 = vmatprep.subr.mxu0 0.0
      %1865 = vmatpush1.msra.mxu0 0.0
      %1866 = vmatprep.subr.mxu0 0.0
      %1867 = vmatpush1.msra.mxu0 0.0
      %1868 = vmatprep.subr.mxu0 0.0
      %1869 = vmatpush1.msra.mxu0 0.0
      %1870 = vmatprep.subr.mxu0 0.0
      %1871 = vmatpush1.msra.mxu0 0.0
      %1872 = vmatprep.subr.mxu0 0.0
      %1873 = vmatpush1.msra.mxu0 0.0
      %1874 = vmatprep.subr.mxu0 0.0
      %1875 = vmatpush1.msra.mxu0 0.0
      %1876 = vmatprep.subr.mxu0 0.0
      %1877 = vmatpush1.msra.mxu0 0.0
      %1878 = vmatprep.subr.mxu0 0.0
      %1879 = vmatpush1.msra.mxu0 0.0
      %1880 = vmatprep.subr.mxu0 0.0
      %1881 = vmatpush1.msra.mxu0 0.0
      %1882 = vmatprep.subr.mxu0 0.0
      %1883 = vmatpush1.msra.mxu0 0.0
      %1884 = vmatprep.subr.mxu0 0.0
      %1885 = vmatpush1.msra.mxu0 0.0
      %1886 = vmatprep.subr.mxu0 0.0
      %1887 = vmatpush1.msra.mxu0 0.0
      %1888 = vmatprep.subr.mxu0 0.0
      %1889 = vmatpush1.msra.mxu0 0.0
      %1890 = vmatprep.mubr.f32.mxu0 0.0
      %1891 = vmatmul.mubr.f32.gmra.mrb[0].mxu0 %v1794
      %v1892 = vpop.f32.mrb[0].mxu0
      %v1893 = vadd.f32 0.0, %v1892
      %v1894 = vpop.f32.mrb[0].mxu0
      %1895 = vmatprep.mubr.f32.mxu0 0.0
      %1896 = vmatmul.mubr.f32.gmra.mrb[0].mxu0 %v1796
      %v1897 = vpop.f32.mrb[0].mxu0
      %v1898 = vadd.f32 0.0, %v1897
      %v1899 = vpop.f32.mrb[0].mxu0
      %1900 = vmatprep.mubr.f32.mxu0 0.0
      %1901 = vmatmul.mubr.f32.gmra.mrb[0].mxu0 %v1798
      %v1902 = vpop.f32.mrb[0].mxu0
      %v1903 = vadd.f32 0.0, %v1902
      %v1904 = vpop.f32.mrb[0].mxu0
      %1905 = vmatprep.mubr.f32.mxu0 0.0
      %1906 = vmatmul.mubr.f32.gmra.mrb[0].mxu0 %v1800
      %v1907 = vpop.f32.mrb[0].mxu0
      %v1908 = vadd.f32 0.0, %v1907
      %v1909 = vpop.f32.mrb[0].mxu0
      %1910 = vmatprep.mubr.f32.mxu0 0.0
      %1911 = vmatmul.mubr.f32.gmra.mrb[0].mxu0 %v1802
      %v1912 = vpop.f32.mrb[0].mxu0
      %v1913 = vadd.f32 0.0, %v1912
      %v1914 = vpop.f32.mrb[0].mxu0
      %1915 = vmatprep.mubr.f32.mxu0 0.0
      %1916 = vmatmul.mubr.f32.gmra.mrb[0].mxu0 %v1804
      %v1917 = vpop.f32.mrb[0].mxu0
      %v1918 = vadd.f32 0.0, %v1917
      %v1919 = vpop.f32.mrb[0].mxu0
      %1920 = vmatprep.mubr.f32.mxu0 0.0
      %1921 = vmatmul.mubr.f32.gmra.mrb[0].mxu0 %v1806
      %v1922 = vpop.f32.mrb[0].mxu0
      %v1923 = vadd.f32 0.0, %v1922
      %v1924 = vpop.f32.mrb[0].mxu0
      %1925 = vmatprep.mubr.f32.mxu0 0.0
      %1926 = vmatmul.mubr.f32.gmra.mrb[0].mxu0 %v1808
      %v1927 = vpop.f32.mrb[0].mxu0
      %v1928 = vadd.f32 0.0, %v1927
      %v1929 = vpop.f32.mrb[0].mxu0
      %1930 = vmatprep.mubr.f32.mxu0 0.0
      %1931 = vmatmul.mubr.f32.gmra.mrb[0].mxu0 %v1810
      %v1932 = vpop.f32.mrb[0].mxu0
      %v1933 = vadd.f32 0.0, %v1932
      %v1934 = vpop.f32.mrb[0].mxu0
      %1935 = vmatprep.mubr.f32.mxu0 0.0
      %1936 = vmatmul.mubr.f32.gmra.mrb[0].mxu0 %v1812
      %v1937 = vpop.f32.mrb[0].mxu0
      %v1938 = vadd.f32 0.0, %v1937
      %v1939 = vpop.f32.mrb[0].mxu0
      %1940 = vmatprep.mubr.f32.mxu0 0.0
      %1941 = vmatmul.mubr.f32.gmra.mrb[0].mxu0 %v1814
      %v1942 = vpop.f32.mrb[0].mxu0
      %v1943 = vadd.f32 0.0, %v1942
      %v1944 = vpop.f32.mrb[0].mxu0
      %1945 = vmatprep.mubr.f32.mxu0 0.0
      %1946 = vmatmul.mubr.f32.gmra.mrb[0].mxu0 %v1816
      %v1947 = vpop.f32.mrb[0].mxu0
      %v1948 = vadd.f32 0.0, %v1947
      %v1949 = vpop.f32.mrb[0].mxu0
      %1950 = vmatprep.mubr.f32.mxu0 0.0
      %1951 = vmatmul.mubr.f32.gmra.mrb[0].mxu0 %v1818
      %v1952 = vpop.f32.mrb[0].mxu0
      %v1953 = vadd.f32 0.0, %v1952
      %v1954 = vpop.f32.mrb[0].mxu0
      %1955 = vmatprep.mubr.f32.mxu0 0.0
      %1956 = vmatmul.mubr.f32.gmra.mrb[0].mxu0 %v1820
      %v1957 = vpop.f32.mrb[0].mxu0
      %v1958 = vadd.f32 0.0, %v1957
      %v1959 = vpop.f32.mrb[0].mxu0
      %1960 = vmatprep.mubr.f32.mxu0 0.0
      %1961 = vmatmul.mubr.f32.gmra.mrb[0].mxu0 %v1822
      %v1962 = vpop.f32.mrb[0].mxu0
      %v1963 = vadd.f32 0.0, %v1962
      %v1964 = vpop.f32.mrb[0].mxu0
      %1965 = vmatprep.mubr.f32.mxu0 0.0
      %1966 = vmatmul.mubr.f32.gmra.mrb[0].mxu0 %v1824
      %v1967 = vpop.f32.mrb[0].mxu0
      %v1968 = vadd.f32 0.0, %v1967
      %v1969 = vpop.f32.mrb[0].mxu0
      %1970 = vdwg.mxu0
      %1971 = vmatprep.subr.mxu0 0.0
      %1972 = vmatpush1.msra.mxu0 %v1893
      %1973 = vmatprep.subr.mxu0 0.0
      %1974 = vmatpush1.msra.mxu0 %v1898
      %1975 = vmatprep.subr.mxu0 0.0
      %1976 = vmatpush1.msra.mxu0 %v1903
      %1977 = vmatprep.subr.mxu0 0.0
      %1978 = vmatpush1.msra.mxu0 %v1908
      %1979 = vmatprep.subr.mxu0 0.0
      %1980 = vmatpush1.msra.mxu0 %v1913
      %1981 = vmatprep.subr.mxu0 0.0
      %1982 = vmatpush1.msra.mxu0 %v1918
      %1983 = vmatprep.subr.mxu0 0.0
      %1984 = vmatpush1.msra.mxu0 %v1923
      %1985 = vmatprep.subr.mxu0 0.0
      %1986 = vmatpush1.msra.mxu0 %v1928
      %1987 = vmatprep.subr.mxu0 0.0
      %1988 = vmatpush1.msra.mxu0 %v1933
      %1989 = vmatprep.subr.mxu0 0.0
      %1990 = vmatpush1.msra.mxu0 %v1938
      %1991 = vmatprep.subr.mxu0 0.0
      %1992 = vmatpush1.msra.mxu0 %v1943
      %1993 = vmatprep.subr.mxu0 0.0
      %1994 = vmatpush1.msra.mxu0 %v1948
      %1995 = vmatprep.subr.mxu0 0.0
      %1996 = vmatpush1.msra.mxu0 %v1953
      %1997 = vmatprep.subr.mxu0 0.0
      %1998 = vmatpush1.msra.mxu0 %v1958
      %1999 = vmatprep.subr.mxu0 0.0
      %2000 = vmatpush1.msra.mxu0 %v1963
      %2001 = vmatprep.subr.mxu0 0.0
      %2002 = vmatpush1.msra.mxu0 %v1968
      %2003 = vmatprep.subr.mxu0 0.0
      %2004 = vmatpush1.msra.mxu0 0.0
      %2005 = vmatprep.subr.mxu0 0.0
      %2006 = vmatpush1.msra.mxu0 0.0
      %2007 = vmatprep.subr.mxu0 0.0
      %2008 = vmatpush1.msra.mxu0 0.0
      %2009 = vmatprep.subr.mxu0 0.0
      %2010 = vmatpush1.msra.mxu0 0.0
      %2011 = vmatprep.subr.mxu0 0.0
      %2012 = vmatpush1.msra.mxu0 0.0
      %2013 = vmatprep.subr.mxu0 0.0
      %2014 = vmatpush1.msra.mxu0 0.0
      %2015 = vmatprep.subr.mxu0 0.0
      %2016 = vmatpush1.msra.mxu0 0.0
      %2017 = vmatprep.subr.mxu0 0.0
      %2018 = vmatpush1.msra.mxu0 0.0
      %2019 = vmatprep.subr.mxu0 0.0
      %2020 = vmatpush1.msra.mxu0 0.0
      %2021 = vmatprep.subr.mxu0 0.0
      %2022 = vmatpush1.msra.mxu0 0.0
      %2023 = vmatprep.subr.mxu0 0.0
      %2024 = vmatpush1.msra.mxu0 0.0
      %2025 = vmatprep.subr.mxu0 0.0
      %2026 = vmatpush1.msra.mxu0 0.0
      %2027 = vmatprep.subr.mxu0 0.0
      %2028 = vmatpush1.msra.mxu0 0.0
      %2029 = vmatprep.subr.mxu0 0.0
      %2030 = vmatpush1.msra.mxu0 0.0
      %2031 = vmatprep.subr.mxu0 0.0
      %2032 = vmatpush1.msra.mxu0 0.0
      %2033 = vmatprep.subr.mxu0 0.0
      %2034 = vmatpush1.msra.mxu0 0.0
      %2035 = vmatprep.mubr.f32.mxu0 0.0
      %2036 = vmatmul.mubr.f32.gmra.mrb[0].mxu0 %v554
      %v2037 = vpop.f32.mrb[0].mxu0
      %v2038 = vadd.f32 0.0, %v2037
      %v2039 = vpop.f32.mrb[0].mxu0
      %2040 = vmatprep.mubr.f32.mxu0 0.0
      %2041 = vmatmul.mubr.f32.gmra.mrb[0].mxu0 %v555
      %v2042 = vpop.f32.mrb[0].mxu0
      %v2043 = vadd.f32 0.0, %v2042
      %v2044 = vpop.f32.mrb[0].mxu0
      %2045 = vmatprep.mubr.f32.mxu0 0.0
      %2046 = vmatmul.mubr.f32.gmra.mrb[0].mxu0 %v556
      %v2047 = vpop.f32.mrb[0].mxu0
      %v2048 = vadd.f32 0.0, %v2047
      %v2049 = vpop.f32.mrb[0].mxu0
      %2050 = vmatprep.mubr.f32.mxu0 0.0
      %2051 = vmatmul.mubr.f32.gmra.mrb[0].mxu0 %v557
      %v2052 = vpop.f32.mrb[0].mxu0
      %v2053 = vadd.f32 0.0, %v2052
      %v2054 = vpop.f32.mrb[0].mxu0
      %2055 = vmatprep.mubr.f32.mxu0 0.0
      %2056 = vmatmul.mubr.f32.gmra.mrb[0].mxu0 %v558
      %v2057 = vpop.f32.mrb[0].mxu0
      %v2058 = vadd.f32 0.0, %v2057
      %v2059 = vpop.f32.mrb[0].mxu0
      %2060 = vmatprep.mubr.f32.mxu0 0.0
      %2061 = vmatmul.mubr.f32.gmra.mrb[0].mxu0 %v559
      %v2062 = vpop.f32.mrb[0].mxu0
      %v2063 = vadd.f32 0.0, %v2062
      %v2064 = vpop.f32.mrb[0].mxu0
      %2065 = vmatprep.mubr.f32.mxu0 0.0
      %2066 = vmatmul.mubr.f32.gmra.mrb[0].mxu0 %v560
      %v2067 = vpop.f32.mrb[0].mxu0
      %v2068 = vadd.f32 0.0, %v2067
      %v2069 = vpop.f32.mrb[0].mxu0
      %2070 = vmatprep.mubr.f32.mxu0 0.0
      %2071 = vmatmul.mubr.f32.gmra.mrb[0].mxu0 %v561
      %v2072 = vpop.f32.mrb[0].mxu0
      %v2073 = vadd.f32 0.0, %v2072
      %v2074 = vpop.f32.mrb[0].mxu0
      %2075 = vmatprep.mubr.f32.mxu0 0.0
      %2076 = vmatmul.mubr.f32.gmra.mrb[0].mxu0 %v562
      %v2077 = vpop.f32.mrb[0].mxu0
      %v2078 = vadd.f32 0.0, %v2077
      %v2079 = vpop.f32.mrb[0].mxu0
      %2080 = vmatprep.mubr.f32.mxu0 0.0
      %2081 = vmatmul.mubr.f32.gmra.mrb[0].mxu0 %v563
      %v2082 = vpop.f32.mrb[0].mxu0
      %v2083 = vadd.f32 0.0, %v2082
      %v2084 = vpop.f32.mrb[0].mxu0
      %2085 = vmatprep.mubr.f32.mxu0 0.0
      %2086 = vmatmul.mubr.f32.gmra.mrb[0].mxu0 %v564
      %v2087 = vpop.f32.mrb[0].mxu0
      %v2088 = vadd.f32 0.0, %v2087
      %v2089 = vpop.f32.mrb[0].mxu0
      %2090 = vmatprep.mubr.f32.mxu0 0.0
      %2091 = vmatmul.mubr.f32.gmra.mrb[0].mxu0 %v565
      %v2092 = vpop.f32.mrb[0].mxu0
      %v2093 = vadd.f32 0.0, %v2092
      %v2094 = vpop.f32.mrb[0].mxu0
      %2095 = vmatprep.mubr.f32.mxu0 0.0
      %2096 = vmatmul.mubr.f32.gmra.mrb[0].mxu0 %v566
      %v2097 = vpop.f32.mrb[0].mxu0
      %v2098 = vadd.f32 0.0, %v2097
      %v2099 = vpop.f32.mrb[0].mxu0
      %2100 = vmatprep.mubr.f32.mxu0 0.0
      %2101 = vmatmul.mubr.f32.gmra.mrb[0].mxu0 %v567
      %v2102 = vpop.f32.mrb[0].mxu0
      %v2103 = vadd.f32 0.0, %v2102
      %v2104 = vpop.f32.mrb[0].mxu0
      %2105 = vmatprep.mubr.f32.mxu0 0.0
      %2106 = vmatmul.mubr.f32.gmra.mrb[0].mxu0 %v568
      %v2107 = vpop.f32.mrb[0].mxu0
      %v2108 = vadd.f32 0.0, %v2107
      %v2109 = vpop.f32.mrb[0].mxu0
      %2110 = vmatprep.mubr.f32.mxu0 0.0
      %2111 = vmatmul.mubr.f32.gmra.mrb[0].mxu0 %v569
      %v2112 = vpop.f32.mrb[0].mxu0
      %v2113 = vadd.f32 0.0, %v2112
      %v2114 = vpop.f32.mrb[0].mxu0
      %2115 = vdwg.mxu0
      %2116 = vmatprep.subr.mxu0 0.0
      %2117 = vmatpush1.msra.mxu0 %v578
      %2118 = vmatprep.subr.mxu0 0.0
      %2119 = vmatpush1.msra.mxu0 %v579
      %2120 = vmatprep.subr.mxu0 0.0
      %2121 = vmatpush1.msra.mxu0 %v580
      %2122 = vmatprep.subr.mxu0 0.0
      %2123 = vmatpush1.msra.mxu0 %v581
      %2124 = vmatprep.subr.mxu0 0.0
      %2125 = vmatpush1.msra.mxu0 0.0
      %2126 = vmatprep.subr.mxu0 0.0
      %2127 = vmatpush1.msra.mxu0 0.0
      %2128 = vmatprep.subr.mxu0 0.0
      %2129 = vmatpush1.msra.mxu0 0.0
      %2130 = vmatprep.subr.mxu0 0.0
      %2131 = vmatpush1.msra.mxu0 0.0
      %2132 = vmatprep.subr.mxu0 0.0
      %2133 = vmatpush1.msra.mxu0 0.0
      %2134 = vmatprep.subr.mxu0 0.0
      %2135 = vmatpush1.msra.mxu0 0.0
      %2136 = vmatprep.subr.mxu0 0.0
      %2137 = vmatpush1.msra.mxu0 0.0
      %2138 = vmatprep.subr.mxu0 0.0
      %2139 = vmatpush1.msra.mxu0 0.0
      %2140 = vmatprep.subr.mxu0 0.0
      %2141 = vmatpush1.msra.mxu0 0.0
      %2142 = vmatprep.subr.mxu0 0.0
      %2143 = vmatpush1.msra.mxu0 0.0
      %2144 = vmatprep.subr.mxu0 0.0
      %2145 = vmatpush1.msra.mxu0 0.0
      %2146 = vmatprep.subr.mxu0 0.0
      %2147 = vmatpush1.msra.mxu0 0.0
      %2148 = vmatprep.subr.mxu0 0.0
      %2149 = vmatpush1.msra.mxu0 0.0
      %2150 = vmatprep.subr.mxu0 0.0
      %2151 = vmatpush1.msra.mxu0 0.0
      %2152 = vmatprep.subr.mxu0 0.0
      %2153 = vmatpush1.msra.mxu0 0.0
      %2154 = vmatprep.subr.mxu0 0.0
      %2155 = vmatpush1.msra.mxu0 0.0
      %2156 = vmatprep.subr.mxu0 0.0
      %2157 = vmatpush1.msra.mxu0 0.0
      %2158 = vmatprep.subr.mxu0 0.0
      %2159 = vmatpush1.msra.mxu0 0.0
      %2160 = vmatprep.subr.mxu0 0.0
      %2161 = vmatpush1.msra.mxu0 0.0
      %2162 = vmatprep.subr.mxu0 0.0
      %2163 = vmatpush1.msra.mxu0 0.0
      %2164 = vmatprep.subr.mxu0 0.0
      %2165 = vmatpush1.msra.mxu0 0.0
      %2166 = vmatprep.subr.mxu0 0.0
      %2167 = vmatpush1.msra.mxu0 0.0
      %2168 = vmatprep.subr.mxu0 0.0
      %2169 = vmatpush1.msra.mxu0 0.0
      %2170 = vmatprep.subr.mxu0 0.0
      %2171 = vmatpush1.msra.mxu0 0.0
      %2172 = vmatprep.subr.mxu0 0.0
      %2173 = vmatpush1.msra.mxu0 0.0
      %2174 = vmatprep.subr.mxu0 0.0
      %2175 = vmatpush1.msra.mxu0 0.0
      %2176 = vmatprep.subr.mxu0 0.0
      %2177 = vmatpush1.msra.mxu0 0.0
      %2178 = vmatprep.subr.mxu0 0.0
      %2179 = vmatpush1.msra.mxu0 0.0
      %2180 = vmatprep.mubr.f32.mxu0 0.0
      %2181 = vmatmul.mubr.f32.gmra.mrb[0].mxu0 %v1794
      %v2182 = vpop.f32.mrb[0].mxu0
      %v2183 = vadd.f32 0.0, %v2182
      %v2184 = vpop.f32.mrb[0].mxu0
      %2185 = vmatprep.mubr.f32.mxu0 0.0
      %2186 = vmatmul.mubr.f32.gmra.mrb[0].mxu0 %v1796
      %v2187 = vpop.f32.mrb[0].mxu0
      %v2188 = vadd.f32 0.0, %v2187
      %v2189 = vpop.f32.mrb[0].mxu0
      %2190 = vmatprep.mubr.f32.mxu0 0.0
      %2191 = vmatmul.mubr.f32.gmra.mrb[0].mxu0 %v1798
      %v2192 = vpop.f32.mrb[0].mxu0
      %v2193 = vadd.f32 0.0, %v2192
      %v2194 = vpop.f32.mrb[0].mxu0
      %2195 = vmatprep.mubr.f32.mxu0 0.0
      %2196 = vmatmul.mubr.f32.gmra.mrb[0].mxu0 %v1800
      %v2197 = vpop.f32.mrb[0].mxu0
      %v2198 = vadd.f32 0.0, %v2197
      %v2199 = vpop.f32.mrb[0].mxu0
      %2200 = vmatprep.mubr.f32.mxu0 0.0
      %2201 = vmatmul.mubr.f32.gmra.mrb[0].mxu0 %v1802
      %v2202 = vpop.f32.mrb[0].mxu0
      %v2203 = vadd.f32 0.0, %v2202
      %v2204 = vpop.f32.mrb[0].mxu0
      %2205 = vmatprep.mubr.f32.mxu0 0.0
      %2206 = vmatmul.mubr.f32.gmra.mrb[0].mxu0 %v1804
      %v2207 = vpop.f32.mrb[0].mxu0
      %v2208 = vadd.f32 0.0, %v2207
      %v2209 = vpop.f32.mrb[0].mxu0
      %2210 = vmatprep.mubr.f32.mxu0 0.0
      %2211 = vmatmul.mubr.f32.gmra.mrb[0].mxu0 %v1806
      %v2212 = vpop.f32.mrb[0].mxu0
      %v2213 = vadd.f32 0.0, %v2212
      %v2214 = vpop.f32.mrb[0].mxu0
      %2215 = vmatprep.mubr.f32.mxu0 0.0
      %2216 = vmatmul.mubr.f32.gmra.mrb[0].mxu0 %v1808
      %v2217 = vpop.f32.mrb[0].mxu0
      %v2218 = vadd.f32 0.0, %v2217
      %v2219 = vpop.f32.mrb[0].mxu0
      %2220 = vmatprep.mubr.f32.mxu0 0.0
      %2221 = vmatmul.mubr.f32.gmra.mrb[0].mxu0 %v1810
      %v2222 = vpop.f32.mrb[0].mxu0
      %v2223 = vadd.f32 0.0, %v2222
      %v2224 = vpop.f32.mrb[0].mxu0
      %2225 = vmatprep.mubr.f32.mxu0 0.0
      %2226 = vmatmul.mubr.f32.gmra.mrb[0].mxu0 %v1812
      %v2227 = vpop.f32.mrb[0].mxu0
      %v2228 = vadd.f32 0.0, %v2227
      %v2229 = vpop.f32.mrb[0].mxu0
      %2230 = vmatprep.mubr.f32.mxu0 0.0
      %2231 = vmatmul.mubr.f32.gmra.mrb[0].mxu0 %v1814
      %v2232 = vpop.f32.mrb[0].mxu0
      %v2233 = vadd.f32 0.0, %v2232
      %v2234 = vpop.f32.mrb[0].mxu0
      %2235 = vmatprep.mubr.f32.mxu0 0.0
      %2236 = vmatmul.mubr.f32.gmra.mrb[0].mxu0 %v1816
      %v2237 = vpop.f32.mrb[0].mxu0
      %v2238 = vadd.f32 0.0, %v2237
      %v2239 = vpop.f32.mrb[0].mxu0
      %2240 = vmatprep.mubr.f32.mxu0 0.0
      %2241 = vmatmul.mubr.f32.gmra.mrb[0].mxu0 %v1818
      %v2242 = vpop.f32.mrb[0].mxu0
      %v2243 = vadd.f32 0.0, %v2242
      %v2244 = vpop.f32.mrb[0].mxu0
      %2245 = vmatprep.mubr.f32.mxu0 0.0
      %2246 = vmatmul.mubr.f32.gmra.mrb[0].mxu0 %v1820
      %v2247 = vpop.f32.mrb[0].mxu0
      %v2248 = vadd.f32 0.0, %v2247
      %v2249 = vpop.f32.mrb[0].mxu0
      %2250 = vmatprep.mubr.f32.mxu0 0.0
      %2251 = vmatmul.mubr.f32.gmra.mrb[0].mxu0 %v1822
      %v2252 = vpop.f32.mrb[0].mxu0
      %v2253 = vadd.f32 0.0, %v2252
      %v2254 = vpop.f32.mrb[0].mxu0
      %2255 = vmatprep.mubr.f32.mxu0 0.0
      %2256 = vmatmul.mubr.f32.gmra.mrb[0].mxu0 %v1824
      %v2257 = vpop.f32.mrb[0].mxu0
      %v2258 = vadd.f32 0.0, %v2257
      %v2259 = vpop.f32.mrb[0].mxu0
      %2260 = vdwg.mxu0
      %v2262 = vsel %vm589, %v2038, 0
      %v2265 = vsel %vm589, %v2043, 0
      %v2268 = vsel %vm589, %v2048, 0
      %v2271 = vsel %vm589, %v2053, 0
      %v2274 = vsel %vm589, %v2058, 0
      %v2277 = vsel %vm589, %v2063, 0
      %v2280 = vsel %vm589, %v2068, 0
      %v2283 = vsel %vm589, %v2073, 0
      %v2286 = vsel %vm589, %v2078, 0
      %v2289 = vsel %vm589, %v2083, 0
      %v2292 = vsel %vm589, %v2088, 0
      %v2295 = vsel %vm589, %v2093, 0
      %v2298 = vsel %vm589, %v2098, 0
      %v2301 = vsel %vm589, %v2103, 0
      %v2304 = vsel %vm589, %v2108, 0
      %v2307 = vsel %vm589, %v2113, 0
      %2309 = vmatprep.subr.mxu0 0.0
      %2310 = vmatpush1.msra.mxu0 %v574
      %2311 = vmatprep.subr.mxu0 0.0
      %2312 = vmatpush1.msra.mxu0 %v575
      %2313 = vmatprep.subr.mxu0 0.0
      %2314 = vmatpush1.msra.mxu0 %v576
      %2315 = vmatprep.subr.mxu0 0.0
      %2316 = vmatpush1.msra.mxu0 %v577
      %2317 = vmatprep.subr.mxu0 0.0
      %2318 = vmatpush1.msra.mxu0 0.0
      %2319 = vmatprep.subr.mxu0 0.0
      %2320 = vmatpush1.msra.mxu0 0.0
      %2321 = vmatprep.subr.mxu0 0.0
      %2322 = vmatpush1.msra.mxu0 0.0
      %2323 = vmatprep.subr.mxu0 0.0
      %2324 = vmatpush1.msra.mxu0 0.0
      %2325 = vmatprep.subr.mxu0 0.0
      %2326 = vmatpush1.msra.mxu0 0.0
      %2327 = vmatprep.subr.mxu0 0.0
      %2328 = vmatpush1.msra.mxu0 0.0
      %2329 = vmatprep.subr.mxu0 0.0
      %2330 = vmatpush1.msra.mxu0 0.0
      %2331 = vmatprep.subr.mxu0 0.0
      %2332 = vmatpush1.msra.mxu0 0.0
      %2333 = vmatprep.subr.mxu0 0.0
      %2334 = vmatpush1.msra.mxu0 0.0
      %2335 = vmatprep.subr.mxu0 0.0
      %2336 = vmatpush1.msra.mxu0 0.0
      %2337 = vmatprep.subr.mxu0 0.0
      %2338 = vmatpush1.msra.mxu0 0.0
      %2339 = vmatprep.subr.mxu0 0.0
      %2340 = vmatpush1.msra.mxu0 0.0
      %2341 = vmatprep.subr.mxu0 0.0
      %2342 = vmatpush1.msra.mxu0 0.0
      %2343 = vmatprep.subr.mxu0 0.0
      %2344 = vmatpush1.msra.mxu0 0.0
      %2345 = vmatprep.subr.mxu0 0.0
      %2346 = vmatpush1.msra.mxu0 0.0
      %2347 = vmatprep.subr.mxu0 0.0
      %2348 = vmatpush1.msra.mxu0 0.0
      %2349 = vmatprep.subr.mxu0 0.0
      %2350 = vmatpush1.msra.mxu0 0.0
      %2351 = vmatprep.subr.mxu0 0.0
      %2352 = vmatpush1.msra.mxu0 0.0
      %2353 = vmatprep.subr.mxu0 0.0
      %2354 = vmatpush1.msra.mxu0 0.0
      %2355 = vmatprep.subr.mxu0 0.0
      %2356 = vmatpush1.msra.mxu0 0.0
      %2357 = vmatprep.subr.mxu0 0.0
      %2358 = vmatpush1.msra.mxu0 0.0
      %2359 = vmatprep.subr.mxu0 0.0
      %2360 = vmatpush1.msra.mxu0 0.0
      %2361 = vmatprep.subr.mxu0 0.0
      %2362 = vmatpush1.msra.mxu0 0.0
      %2363 = vmatprep.subr.mxu0 0.0
      %2364 = vmatpush1.msra.mxu0 0.0
      %2365 = vmatprep.subr.mxu0 0.0
      %2366 = vmatpush1.msra.mxu0 0.0
      %2367 = vmatprep.subr.mxu0 0.0
      %2368 = vmatpush1.msra.mxu0 0.0
      %2369 = vmatprep.subr.mxu0 0.0
      %2370 = vmatpush1.msra.mxu0 0.0
      %2371 = vmatprep.subr.mxu0 0.0
      %2372 = vmatpush1.msra.mxu0 0.0
      %2373 = vmatprep.mubr.f32.mxu0 0.0
      %2374 = vmatmul.mubr.f32.gmra.mrb[0].mxu0 %v2262
      %v2375 = vpop.f32.mrb[0].mxu0
      %v2376 = vadd.f32 %v2183, %v2375
      %v2377 = vpop.f32.mrb[0].mxu0
      %2378 = vmatprep.mubr.f32.mxu0 0.0
      %2379 = vmatmul.mubr.f32.gmra.mrb[0].mxu0 %v2265
      %v2380 = vpop.f32.mrb[0].mxu0
      %v2381 = vadd.f32 %v2188, %v2380
      %v2382 = vpop.f32.mrb[0].mxu0
      %2383 = vmatprep.mubr.f32.mxu0 0.0
      %2384 = vmatmul.mubr.f32.gmra.mrb[0].mxu0 %v2268
      %v2385 = vpop.f32.mrb[0].mxu0
      %v2386 = vadd.f32 %v2193, %v2385
      %v2387 = vpop.f32.mrb[0].mxu0
      %2388 = vmatprep.mubr.f32.mxu0 0.0
      %2389 = vmatmul.mubr.f32.gmra.mrb[0].mxu0 %v2271
      %v2390 = vpop.f32.mrb[0].mxu0
      %v2391 = vadd.f32 %v2198, %v2390
      %v2392 = vpop.f32.mrb[0].mxu0
      %2393 = vmatprep.mubr.f32.mxu0 0.0
      %2394 = vmatmul.mubr.f32.gmra.mrb[0].mxu0 %v2274
      %v2395 = vpop.f32.mrb[0].mxu0
      %v2396 = vadd.f32 %v2203, %v2395
      %v2397 = vpop.f32.mrb[0].mxu0
      %2398 = vmatprep.mubr.f32.mxu0 0.0
      %2399 = vmatmul.mubr.f32.gmra.mrb[0].mxu0 %v2277
      %v2400 = vpop.f32.mrb[0].mxu0
      %v2401 = vadd.f32 %v2208, %v2400
      %v2402 = vpop.f32.mrb[0].mxu0
      %2403 = vmatprep.mubr.f32.mxu0 0.0
      %2404 = vmatmul.mubr.f32.gmra.mrb[0].mxu0 %v2280
      %v2405 = vpop.f32.mrb[0].mxu0
      %v2406 = vadd.f32 %v2213, %v2405
      %v2407 = vpop.f32.mrb[0].mxu0
      %2408 = vmatprep.mubr.f32.mxu0 0.0
      %2409 = vmatmul.mubr.f32.gmra.mrb[0].mxu0 %v2283
      %v2410 = vpop.f32.mrb[0].mxu0
      %v2411 = vadd.f32 %v2218, %v2410
      %v2412 = vpop.f32.mrb[0].mxu0
      %2413 = vmatprep.mubr.f32.mxu0 0.0
      %2414 = vmatmul.mubr.f32.gmra.mrb[0].mxu0 %v2286
      %v2415 = vpop.f32.mrb[0].mxu0
      %v2416 = vadd.f32 %v2223, %v2415
      %v2417 = vpop.f32.mrb[0].mxu0
      %2418 = vmatprep.mubr.f32.mxu0 0.0
      %2419 = vmatmul.mubr.f32.gmra.mrb[0].mxu0 %v2289
      %v2420 = vpop.f32.mrb[0].mxu0
      %v2421 = vadd.f32 %v2228, %v2420
      %v2422 = vpop.f32.mrb[0].mxu0
      %2423 = vmatprep.mubr.f32.mxu0 0.0
      %2424 = vmatmul.mubr.f32.gmra.mrb[0].mxu0 %v2292
      %v2425 = vpop.f32.mrb[0].mxu0
      %v2426 = vadd.f32 %v2233, %v2425
      %v2427 = vpop.f32.mrb[0].mxu0
      %2428 = vmatprep.mubr.f32.mxu0 0.0
      %2429 = vmatmul.mubr.f32.gmra.mrb[0].mxu0 %v2295
      %v2430 = vpop.f32.mrb[0].mxu0
      %v2431 = vadd.f32 %v2238, %v2430
      %v2432 = vpop.f32.mrb[0].mxu0
      %2433 = vmatprep.mubr.f32.mxu0 0.0
      %2434 = vmatmul.mubr.f32.gmra.mrb[0].mxu0 %v2298
      %v2435 = vpop.f32.mrb[0].mxu0
      %v2436 = vadd.f32 %v2243, %v2435
      %v2437 = vpop.f32.mrb[0].mxu0
      %2438 = vmatprep.mubr.f32.mxu0 0.0
      %2439 = vmatmul.mubr.f32.gmra.mrb[0].mxu0 %v2301
      %v2440 = vpop.f32.mrb[0].mxu0
      %v2441 = vadd.f32 %v2248, %v2440
      %v2442 = vpop.f32.mrb[0].mxu0
      %2443 = vmatprep.mubr.f32.mxu0 0.0
      %2444 = vmatmul.mubr.f32.gmra.mrb[0].mxu0 %v2304
      %v2445 = vpop.f32.mrb[0].mxu0
      %v2446 = vadd.f32 %v2253, %v2445
      %v2447 = vpop.f32.mrb[0].mxu0
      %2448 = vmatprep.mubr.f32.mxu0 0.0
      %2449 = vmatmul.mubr.f32.gmra.mrb[0].mxu0 %v2307
      %v2450 = vpop.f32.mrb[0].mxu0
      %v2451 = vadd.f32 %v2258, %v2450
      %v2452 = vpop.f32.mrb[0].mxu0
      %2453 = vdwg.mxu0
      %v2454 = vadd.f32 %v2376, %v587
      %v2455 = vadd.f32 %v2381, %v587
      %v2456 = vadd.f32 %v2386, %v587
      %v2457 = vadd.f32 %v2391, %v587
      %v2458 = vadd.f32 %v2396, %v587
      %v2459 = vadd.f32 %v2401, %v587
      %v2460 = vadd.f32 %v2406, %v587
      %v2461 = vadd.f32 %v2411, %v587
      %v2462 = vadd.f32 %v2416, %v587
      %v2463 = vadd.f32 %v2421, %v587
      %v2464 = vadd.f32 %v2426, %v587
      %v2465 = vadd.f32 %v2431, %v587
      %v2466 = vadd.f32 %v2436, %v587
      %v2467 = vadd.f32 %v2441, %v587
      %v2468 = vadd.f32 %v2446, %v587
      %v2469 = vadd.f32 %v2451, %v587
      %v2470 = vxor.u32 %v2454, 2147483648
      %v2471 = vxor.u32 %v2455, 2147483648
      %v2472 = vxor.u32 %v2456, 2147483648
      %v2473 = vxor.u32 %v2457, 2147483648
      %v2474 = vxor.u32 %v2458, 2147483648
      %v2475 = vxor.u32 %v2459, 2147483648
      %v2476 = vxor.u32 %v2460, 2147483648
      %v2477 = vxor.u32 %v2461, 2147483648
      %v2478 = vxor.u32 %v2462, 2147483648
      %v2479 = vxor.u32 %v2463, 2147483648
      %v2480 = vxor.u32 %v2464, 2147483648
      %v2481 = vxor.u32 %v2465, 2147483648
      %v2482 = vxor.u32 %v2466, 2147483648
      %v2483 = vxor.u32 %v2467, 2147483648
      %v2484 = vxor.u32 %v2468, 2147483648
      %v2485 = vxor.u32 %v2469, 2147483648
      %v2486 = vmul.f32 %v2470, 1.442695
      %v2487 = vpow.pop %v2486
      %v2488 = vmul.f32 %v2471, 1.442695
      %v2489 = vpow.pop %v2488
      %v2490 = vmul.f32 %v2472, 1.442695
      %v2491 = vpow.pop %v2490
      %v2492 = vmul.f32 %v2473, 1.442695
      %v2493 = vpow.pop %v2492
      %v2494 = vmul.f32 %v2474, 1.442695
      %v2495 = vpow.pop %v2494
      %v2496 = vmul.f32 %v2475, 1.442695
      %v2497 = vpow.pop %v2496
      %v2498 = vmul.f32 %v2476, 1.442695
      %v2499 = vpow.pop %v2498
      %v2500 = vmul.f32 %v2477, 1.442695
      %v2501 = vpow.pop %v2500
      %v2502 = vmul.f32 %v2478, 1.442695
      %v2503 = vpow.pop %v2502
      %v2504 = vmul.f32 %v2479, 1.442695
      %v2505 = vpow.pop %v2504
      %v2506 = vmul.f32 %v2480, 1.442695
      %v2507 = vpow.pop %v2506
      %v2508 = vmul.f32 %v2481, 1.442695
      %v2509 = vpow.pop %v2508
      %v2510 = vmul.f32 %v2482, 1.442695
      %v2511 = vpow.pop %v2510
      %v2512 = vmul.f32 %v2483, 1.442695
      %v2513 = vpow.pop %v2512
      %v2514 = vmul.f32 %v2484, 1.442695
      %v2515 = vpow.pop %v2514
      %v2516 = vmul.f32 %v2485, 1.442695
      %v2517 = vpow.pop %v2516
      %v2518 = vadd.f32 %v2487, 1.0
      %v2519 = vadd.f32 %v2489, 1.0
      %v2520 = vadd.f32 %v2491, 1.0
      %v2521 = vadd.f32 %v2493, 1.0
      %v2522 = vadd.f32 %v2495, 1.0
      %v2523 = vadd.f32 %v2497, 1.0
      %v2524 = vadd.f32 %v2499, 1.0
      %v2525 = vadd.f32 %v2501, 1.0
      %v2526 = vadd.f32 %v2503, 1.0
      %v2527 = vadd.f32 %v2505, 1.0
      %v2528 = vadd.f32 %v2507, 1.0
      %v2529 = vadd.f32 %v2509, 1.0
      %v2530 = vadd.f32 %v2511, 1.0
      %v2531 = vadd.f32 %v2513, 1.0
      %v2532 = vadd.f32 %v2515, 1.0
      %v2533 = vadd.f32 %v2517, 1.0
      %v2534 = vrcp.pop %v2518
      %v2535 = vmul.f32 1.0, %v2534
      %v2536 = vrcp.pop %v2519
      %v2537 = vmul.f32 1.0, %v2536
      %v2538 = vrcp.pop %v2520
      %v2539 = vmul.f32 1.0, %v2538
      %v2540 = vrcp.pop %v2521
      %v2541 = vmul.f32 1.0, %v2540
      %v2542 = vrcp.pop %v2522
      %v2543 = vmul.f32 1.0, %v2542
      %v2544 = vrcp.pop %v2523
      %v2545 = vmul.f32 1.0, %v2544
      %v2546 = vrcp.pop %v2524
      %v2547 = vmul.f32 1.0, %v2546
      %v2548 = vrcp.pop %v2525
      %v2549 = vmul.f32 1.0, %v2548
      %v2550 = vrcp.pop %v2526
      %v2551 = vmul.f32 1.0, %v2550
      %v2552 = vrcp.pop %v2527
      %v2553 = vmul.f32 1.0, %v2552
      %v2554 = vrcp.pop %v2528
      %v2555 = vmul.f32 1.0, %v2554
      %v2556 = vrcp.pop %v2529
      %v2557 = vmul.f32 1.0, %v2556
      %v2558 = vrcp.pop %v2530
      %v2559 = vmul.f32 1.0, %v2558
      %v2560 = vrcp.pop %v2531
      %v2561 = vmul.f32 1.0, %v2560
      %v2562 = vrcp.pop %v2532
      %v2563 = vmul.f32 1.0, %v2562
      %v2564 = vrcp.pop %v2533
      %v2565 = vmul.f32 1.0, %v2564
      %2582 = vrot.lane.b32.xlu0 %v2454, 32
      %v2583 = vpop.permute.xlu0 %2582
      %2584 = vrot.lane.b32.xlu0 %v2455, 32
      %v2585 = vpop.permute.xlu0 %2584
      %2586 = vrot.lane.b32.xlu0 %v2456, 32
      %v2587 = vpop.permute.xlu0 %2586
      %2588 = vrot.lane.b32.xlu0 %v2457, 32
      %v2589 = vpop.permute.xlu0 %2588
      %2590 = vrot.lane.b32.xlu0 %v2458, 32
      %v2591 = vpop.permute.xlu0 %2590
      %2592 = vrot.lane.b32.xlu0 %v2459, 32
      %v2593 = vpop.permute.xlu0 %2592
      %2594 = vrot.lane.b32.xlu0 %v2460, 32
      %v2595 = vpop.permute.xlu0 %2594
      %2596 = vrot.lane.b32.xlu0 %v2461, 32
      %v2597 = vpop.permute.xlu0 %2596
      %2598 = vrot.lane.b32.xlu0 %v2462, 32
      %v2599 = vpop.permute.xlu0 %2598
      %2600 = vrot.lane.b32.xlu0 %v2463, 32
      %v2601 = vpop.permute.xlu0 %2600
      %2602 = vrot.lane.b32.xlu0 %v2464, 32
      %v2603 = vpop.permute.xlu0 %2602
      %2604 = vrot.lane.b32.xlu0 %v2465, 32
      %v2605 = vpop.permute.xlu0 %2604
      %2606 = vrot.lane.b32.xlu0 %v2466, 32
      %v2607 = vpop.permute.xlu0 %2606
      %2608 = vrot.lane.b32.xlu0 %v2467, 32
      %v2609 = vpop.permute.xlu0 %2608
      %2610 = vrot.lane.b32.xlu0 %v2468, 32
      %v2611 = vpop.permute.xlu0 %2610
      %2612 = vrot.lane.b32.xlu0 %v2469, 32
      %v2613 = vpop.permute.xlu0 %2612
      %v2630 = vmul.f32 %v2535, %v2583
      %v2631 = vmul.f32 %v2537, %v2585
      %v2632 = vmul.f32 %v2539, %v2587
      %v2633 = vmul.f32 %v2541, %v2589
      %v2634 = vmul.f32 %v2543, %v2591
      %v2635 = vmul.f32 %v2545, %v2593
      %v2636 = vmul.f32 %v2547, %v2595
      %v2637 = vmul.f32 %v2549, %v2597
      %v2638 = vmul.f32 %v2551, %v2599
      %v2639 = vmul.f32 %v2553, %v2601
      %v2640 = vmul.f32 %v2555, %v2603
      %v2641 = vmul.f32 %v2557, %v2605
      %v2642 = vmul.f32 %v2559, %v2607
      %v2643 = vmul.f32 %v2561, %v2609
      %v2644 = vmul.f32 %v2563, %v2611
      %v2645 = vmul.f32 %v2565, %v2613
      %2662 = vrot.lane.b32.xlu0 %v2630, 64
      %v2663 = vpop.permute.xlu0 %2662
      %2664 = vrot.lane.b32.xlu0 %v2631, 64
      %v2665 = vpop.permute.xlu0 %2664
      %2666 = vrot.lane.b32.xlu0 %v2632, 64
      %v2667 = vpop.permute.xlu0 %2666
      %2668 = vrot.lane.b32.xlu0 %v2633, 64
      %v2669 = vpop.permute.xlu0 %2668
      %2670 = vrot.lane.b32.xlu0 %v2634, 64
      %v2671 = vpop.permute.xlu0 %2670
      %2672 = vrot.lane.b32.xlu0 %v2635, 64
      %v2673 = vpop.permute.xlu0 %2672
      %2674 = vrot.lane.b32.xlu0 %v2636, 64
      %v2675 = vpop.permute.xlu0 %2674
      %2676 = vrot.lane.b32.xlu0 %v2637, 64
      %v2677 = vpop.permute.xlu0 %2676
      %2678 = vrot.lane.b32.xlu0 %v2638, 64
      %v2679 = vpop.permute.xlu0 %2678
      %2680 = vrot.lane.b32.xlu0 %v2639, 64
      %v2681 = vpop.permute.xlu0 %2680
      %2682 = vrot.lane.b32.xlu0 %v2640, 64
      %v2683 = vpop.permute.xlu0 %2682
      %2684 = vrot.lane.b32.xlu0 %v2641, 64
      %v2685 = vpop.permute.xlu0 %2684
      %2686 = vrot.lane.b32.xlu0 %v2642, 64
      %v2687 = vpop.permute.xlu0 %2686
      %2688 = vrot.lane.b32.xlu0 %v2643, 64
      %v2689 = vpop.permute.xlu0 %2688
      %2690 = vrot.lane.b32.xlu0 %v2644, 64
      %v2691 = vpop.permute.xlu0 %2690
      %2692 = vrot.lane.b32.xlu0 %v2645, 64
      %v2693 = vpop.permute.xlu0 %2692
      %v2710 = vadd.f32 %v2454, %v2663
      %v2711 = vadd.f32 %v2455, %v2665
      %v2712 = vadd.f32 %v2456, %v2667
      %v2713 = vadd.f32 %v2457, %v2669
      %v2714 = vadd.f32 %v2458, %v2671
      %v2715 = vadd.f32 %v2459, %v2673
      %v2716 = vadd.f32 %v2460, %v2675
      %v2717 = vadd.f32 %v2461, %v2677
      %v2718 = vadd.f32 %v2462, %v2679
      %v2719 = vadd.f32 %v2463, %v2681
      %v2720 = vadd.f32 %v2464, %v2683
      %v2721 = vadd.f32 %v2465, %v2685
      %v2722 = vadd.f32 %v2466, %v2687
      %v2723 = vadd.f32 %v2467, %v2689
      %v2724 = vadd.f32 %v2468, %v2691
      %v2725 = vadd.f32 %v2469, %v2693
      %v2726 = vtanh.pop %v2710
      %v2727 = vtanh.pop %v2711
      %v2728 = vtanh.pop %v2712
      %v2729 = vtanh.pop %v2713
      %v2730 = vtanh.pop %v2714
      %v2731 = vtanh.pop %v2715
      %v2732 = vtanh.pop %v2716
      %v2733 = vtanh.pop %v2717
      %v2734 = vtanh.pop %v2718
      %v2735 = vtanh.pop %v2719
      %v2736 = vtanh.pop %v2720
      %v2737 = vtanh.pop %v2721
      %v2738 = vtanh.pop %v2722
      %v2739 = vtanh.pop %v2723
      %v2740 = vtanh.pop %v2724
      %v2741 = vtanh.pop %v2725
      %v2742 = vsub.f32 1.0, %v2535
      %v2743 = vsub.f32 1.0, %v2537
      %v2744 = vsub.f32 1.0, %v2539
      %v2745 = vsub.f32 1.0, %v2541
      %v2746 = vsub.f32 1.0, %v2543
      %v2747 = vsub.f32 1.0, %v2545
      %v2748 = vsub.f32 1.0, %v2547
      %v2749 = vsub.f32 1.0, %v2549
      %v2750 = vsub.f32 1.0, %v2551
      %v2751 = vsub.f32 1.0, %v2553
      %v2752 = vsub.f32 1.0, %v2555
      %v2753 = vsub.f32 1.0, %v2557
      %v2754 = vsub.f32 1.0, %v2559
      %v2755 = vsub.f32 1.0, %v2561
      %v2756 = vsub.f32 1.0, %v2563
      %v2757 = vsub.f32 1.0, %v2565
      %2774 = vrot.lane.b32.xlu0 %v2726, 96
      %v2775 = vpop.permute.xlu0 %2774
      %2776 = vrot.lane.b32.xlu0 %v2727, 96
      %v2777 = vpop.permute.xlu0 %2776
      %2778 = vrot.lane.b32.xlu0 %v2728, 96
      %v2779 = vpop.permute.xlu0 %2778
      %2780 = vrot.lane.b32.xlu0 %v2729, 96
      %v2781 = vpop.permute.xlu0 %2780
      %2782 = vrot.lane.b32.xlu0 %v2730, 96
      %v2783 = vpop.permute.xlu0 %2782
      %2784 = vrot.lane.b32.xlu0 %v2731, 96
      %v2785 = vpop.permute.xlu0 %2784
      %2786 = vrot.lane.b32.xlu0 %v2732, 96
      %v2787 = vpop.permute.xlu0 %2786
      %2788 = vrot.lane.b32.xlu0 %v2733, 96
      %v2789 = vpop.permute.xlu0 %2788
      %2790 = vrot.lane.b32.xlu0 %v2734, 96
      %v2791 = vpop.permute.xlu0 %2790
      %2792 = vrot.lane.b32.xlu0 %v2735, 96
      %v2793 = vpop.permute.xlu0 %2792
      %2794 = vrot.lane.b32.xlu0 %v2736, 96
      %v2795 = vpop.permute.xlu0 %2794
      %2796 = vrot.lane.b32.xlu0 %v2737, 96
      %v2797 = vpop.permute.xlu0 %2796
      %2798 = vrot.lane.b32.xlu0 %v2738, 96
      %v2799 = vpop.permute.xlu0 %2798
      %2800 = vrot.lane.b32.xlu0 %v2739, 96
      %v2801 = vpop.permute.xlu0 %2800
      %2802 = vrot.lane.b32.xlu0 %v2740, 96
      %v2803 = vpop.permute.xlu0 %2802
      %2804 = vrot.lane.b32.xlu0 %v2741, 96
      %v2805 = vpop.permute.xlu0 %2804
      %v2822 = vmul.f32 %v2742, %v2775
      %v2823 = vmul.f32 %v2743, %v2777
      %v2824 = vmul.f32 %v2744, %v2779
      %v2825 = vmul.f32 %v2745, %v2781
      %v2826 = vmul.f32 %v2746, %v2783
      %v2827 = vmul.f32 %v2747, %v2785
      %v2828 = vmul.f32 %v2748, %v2787
      %v2829 = vmul.f32 %v2749, %v2789
      %v2830 = vmul.f32 %v2750, %v2791
      %v2831 = vmul.f32 %v2751, %v2793
      %v2832 = vmul.f32 %v2752, %v2795
      %v2833 = vmul.f32 %v2753, %v2797
      %v2834 = vmul.f32 %v2754, %v2799
      %v2835 = vmul.f32 %v2755, %v2801
      %v2836 = vmul.f32 %v2756, %v2803
      %v2837 = vmul.f32 %v2757, %v2805
      %v2838 = vmul.f32 %v2535, %v1714
      %v2839 = vmul.f32 %v2537, %v1715
      %v2840 = vmul.f32 %v2539, %v1716
      %v2841 = vmul.f32 %v2541, %v1717
      %v2842 = vmul.f32 %v2543, %v1718
      %v2843 = vmul.f32 %v2545, %v1719
      %v2844 = vmul.f32 %v2547, %v1720
      %v2845 = vmul.f32 %v2549, %v1721
      %v2846 = vmul.f32 %v2551, %v1722
      %v2847 = vmul.f32 %v2553, %v1723
      %v2848 = vmul.f32 %v2555, %v1724
      %v2849 = vmul.f32 %v2557, %v1725
      %v2850 = vmul.f32 %v2559, %v1726
      %v2851 = vmul.f32 %v2561, %v1727
      %v2852 = vmul.f32 %v2563, %v1728
      %v2853 = vmul.f32 %v2565, %v1729
      %v2854 = vadd.f32 %v2822, %v2838
      %v2855 = vadd.f32 %v2823, %v2839
      %v2856 = vadd.f32 %v2824, %v2840
      %v2857 = vadd.f32 %v2825, %v2841
      %v2858 = vadd.f32 %v2826, %v2842
      %v2859 = vadd.f32 %v2827, %v2843
      %v2860 = vadd.f32 %v2828, %v2844
      %v2861 = vadd.f32 %v2829, %v2845
      %v2862 = vadd.f32 %v2830, %v2846
      %v2863 = vadd.f32 %v2831, %v2847
      %v2864 = vadd.f32 %v2832, %v2848
      %v2865 = vadd.f32 %v2833, %v2849
      %v2866 = vadd.f32 %v2834, %v2850
      %v2867 = vadd.f32 %v2835, %v2851
      %v2868 = vadd.f32 %v2836, %v2852
      %v2869 = vadd.f32 %v2837, %v2853
      %2886 = vrot.lane.b32.xlu0 %v2854, 96
      %v2887 = vpop.permute.xlu0 %2886
      %2888 = vrot.lane.b32.xlu0 %v2855, 96
      %v2889 = vpop.permute.xlu0 %2888
      %2890 = vrot.lane.b32.xlu0 %v2856, 96
      %v2891 = vpop.permute.xlu0 %2890
      %2892 = vrot.lane.b32.xlu0 %v2857, 96
      %v2893 = vpop.permute.xlu0 %2892
      %2894 = vrot.lane.b32.xlu0 %v2858, 96
      %v2895 = vpop.permute.xlu0 %2894
      %2896 = vrot.lane.b32.xlu0 %v2859, 96
      %v2897 = vpop.permute.xlu0 %2896
      %2898 = vrot.lane.b32.xlu0 %v2860, 96
      %v2899 = vpop.permute.xlu0 %2898
      %2900 = vrot.lane.b32.xlu0 %v2861, 96
      %v2901 = vpop.permute.xlu0 %2900
      %2902 = vrot.lane.b32.xlu0 %v2862, 96
      %v2903 = vpop.permute.xlu0 %2902
      %2904 = vrot.lane.b32.xlu0 %v2863, 96
      %v2905 = vpop.permute.xlu0 %2904
      %2906 = vrot.lane.b32.xlu0 %v2864, 96
      %v2907 = vpop.permute.xlu0 %2906
      %2908 = vrot.lane.b32.xlu0 %v2865, 96
      %v2909 = vpop.permute.xlu0 %2908
      %2910 = vrot.lane.b32.xlu0 %v2866, 96
      %v2911 = vpop.permute.xlu0 %2910
      %2912 = vrot.lane.b32.xlu0 %v2867, 96
      %v2913 = vpop.permute.xlu0 %2912
      %2914 = vrot.lane.b32.xlu0 %v2868, 96
      %v2915 = vpop.permute.xlu0 %2914
      %2916 = vrot.lane.b32.xlu0 %v2869, 96
      %v2917 = vpop.permute.xlu0 %2916
      %2918 = vrot.lane.b32.xlu0 %v570, 64
      %v2919 = vpop.permute.xlu0 %2918
      %2920 = vrot.lane.b32.xlu0 %v571, 64
      %v2921 = vpop.permute.xlu0 %2920
      %2922 = vrot.lane.b32.xlu0 %v572, 64
      %v2923 = vpop.permute.xlu0 %2922
      %2924 = vrot.lane.b32.xlu0 %v573, 64
      %v2925 = vpop.permute.xlu0 %2924
      %v2930 = vsel %vm589, %v2887, 0
      %v2932 = vsel %vm589, %v2889, 0
      %v2934 = vsel %vm589, %v2891, 0
      %v2936 = vsel %vm589, %v2893, 0
      %v2938 = vsel %vm589, %v2895, 0
      %v2940 = vsel %vm589, %v2897, 0
      %v2942 = vsel %vm589, %v2899, 0
      %v2944 = vsel %vm589, %v2901, 0
      %v2946 = vsel %vm589, %v2903, 0
      %v2948 = vsel %vm589, %v2905, 0
      %v2950 = vsel %vm589, %v2907, 0
      %v2952 = vsel %vm589, %v2909, 0
      %v2954 = vsel %vm589, %v2911, 0
      %v2956 = vsel %vm589, %v2913, 0
      %v2958 = vsel %vm589, %v2915, 0
      %v2960 = vsel %vm589, %v2917, 0
      %2962 = vmatprep.subr.mxu0 0.0
      %2963 = vmatpush1.msra.mxu0 %v2919
      %2964 = vmatprep.subr.mxu0 0.0
      %2965 = vmatpush1.msra.mxu0 %v2921
      %2966 = vmatprep.subr.mxu0 0.0
      %2967 = vmatpush1.msra.mxu0 %v2923
      %2968 = vmatprep.subr.mxu0 0.0
      %2969 = vmatpush1.msra.mxu0 %v2925
      %2970 = vmatprep.subr.mxu0 0.0
      %2971 = vmatpush1.msra.mxu0 0.0
      %2972 = vmatprep.subr.mxu0 0.0
      %2973 = vmatpush1.msra.mxu0 0.0
      %2974 = vmatprep.subr.mxu0 0.0
      %2975 = vmatpush1.msra.mxu0 0.0
      %2976 = vmatprep.subr.mxu0 0.0
      %2977 = vmatpush1.msra.mxu0 0.0
      %2978 = vmatprep.subr.mxu0 0.0
      %2979 = vmatpush1.msra.mxu0 0.0
      %2980 = vmatprep.subr.mxu0 0.0
      %2981 = vmatpush1.msra.mxu0 0.0
      %2982 = vmatprep.subr.mxu0 0.0
      %2983 = vmatpush1.msra.mxu0 0.0
      %2984 = vmatprep.subr.mxu0 0.0
      %2985 = vmatpush1.msra.mxu0 0.0
      %2986 = vmatprep.subr.mxu0 0.0
      %2987 = vmatpush1.msra.mxu0 0.0
      %2988 = vmatprep.subr.mxu0 0.0
      %2989 = vmatpush1.msra.mxu0 0.0
      %2990 = vmatprep.subr.mxu0 0.0
      %2991 = vmatpush1.msra.mxu0 0.0
      %2992 = vmatprep.subr.mxu0 0.0
      %2993 = vmatpush1.msra.mxu0 0.0
      %2994 = vmatprep.subr.mxu0 0.0
      %2995 = vmatpush1.msra.mxu0 0.0
      %2996 = vmatprep.subr.mxu0 0.0
      %2997 = vmatpush1.msra.mxu0 0.0
      %2998 = vmatprep.subr.mxu0 0.0
      %2999 = vmatpush1.msra.mxu0 0.0
      %3000 = vmatprep.subr.mxu0 0.0
      %3001 = vmatpush1.msra.mxu0 0.0
      %3002 = vmatprep.subr.mxu0 0.0
      %3003 = vmatpush1.msra.mxu0 0.0
      %3004 = vmatprep.subr.mxu0 0.0
      %3005 = vmatpush1.msra.mxu0 0.0
      %3006 = vmatprep.subr.mxu0 0.0
      %3007 = vmatpush1.msra.mxu0 0.0
      %3008 = vmatprep.subr.mxu0 0.0
      %3009 = vmatpush1.msra.mxu0 0.0
      %3010 = vmatprep.subr.mxu0 0.0
      %3011 = vmatpush1.msra.mxu0 0.0
      %3012 = vmatprep.subr.mxu0 0.0
      %3013 = vmatpush1.msra.mxu0 0.0
      %3014 = vmatprep.subr.mxu0 0.0
      %3015 = vmatpush1.msra.mxu0 0.0
      %3016 = vmatprep.subr.mxu0 0.0
      %3017 = vmatpush1.msra.mxu0 0.0
      %3018 = vmatprep.subr.mxu0 0.0
      %3019 = vmatpush1.msra.mxu0 0.0
      %3020 = vmatprep.subr.mxu0 0.0
      %3021 = vmatpush1.msra.mxu0 0.0
      %3022 = vmatprep.subr.mxu0 0.0
      %3023 = vmatpush1.msra.mxu0 0.0
      %3024 = vmatprep.subr.mxu0 0.0
      %3025 = vmatpush1.msra.mxu0 0.0
      %3026 = vmatprep.mubr.f32.mxu0 0.0
      %3027 = vmatmul.mubr.f32.gmra.mrb[0].mxu0 %v2930
      %v3028 = vpop.f32.mrb[0].mxu0
      %v3029 = vadd.f32 0.0, %v3028
      %v3030 = vpop.f32.mrb[0].mxu0
      %3031 = vmatprep.mubr.f32.mxu0 0.0
      %3032 = vmatmul.mubr.f32.gmra.mrb[0].mxu0 %v2932
      %v3033 = vpop.f32.mrb[0].mxu0
      %v3034 = vadd.f32 0.0, %v3033
      %v3035 = vpop.f32.mrb[0].mxu0
      %3036 = vmatprep.mubr.f32.mxu0 0.0
      %3037 = vmatmul.mubr.f32.gmra.mrb[0].mxu0 %v2934
      %v3038 = vpop.f32.mrb[0].mxu0
      %v3039 = vadd.f32 0.0, %v3038
      %v3040 = vpop.f32.mrb[0].mxu0
      %3041 = vmatprep.mubr.f32.mxu0 0.0
      %3042 = vmatmul.mubr.f32.gmra.mrb[0].mxu0 %v2936
      %v3043 = vpop.f32.mrb[0].mxu0
      %v3044 = vadd.f32 0.0, %v3043
      %v3045 = vpop.f32.mrb[0].mxu0
      %3046 = vmatprep.mubr.f32.mxu0 0.0
      %3047 = vmatmul.mubr.f32.gmra.mrb[0].mxu0 %v2938
      %v3048 = vpop.f32.mrb[0].mxu0
      %v3049 = vadd.f32 0.0, %v3048
      %v3050 = vpop.f32.mrb[0].mxu0
      %3051 = vmatprep.mubr.f32.mxu0 0.0
      %3052 = vmatmul.mubr.f32.gmra.mrb[0].mxu0 %v2940
      %v3053 = vpop.f32.mrb[0].mxu0
      %v3054 = vadd.f32 0.0, %v3053
      %v3055 = vpop.f32.mrb[0].mxu0
      %3056 = vmatprep.mubr.f32.mxu0 0.0
      %3057 = vmatmul.mubr.f32.gmra.mrb[0].mxu0 %v2942
      %v3058 = vpop.f32.mrb[0].mxu0
      %v3059 = vadd.f32 0.0, %v3058
      %v3060 = vpop.f32.mrb[0].mxu0
      %3061 = vmatprep.mubr.f32.mxu0 0.0
      %3062 = vmatmul.mubr.f32.gmra.mrb[0].mxu0 %v2944
      %v3063 = vpop.f32.mrb[0].mxu0
      %v3064 = vadd.f32 0.0, %v3063
      %v3065 = vpop.f32.mrb[0].mxu0
      %3066 = vmatprep.mubr.f32.mxu0 0.0
      %3067 = vmatmul.mubr.f32.gmra.mrb[0].mxu0 %v2946
      %v3068 = vpop.f32.mrb[0].mxu0
      %v3069 = vadd.f32 0.0, %v3068
      %v3070 = vpop.f32.mrb[0].mxu0
      %3071 = vmatprep.mubr.f32.mxu0 0.0
      %3072 = vmatmul.mubr.f32.gmra.mrb[0].mxu0 %v2948
      %v3073 = vpop.f32.mrb[0].mxu0
      %v3074 = vadd.f32 0.0, %v3073
      %v3075 = vpop.f32.mrb[0].mxu0
      %3076 = vmatprep.mubr.f32.mxu0 0.0
      %3077 = vmatmul.mubr.f32.gmra.mrb[0].mxu0 %v2950
      %v3078 = vpop.f32.mrb[0].mxu0
      %v3079 = vadd.f32 0.0, %v3078
      %v3080 = vpop.f32.mrb[0].mxu0
      %3081 = vmatprep.mubr.f32.mxu0 0.0
      %3082 = vmatmul.mubr.f32.gmra.mrb[0].mxu0 %v2952
      %v3083 = vpop.f32.mrb[0].mxu0
      %v3084 = vadd.f32 0.0, %v3083
      %v3085 = vpop.f32.mrb[0].mxu0
      %3086 = vmatprep.mubr.f32.mxu0 0.0
      %3087 = vmatmul.mubr.f32.gmra.mrb[0].mxu0 %v2954
      %v3088 = vpop.f32.mrb[0].mxu0
      %v3089 = vadd.f32 0.0, %v3088
      %v3090 = vpop.f32.mrb[0].mxu0
      %3091 = vmatprep.mubr.f32.mxu0 0.0
      %3092 = vmatmul.mubr.f32.gmra.mrb[0].mxu0 %v2956
      %v3093 = vpop.f32.mrb[0].mxu0
      %v3094 = vadd.f32 0.0, %v3093
      %v3095 = vpop.f32.mrb[0].mxu0
      %3096 = vmatprep.mubr.f32.mxu0 0.0
      %3097 = vmatmul.mubr.f32.gmra.mrb[0].mxu0 %v2958
      %v3098 = vpop.f32.mrb[0].mxu0
      %v3099 = vadd.f32 0.0, %v3098
      %v3100 = vpop.f32.mrb[0].mxu0
      %3101 = vmatprep.mubr.f32.mxu0 0.0
      %3102 = vmatmul.mubr.f32.gmra.mrb[0].mxu0 %v2960
      %v3103 = vpop.f32.mrb[0].mxu0
      %v3104 = vadd.f32 0.0, %v3103
      %v3105 = vpop.f32.mrb[0].mxu0
      %3106 = vdwg.mxu0
      %3107 = vmatprep.subr.mxu0 0.0
      %3108 = vmatpush1.msra.mxu0 %v3029
      %3109 = vmatprep.subr.mxu0 0.0
      %3110 = vmatpush1.msra.mxu0 %v3034
      %3111 = vmatprep.subr.mxu0 0.0
      %3112 = vmatpush1.msra.mxu0 %v3039
      %3113 = vmatprep.subr.mxu0 0.0
      %3114 = vmatpush1.msra.mxu0 %v3044
      %3115 = vmatprep.subr.mxu0 0.0
      %3116 = vmatpush1.msra.mxu0 %v3049
      %3117 = vmatprep.subr.mxu0 0.0
      %3118 = vmatpush1.msra.mxu0 %v3054
      %3119 = vmatprep.subr.mxu0 0.0
      %3120 = vmatpush1.msra.mxu0 %v3059
      %3121 = vmatprep.subr.mxu0 0.0
      %3122 = vmatpush1.msra.mxu0 %v3064
      %3123 = vmatprep.subr.mxu0 0.0
      %3124 = vmatpush1.msra.mxu0 %v3069
      %3125 = vmatprep.subr.mxu0 0.0
      %3126 = vmatpush1.msra.mxu0 %v3074
      %3127 = vmatprep.subr.mxu0 0.0
      %3128 = vmatpush1.msra.mxu0 %v3079
      %3129 = vmatprep.subr.mxu0 0.0
      %3130 = vmatpush1.msra.mxu0 %v3084
      %3131 = vmatprep.subr.mxu0 0.0
      %3132 = vmatpush1.msra.mxu0 %v3089
      %3133 = vmatprep.subr.mxu0 0.0
      %3134 = vmatpush1.msra.mxu0 %v3094
      %3135 = vmatprep.subr.mxu0 0.0
      %3136 = vmatpush1.msra.mxu0 %v3099
      %3137 = vmatprep.subr.mxu0 0.0
      %3138 = vmatpush1.msra.mxu0 %v3104
      %3139 = vmatprep.subr.mxu0 0.0
      %3140 = vmatpush1.msra.mxu0 0.0
      %3141 = vmatprep.subr.mxu0 0.0
      %3142 = vmatpush1.msra.mxu0 0.0
      %3143 = vmatprep.subr.mxu0 0.0
      %3144 = vmatpush1.msra.mxu0 0.0
      %3145 = vmatprep.subr.mxu0 0.0
      %3146 = vmatpush1.msra.mxu0 0.0
      %3147 = vmatprep.subr.mxu0 0.0
      %3148 = vmatpush1.msra.mxu0 0.0
      %3149 = vmatprep.subr.mxu0 0.0
      %3150 = vmatpush1.msra.mxu0 0.0
      %3151 = vmatprep.subr.mxu0 0.0
      %3152 = vmatpush1.msra.mxu0 0.0
      %3153 = vmatprep.subr.mxu0 0.0
      %3154 = vmatpush1.msra.mxu0 0.0
      %3155 = vmatprep.subr.mxu0 0.0
      %3156 = vmatpush1.msra.mxu0 0.0
      %3157 = vmatprep.subr.mxu0 0.0
      %3158 = vmatpush1.msra.mxu0 0.0
      %3159 = vmatprep.subr.mxu0 0.0
      %3160 = vmatpush1.msra.mxu0 0.0
      %3161 = vmatprep.subr.mxu0 0.0
      %3162 = vmatpush1.msra.mxu0 0.0
      %3163 = vmatprep.subr.mxu0 0.0
      %3164 = vmatpush1.msra.mxu0 0.0
      %3165 = vmatprep.subr.mxu0 0.0
      %3166 = vmatpush1.msra.mxu0 0.0
      %3167 = vmatprep.subr.mxu0 0.0
      %3168 = vmatpush1.msra.mxu0 0.0
      %3169 = vmatprep.subr.mxu0 0.0
      %3170 = vmatpush1.msra.mxu0 0.0
      %3171 = vmatprep.mubr.f32.mxu0 0.0
      %3172 = vmatmul.mubr.f32.gmra.mrb[0].mxu0 %v554
      %v3173 = vpop.f32.mrb[0].mxu0
      %v3174 = vadd.f32 0.0, %v3173
      %v3175 = vpop.f32.mrb[0].mxu0
      %3176 = vmatprep.mubr.f32.mxu0 0.0
      %3177 = vmatmul.mubr.f32.gmra.mrb[0].mxu0 %v555
      %v3178 = vpop.f32.mrb[0].mxu0
      %v3179 = vadd.f32 0.0, %v3178
      %v3180 = vpop.f32.mrb[0].mxu0
      %3181 = vmatprep.mubr.f32.mxu0 0.0
      %3182 = vmatmul.mubr.f32.gmra.mrb[0].mxu0 %v556
      %v3183 = vpop.f32.mrb[0].mxu0
      %v3184 = vadd.f32 0.0, %v3183
      %v3185 = vpop.f32.mrb[0].mxu0
      %3186 = vmatprep.mubr.f32.mxu0 0.0
      %3187 = vmatmul.mubr.f32.gmra.mrb[0].mxu0 %v557
      %v3188 = vpop.f32.mrb[0].mxu0
      %v3189 = vadd.f32 0.0, %v3188
      %v3190 = vpop.f32.mrb[0].mxu0
      %3191 = vmatprep.mubr.f32.mxu0 0.0
      %3192 = vmatmul.mubr.f32.gmra.mrb[0].mxu0 %v558
      %v3193 = vpop.f32.mrb[0].mxu0
      %v3194 = vadd.f32 0.0, %v3193
      %v3195 = vpop.f32.mrb[0].mxu0
      %3196 = vmatprep.mubr.f32.mxu0 0.0
      %3197 = vmatmul.mubr.f32.gmra.mrb[0].mxu0 %v559
      %v3198 = vpop.f32.mrb[0].mxu0
      %v3199 = vadd.f32 0.0, %v3198
      %v3200 = vpop.f32.mrb[0].mxu0
      %3201 = vmatprep.mubr.f32.mxu0 0.0
      %3202 = vmatmul.mubr.f32.gmra.mrb[0].mxu0 %v560
      %v3203 = vpop.f32.mrb[0].mxu0
      %v3204 = vadd.f32 0.0, %v3203
      %v3205 = vpop.f32.mrb[0].mxu0
      %3206 = vmatprep.mubr.f32.mxu0 0.0
      %3207 = vmatmul.mubr.f32.gmra.mrb[0].mxu0 %v561
      %v3208 = vpop.f32.mrb[0].mxu0
      %v3209 = vadd.f32 0.0, %v3208
      %v3210 = vpop.f32.mrb[0].mxu0
      %3211 = vmatprep.mubr.f32.mxu0 0.0
      %3212 = vmatmul.mubr.f32.gmra.mrb[0].mxu0 %v562
      %v3213 = vpop.f32.mrb[0].mxu0
      %v3214 = vadd.f32 0.0, %v3213
      %v3215 = vpop.f32.mrb[0].mxu0
      %3216 = vmatprep.mubr.f32.mxu0 0.0
      %3217 = vmatmul.mubr.f32.gmra.mrb[0].mxu0 %v563
      %v3218 = vpop.f32.mrb[0].mxu0
      %v3219 = vadd.f32 0.0, %v3218
      %v3220 = vpop.f32.mrb[0].mxu0
      %3221 = vmatprep.mubr.f32.mxu0 0.0
      %3222 = vmatmul.mubr.f32.gmra.mrb[0].mxu0 %v564
      %v3223 = vpop.f32.mrb[0].mxu0
      %v3224 = vadd.f32 0.0, %v3223
      %v3225 = vpop.f32.mrb[0].mxu0
      %3226 = vmatprep.mubr.f32.mxu0 0.0
      %3227 = vmatmul.mubr.f32.gmra.mrb[0].mxu0 %v565
      %v3228 = vpop.f32.mrb[0].mxu0
      %v3229 = vadd.f32 0.0, %v3228
      %v3230 = vpop.f32.mrb[0].mxu0
      %3231 = vmatprep.mubr.f32.mxu0 0.0
      %3232 = vmatmul.mubr.f32.gmra.mrb[0].mxu0 %v566
      %v3233 = vpop.f32.mrb[0].mxu0
      %v3234 = vadd.f32 0.0, %v3233
      %v3235 = vpop.f32.mrb[0].mxu0
      %3236 = vmatprep.mubr.f32.mxu0 0.0
      %3237 = vmatmul.mubr.f32.gmra.mrb[0].mxu0 %v567
      %v3238 = vpop.f32.mrb[0].mxu0
      %v3239 = vadd.f32 0.0, %v3238
      %v3240 = vpop.f32.mrb[0].mxu0
      %3241 = vmatprep.mubr.f32.mxu0 0.0
      %3242 = vmatmul.mubr.f32.gmra.mrb[0].mxu0 %v568
      %v3243 = vpop.f32.mrb[0].mxu0
      %v3244 = vadd.f32 0.0, %v3243
      %v3245 = vpop.f32.mrb[0].mxu0
      %3246 = vmatprep.mubr.f32.mxu0 0.0
      %3247 = vmatmul.mubr.f32.gmra.mrb[0].mxu0 %v569
      %v3248 = vpop.f32.mrb[0].mxu0
      %v3249 = vadd.f32 0.0, %v3248
      %v3250 = vpop.f32.mrb[0].mxu0
      %3251 = vdwg.mxu0
      %3252 = vmatprep.subr.mxu0 0.0
      %3253 = vmatpush1.msra.mxu0 %v578
      %3254 = vmatprep.subr.mxu0 0.0
      %3255 = vmatpush1.msra.mxu0 %v579
      %3256 = vmatprep.subr.mxu0 0.0
      %3257 = vmatpush1.msra.mxu0 %v580
      %3258 = vmatprep.subr.mxu0 0.0
      %3259 = vmatpush1.msra.mxu0 %v581
      %3260 = vmatprep.subr.mxu0 0.0
      %3261 = vmatpush1.msra.mxu0 0.0
      %3262 = vmatprep.subr.mxu0 0.0
      %3263 = vmatpush1.msra.mxu0 0.0
      %3264 = vmatprep.subr.mxu0 0.0
      %3265 = vmatpush1.msra.mxu0 0.0
      %3266 = vmatprep.subr.mxu0 0.0
      %3267 = vmatpush1.msra.mxu0 0.0
      %3268 = vmatprep.subr.mxu0 0.0
      %3269 = vmatpush1.msra.mxu0 0.0
      %3270 = vmatprep.subr.mxu0 0.0
      %3271 = vmatpush1.msra.mxu0 0.0
      %3272 = vmatprep.subr.mxu0 0.0
      %3273 = vmatpush1.msra.mxu0 0.0
      %3274 = vmatprep.subr.mxu0 0.0
      %3275 = vmatpush1.msra.mxu0 0.0
      %3276 = vmatprep.subr.mxu0 0.0
      %3277 = vmatpush1.msra.mxu0 0.0
      %3278 = vmatprep.subr.mxu0 0.0
      %3279 = vmatpush1.msra.mxu0 0.0
      %3280 = vmatprep.subr.mxu0 0.0
      %3281 = vmatpush1.msra.mxu0 0.0
      %3282 = vmatprep.subr.mxu0 0.0
      %3283 = vmatpush1.msra.mxu0 0.0
      %3284 = vmatprep.subr.mxu0 0.0
      %3285 = vmatpush1.msra.mxu0 0.0
      %3286 = vmatprep.subr.mxu0 0.0
      %3287 = vmatpush1.msra.mxu0 0.0
      %3288 = vmatprep.subr.mxu0 0.0
      %3289 = vmatpush1.msra.mxu0 0.0
      %3290 = vmatprep.subr.mxu0 0.0
      %3291 = vmatpush1.msra.mxu0 0.0
      %3292 = vmatprep.subr.mxu0 0.0
      %3293 = vmatpush1.msra.mxu0 0.0
      %3294 = vmatprep.subr.mxu0 0.0
      %3295 = vmatpush1.msra.mxu0 0.0
      %3296 = vmatprep.subr.mxu0 0.0
      %3297 = vmatpush1.msra.mxu0 0.0
      %3298 = vmatprep.subr.mxu0 0.0
      %3299 = vmatpush1.msra.mxu0 0.0
      %3300 = vmatprep.subr.mxu0 0.0
      %3301 = vmatpush1.msra.mxu0 0.0
      %3302 = vmatprep.subr.mxu0 0.0
      %3303 = vmatpush1.msra.mxu0 0.0
      %3304 = vmatprep.subr.mxu0 0.0
      %3305 = vmatpush1.msra.mxu0 0.0
      %3306 = vmatprep.subr.mxu0 0.0
      %3307 = vmatpush1.msra.mxu0 0.0
      %3308 = vmatprep.subr.mxu0 0.0
      %3309 = vmatpush1.msra.mxu0 0.0
      %3310 = vmatprep.subr.mxu0 0.0
      %3311 = vmatpush1.msra.mxu0 0.0
      %3312 = vmatprep.subr.mxu0 0.0
      %3313 = vmatpush1.msra.mxu0 0.0
      %3314 = vmatprep.subr.mxu0 0.0
      %3315 = vmatpush1.msra.mxu0 0.0
      %3316 = vmatprep.mubr.f32.mxu0 0.0
      %3317 = vmatmul.mubr.f32.gmra.mrb[0].mxu0 %v2930
      %v3318 = vpop.f32.mrb[0].mxu0
      %v3319 = vadd.f32 0.0, %v3318
      %v3320 = vpop.f32.mrb[0].mxu0
      %3321 = vmatprep.mubr.f32.mxu0 0.0
      %3322 = vmatmul.mubr.f32.gmra.mrb[0].mxu0 %v2932
      %v3323 = vpop.f32.mrb[0].mxu0
      %v3324 = vadd.f32 0.0, %v3323
      %v3325 = vpop.f32.mrb[0].mxu0
      %3326 = vmatprep.mubr.f32.mxu0 0.0
      %3327 = vmatmul.mubr.f32.gmra.mrb[0].mxu0 %v2934
      %v3328 = vpop.f32.mrb[0].mxu0
      %v3329 = vadd.f32 0.0, %v3328
      %v3330 = vpop.f32.mrb[0].mxu0
      %3331 = vmatprep.mubr.f32.mxu0 0.0
      %3332 = vmatmul.mubr.f32.gmra.mrb[0].mxu0 %v2936
      %v3333 = vpop.f32.mrb[0].mxu0
      %v3334 = vadd.f32 0.0, %v3333
      %v3335 = vpop.f32.mrb[0].mxu0
      %3336 = vmatprep.mubr.f32.mxu0 0.0
      %3337 = vmatmul.mubr.f32.gmra.mrb[0].mxu0 %v2938
      %v3338 = vpop.f32.mrb[0].mxu0
      %v3339 = vadd.f32 0.0, %v3338
      %v3340 = vpop.f32.mrb[0].mxu0
      %3341 = vmatprep.mubr.f32.mxu0 0.0
      %3342 = vmatmul.mubr.f32.gmra.mrb[0].mxu0 %v2940
      %v3343 = vpop.f32.mrb[0].mxu0
      %v3344 = vadd.f32 0.0, %v3343
      %v3345 = vpop.f32.mrb[0].mxu0
      %3346 = vmatprep.mubr.f32.mxu0 0.0
      %3347 = vmatmul.mubr.f32.gmra.mrb[0].mxu0 %v2942
      %v3348 = vpop.f32.mrb[0].mxu0
      %v3349 = vadd.f32 0.0, %v3348
      %v3350 = vpop.f32.mrb[0].mxu0
      %3351 = vmatprep.mubr.f32.mxu0 0.0
      %3352 = vmatmul.mubr.f32.gmra.mrb[0].mxu0 %v2944
      %v3353 = vpop.f32.mrb[0].mxu0
      %v3354 = vadd.f32 0.0, %v3353
      %v3355 = vpop.f32.mrb[0].mxu0
      %3356 = vmatprep.mubr.f32.mxu0 0.0
      %3357 = vmatmul.mubr.f32.gmra.mrb[0].mxu0 %v2946
      %v3358 = vpop.f32.mrb[0].mxu0
      %v3359 = vadd.f32 0.0, %v3358
      %v3360 = vpop.f32.mrb[0].mxu0
      %3361 = vmatprep.mubr.f32.mxu0 0.0
      %3362 = vmatmul.mubr.f32.gmra.mrb[0].mxu0 %v2948
      %v3363 = vpop.f32.mrb[0].mxu0
      %v3364 = vadd.f32 0.0, %v3363
      %v3365 = vpop.f32.mrb[0].mxu0
      %3366 = vmatprep.mubr.f32.mxu0 0.0
      %3367 = vmatmul.mubr.f32.gmra.mrb[0].mxu0 %v2950
      %v3368 = vpop.f32.mrb[0].mxu0
      %v3369 = vadd.f32 0.0, %v3368
      %v3370 = vpop.f32.mrb[0].mxu0
      %3371 = vmatprep.mubr.f32.mxu0 0.0
      %3372 = vmatmul.mubr.f32.gmra.mrb[0].mxu0 %v2952
      %v3373 = vpop.f32.mrb[0].mxu0
      %v3374 = vadd.f32 0.0, %v3373
      %v3375 = vpop.f32.mrb[0].mxu0
      %3376 = vmatprep.mubr.f32.mxu0 0.0
      %3377 = vmatmul.mubr.f32.gmra.mrb[0].mxu0 %v2954
      %v3378 = vpop.f32.mrb[0].mxu0
      %v3379 = vadd.f32 0.0, %v3378
      %v3380 = vpop.f32.mrb[0].mxu0
      %3381 = vmatprep.mubr.f32.mxu0 0.0
      %3382 = vmatmul.mubr.f32.gmra.mrb[0].mxu0 %v2956
      %v3383 = vpop.f32.mrb[0].mxu0
      %v3384 = vadd.f32 0.0, %v3383
      %v3385 = vpop.f32.mrb[0].mxu0
      %3386 = vmatprep.mubr.f32.mxu0 0.0
      %3387 = vmatmul.mubr.f32.gmra.mrb[0].mxu0 %v2958
      %v3388 = vpop.f32.mrb[0].mxu0
      %v3389 = vadd.f32 0.0, %v3388
      %v3390 = vpop.f32.mrb[0].mxu0
      %3391 = vmatprep.mubr.f32.mxu0 0.0
      %3392 = vmatmul.mubr.f32.gmra.mrb[0].mxu0 %v2960
      %v3393 = vpop.f32.mrb[0].mxu0
      %v3394 = vadd.f32 0.0, %v3393
      %v3395 = vpop.f32.mrb[0].mxu0
      %3396 = vdwg.mxu0
      %v3398 = vsel %vm589, %v3174, 0
      %v3401 = vsel %vm589, %v3179, 0
      %v3404 = vsel %vm589, %v3184, 0
      %v3407 = vsel %vm589, %v3189, 0
      %v3410 = vsel %vm589, %v3194, 0
      %v3413 = vsel %vm589, %v3199, 0
      %v3416 = vsel %vm589, %v3204, 0
      %v3419 = vsel %vm589, %v3209, 0
      %v3422 = vsel %vm589, %v3214, 0
      %v3425 = vsel %vm589, %v3219, 0
      %v3428 = vsel %vm589, %v3224, 0
      %v3431 = vsel %vm589, %v3229, 0
      %v3434 = vsel %vm589, %v3234, 0
      %v3437 = vsel %vm589, %v3239, 0
      %v3440 = vsel %vm589, %v3244, 0
      %v3443 = vsel %vm589, %v3249, 0
      %3445 = vmatprep.subr.mxu0 0.0
      %3446 = vmatpush1.msra.mxu0 %v574
      %3447 = vmatprep.subr.mxu0 0.0
      %3448 = vmatpush1.msra.mxu0 %v575
      %3449 = vmatprep.subr.mxu0 0.0
      %3450 = vmatpush1.msra.mxu0 %v576
      %3451 = vmatprep.subr.mxu0 0.0
      %3452 = vmatpush1.msra.mxu0 %v577
      %3453 = vmatprep.subr.mxu0 0.0
      %3454 = vmatpush1.msra.mxu0 0.0
      %3455 = vmatprep.subr.mxu0 0.0
      %3456 = vmatpush1.msra.mxu0 0.0
      %3457 = vmatprep.subr.mxu0 0.0
      %3458 = vmatpush1.msra.mxu0 0.0
      %3459 = vmatprep.subr.mxu0 0.0
      %3460 = vmatpush1.msra.mxu0 0.0
      %3461 = vmatprep.subr.mxu0 0.0
      %3462 = vmatpush1.msra.mxu0 0.0
      %3463 = vmatprep.subr.mxu0 0.0
      %3464 = vmatpush1.msra.mxu0 0.0
      %3465 = vmatprep.subr.mxu0 0.0
      %3466 = vmatpush1.msra.mxu0 0.0
      %3467 = vmatprep.subr.mxu0 0.0
      %3468 = vmatpush1.msra.mxu0 0.0
      %3469 = vmatprep.subr.mxu0 0.0
      %3470 = vmatpush1.msra.mxu0 0.0
      %3471 = vmatprep.subr.mxu0 0.0
      %3472 = vmatpush1.msra.mxu0 0.0
      %3473 = vmatprep.subr.mxu0 0.0
      %3474 = vmatpush1.msra.mxu0 0.0
      %3475 = vmatprep.subr.mxu0 0.0
      %3476 = vmatpush1.msra.mxu0 0.0
      %3477 = vmatprep.subr.mxu0 0.0
      %3478 = vmatpush1.msra.mxu0 0.0
      %3479 = vmatprep.subr.mxu0 0.0
      %3480 = vmatpush1.msra.mxu0 0.0
      %3481 = vmatprep.subr.mxu0 0.0
      %3482 = vmatpush1.msra.mxu0 0.0
      %3483 = vmatprep.subr.mxu0 0.0
      %3484 = vmatpush1.msra.mxu0 0.0
      %3485 = vmatprep.subr.mxu0 0.0
      %3486 = vmatpush1.msra.mxu0 0.0
      %3487 = vmatprep.subr.mxu0 0.0
      %3488 = vmatpush1.msra.mxu0 0.0
      %3489 = vmatprep.subr.mxu0 0.0
      %3490 = vmatpush1.msra.mxu0 0.0
      %3491 = vmatprep.subr.mxu0 0.0
      %3492 = vmatpush1.msra.mxu0 0.0
      %3493 = vmatprep.subr.mxu0 0.0
      %3494 = vmatpush1.msra.mxu0 0.0
      %3495 = vmatprep.subr.mxu0 0.0
      %3496 = vmatpush1.msra.mxu0 0.0
      %3497 = vmatprep.subr.mxu0 0.0
      %3498 = vmatpush1.msra.mxu0 0.0
      %3499 = vmatprep.subr.mxu0 0.0
      %3500 = vmatpush1.msra.mxu0 0.0
      %3501 = vmatprep.subr.mxu0 0.0
      %3502 = vmatpush1.msra.mxu0 0.0
      %3503 = vmatprep.subr.mxu0 0.0
      %3504 = vmatpush1.msra.mxu0 0.0
      %3505 = vmatprep.subr.mxu0 0.0
      %3506 = vmatpush1.msra.mxu0 0.0
      %3507 = vmatprep.subr.mxu0 0.0
      %3508 = vmatpush1.msra.mxu0 0.0
      %3509 = vmatprep.mubr.f32.mxu0 0.0
      %3510 = vmatmul.mubr.f32.gmra.mrb[0].mxu0 %v3398
      %v3511 = vpop.f32.mrb[0].mxu0
      %v3512 = vadd.f32 %v3319, %v3511
      %v3513 = vpop.f32.mrb[0].mxu0
      %3514 = vmatprep.mubr.f32.mxu0 0.0
      %3515 = vmatmul.mubr.f32.gmra.mrb[0].mxu0 %v3401
      %v3516 = vpop.f32.mrb[0].mxu0
      %v3517 = vadd.f32 %v3324, %v3516
      %v3518 = vpop.f32.mrb[0].mxu0
      %3519 = vmatprep.mubr.f32.mxu0 0.0
      %3520 = vmatmul.mubr.f32.gmra.mrb[0].mxu0 %v3404
      %v3521 = vpop.f32.mrb[0].mxu0
      %v3522 = vadd.f32 %v3329, %v3521
      %v3523 = vpop.f32.mrb[0].mxu0
      %3524 = vmatprep.mubr.f32.mxu0 0.0
      %3525 = vmatmul.mubr.f32.gmra.mrb[0].mxu0 %v3407
      %v3526 = vpop.f32.mrb[0].mxu0
      %v3527 = vadd.f32 %v3334, %v3526
      %v3528 = vpop.f32.mrb[0].mxu0
      %3529 = vmatprep.mubr.f32.mxu0 0.0
      %3530 = vmatmul.mubr.f32.gmra.mrb[0].mxu0 %v3410
      %v3531 = vpop.f32.mrb[0].mxu0
      %v3532 = vadd.f32 %v3339, %v3531
      %v3533 = vpop.f32.mrb[0].mxu0
      %3534 = vmatprep.mubr.f32.mxu0 0.0
      %3535 = vmatmul.mubr.f32.gmra.mrb[0].mxu0 %v3413
      %v3536 = vpop.f32.mrb[0].mxu0
      %v3537 = vadd.f32 %v3344, %v3536
      %v3538 = vpop.f32.mrb[0].mxu0
      %3539 = vmatprep.mubr.f32.mxu0 0.0
      %3540 = vmatmul.mubr.f32.gmra.mrb[0].mxu0 %v3416
      %v3541 = vpop.f32.mrb[0].mxu0
      %v3542 = vadd.f32 %v3349, %v3541
      %v3543 = vpop.f32.mrb[0].mxu0
      %3544 = vmatprep.mubr.f32.mxu0 0.0
      %3545 = vmatmul.mubr.f32.gmra.mrb[0].mxu0 %v3419
      %v3546 = vpop.f32.mrb[0].mxu0
      %v3547 = vadd.f32 %v3354, %v3546
      %v3548 = vpop.f32.mrb[0].mxu0
      %3549 = vmatprep.mubr.f32.mxu0 0.0
      %3550 = vmatmul.mubr.f32.gmra.mrb[0].mxu0 %v3422
      %v3551 = vpop.f32.mrb[0].mxu0
      %v3552 = vadd.f32 %v3359, %v3551
      %v3553 = vpop.f32.mrb[0].mxu0
      %3554 = vmatprep.mubr.f32.mxu0 0.0
      %3555 = vmatmul.mubr.f32.gmra.mrb[0].mxu0 %v3425
      %v3556 = vpop.f32.mrb[0].mxu0
      %v3557 = vadd.f32 %v3364, %v3556
      %v3558 = vpop.f32.mrb[0].mxu0
      %3559 = vmatprep.mubr.f32.mxu0 0.0
      %3560 = vmatmul.mubr.f32.gmra.mrb[0].mxu0 %v3428
      %v3561 = vpop.f32.mrb[0].mxu0
      %v3562 = vadd.f32 %v3369, %v3561
      %v3563 = vpop.f32.mrb[0].mxu0
      %3564 = vmatprep.mubr.f32.mxu0 0.0
      %3565 = vmatmul.mubr.f32.gmra.mrb[0].mxu0 %v3431
      %v3566 = vpop.f32.mrb[0].mxu0
      %v3567 = vadd.f32 %v3374, %v3566
      %v3568 = vpop.f32.mrb[0].mxu0
      %3569 = vmatprep.mubr.f32.mxu0 0.0
      %3570 = vmatmul.mubr.f32.gmra.mrb[0].mxu0 %v3434
      %v3571 = vpop.f32.mrb[0].mxu0
      %v3572 = vadd.f32 %v3379, %v3571
      %v3573 = vpop.f32.mrb[0].mxu0
      %3574 = vmatprep.mubr.f32.mxu0 0.0
      %3575 = vmatmul.mubr.f32.gmra.mrb[0].mxu0 %v3437
      %v3576 = vpop.f32.mrb[0].mxu0
      %v3577 = vadd.f32 %v3384, %v3576
      %v3578 = vpop.f32.mrb[0].mxu0
      %3579 = vmatprep.mubr.f32.mxu0 0.0
      %3580 = vmatmul.mubr.f32.gmra.mrb[0].mxu0 %v3440
      %v3581 = vpop.f32.mrb[0].mxu0
      %v3582 = vadd.f32 %v3389, %v3581
      %v3583 = vpop.f32.mrb[0].mxu0
      %3584 = vmatprep.mubr.f32.mxu0 0.0
      %3585 = vmatmul.mubr.f32.gmra.mrb[0].mxu0 %v3443
      %v3586 = vpop.f32.mrb[0].mxu0
      %v3587 = vadd.f32 %v3394, %v3586
      %v3588 = vpop.f32.mrb[0].mxu0
      %3589 = vdwg.mxu0
      %v3590 = vadd.f32 %v3512, %v587
      %v3591 = vadd.f32 %v3517, %v587
      %v3592 = vadd.f32 %v3522, %v587
      %v3593 = vadd.f32 %v3527, %v587
      %v3594 = vadd.f32 %v3532, %v587
      %v3595 = vadd.f32 %v3537, %v587
      %v3596 = vadd.f32 %v3542, %v587
      %v3597 = vadd.f32 %v3547, %v587
      %v3598 = vadd.f32 %v3552, %v587
      %v3599 = vadd.f32 %v3557, %v587
      %v3600 = vadd.f32 %v3562, %v587
      %v3601 = vadd.f32 %v3567, %v587
      %v3602 = vadd.f32 %v3572, %v587
      %v3603 = vadd.f32 %v3577, %v587
      %v3604 = vadd.f32 %v3582, %v587
      %v3605 = vadd.f32 %v3587, %v587
      %v3606 = vxor.u32 %v3590, 2147483648
      %v3607 = vxor.u32 %v3591, 2147483648
      %v3608 = vxor.u32 %v3592, 2147483648
      %v3609 = vxor.u32 %v3593, 2147483648
      %v3610 = vxor.u32 %v3594, 2147483648
      %v3611 = vxor.u32 %v3595, 2147483648
      %v3612 = vxor.u32 %v3596, 2147483648
      %v3613 = vxor.u32 %v3597, 2147483648
      %v3614 = vxor.u32 %v3598, 2147483648
      %v3615 = vxor.u32 %v3599, 2147483648
      %v3616 = vxor.u32 %v3600, 2147483648
      %v3617 = vxor.u32 %v3601, 2147483648
      %v3618 = vxor.u32 %v3602, 2147483648
      %v3619 = vxor.u32 %v3603, 2147483648
      %v3620 = vxor.u32 %v3604, 2147483648
      %v3621 = vxor.u32 %v3605, 2147483648
      %v3622 = vmul.f32 %v3606, 1.442695
      %v3623 = vpow.pop %v3622
      %v3624 = vmul.f32 %v3607, 1.442695
      %v3625 = vpow.pop %v3624
      %v3626 = vmul.f32 %v3608, 1.442695
      %v3627 = vpow.pop %v3626
      %v3628 = vmul.f32 %v3609, 1.442695
      %v3629 = vpow.pop %v3628
      %v3630 = vmul.f32 %v3610, 1.442695
      %v3631 = vpow.pop %v3630
      %v3632 = vmul.f32 %v3611, 1.442695
      %v3633 = vpow.pop %v3632
      %v3634 = vmul.f32 %v3612, 1.442695
      %v3635 = vpow.pop %v3634
      %v3636 = vmul.f32 %v3613, 1.442695
      %v3637 = vpow.pop %v3636
      %v3638 = vmul.f32 %v3614, 1.442695
      %v3639 = vpow.pop %v3638
      %v3640 = vmul.f32 %v3615, 1.442695
      %v3641 = vpow.pop %v3640
      %v3642 = vmul.f32 %v3616, 1.442695
      %v3643 = vpow.pop %v3642
      %v3644 = vmul.f32 %v3617, 1.442695
      %v3645 = vpow.pop %v3644
      %v3646 = vmul.f32 %v3618, 1.442695
      %v3647 = vpow.pop %v3646
      %v3648 = vmul.f32 %v3619, 1.442695
      %v3649 = vpow.pop %v3648
      %v3650 = vmul.f32 %v3620, 1.442695
      %v3651 = vpow.pop %v3650
      %v3652 = vmul.f32 %v3621, 1.442695
      %v3653 = vpow.pop %v3652
      %v3654 = vadd.f32 %v3623, 1.0
      %v3655 = vadd.f32 %v3625, 1.0
      %v3656 = vadd.f32 %v3627, 1.0
      %v3657 = vadd.f32 %v3629, 1.0
      %v3658 = vadd.f32 %v3631, 1.0
      %v3659 = vadd.f32 %v3633, 1.0
      %v3660 = vadd.f32 %v3635, 1.0
      %v3661 = vadd.f32 %v3637, 1.0
      %v3662 = vadd.f32 %v3639, 1.0
      %v3663 = vadd.f32 %v3641, 1.0
      %v3664 = vadd.f32 %v3643, 1.0
      %v3665 = vadd.f32 %v3645, 1.0
      %v3666 = vadd.f32 %v3647, 1.0
      %v3667 = vadd.f32 %v3649, 1.0
      %v3668 = vadd.f32 %v3651, 1.0
      %v3669 = vadd.f32 %v3653, 1.0
      %v3670 = vrcp.pop %v3654
      %v3671 = vmul.f32 1.0, %v3670
      %v3672 = vrcp.pop %v3655
      %v3673 = vmul.f32 1.0, %v3672
      %v3674 = vrcp.pop %v3656
      %v3675 = vmul.f32 1.0, %v3674
      %v3676 = vrcp.pop %v3657
      %v3677 = vmul.f32 1.0, %v3676
      %v3678 = vrcp.pop %v3658
      %v3679 = vmul.f32 1.0, %v3678
      %v3680 = vrcp.pop %v3659
      %v3681 = vmul.f32 1.0, %v3680
      %v3682 = vrcp.pop %v3660
      %v3683 = vmul.f32 1.0, %v3682
      %v3684 = vrcp.pop %v3661
      %v3685 = vmul.f32 1.0, %v3684
      %v3686 = vrcp.pop %v3662
      %v3687 = vmul.f32 1.0, %v3686
      %v3688 = vrcp.pop %v3663
      %v3689 = vmul.f32 1.0, %v3688
      %v3690 = vrcp.pop %v3664
      %v3691 = vmul.f32 1.0, %v3690
      %v3692 = vrcp.pop %v3665
      %v3693 = vmul.f32 1.0, %v3692
      %v3694 = vrcp.pop %v3666
      %v3695 = vmul.f32 1.0, %v3694
      %v3696 = vrcp.pop %v3667
      %v3697 = vmul.f32 1.0, %v3696
      %v3698 = vrcp.pop %v3668
      %v3699 = vmul.f32 1.0, %v3698
      %v3700 = vrcp.pop %v3669
      %v3701 = vmul.f32 1.0, %v3700
      %3718 = vrot.lane.b32.xlu0 %v3590, 32
      %v3719 = vpop.permute.xlu0 %3718
      %3720 = vrot.lane.b32.xlu0 %v3591, 32
      %v3721 = vpop.permute.xlu0 %3720
      %3722 = vrot.lane.b32.xlu0 %v3592, 32
      %v3723 = vpop.permute.xlu0 %3722
      %3724 = vrot.lane.b32.xlu0 %v3593, 32
      %v3725 = vpop.permute.xlu0 %3724
      %3726 = vrot.lane.b32.xlu0 %v3594, 32
      %v3727 = vpop.permute.xlu0 %3726
      %3728 = vrot.lane.b32.xlu0 %v3595, 32
      %v3729 = vpop.permute.xlu0 %3728
      %3730 = vrot.lane.b32.xlu0 %v3596, 32
      %v3731 = vpop.permute.xlu0 %3730
      %3732 = vrot.lane.b32.xlu0 %v3597, 32
      %v3733 = vpop.permute.xlu0 %3732
      %3734 = vrot.lane.b32.xlu0 %v3598, 32
      %v3735 = vpop.permute.xlu0 %3734
      %3736 = vrot.lane.b32.xlu0 %v3599, 32
      %v3737 = vpop.permute.xlu0 %3736
      %3738 = vrot.lane.b32.xlu0 %v3600, 32
      %v3739 = vpop.permute.xlu0 %3738
      %3740 = vrot.lane.b32.xlu0 %v3601, 32
      %v3741 = vpop.permute.xlu0 %3740
      %3742 = vrot.lane.b32.xlu0 %v3602, 32
      %v3743 = vpop.permute.xlu0 %3742
      %3744 = vrot.lane.b32.xlu0 %v3603, 32
      %v3745 = vpop.permute.xlu0 %3744
      %3746 = vrot.lane.b32.xlu0 %v3604, 32
      %v3747 = vpop.permute.xlu0 %3746
      %3748 = vrot.lane.b32.xlu0 %v3605, 32
      %v3749 = vpop.permute.xlu0 %3748
      %v3766 = vmul.f32 %v3671, %v3719
      %v3767 = vmul.f32 %v3673, %v3721
      %v3768 = vmul.f32 %v3675, %v3723
      %v3769 = vmul.f32 %v3677, %v3725
      %v3770 = vmul.f32 %v3679, %v3727
      %v3771 = vmul.f32 %v3681, %v3729
      %v3772 = vmul.f32 %v3683, %v3731
      %v3773 = vmul.f32 %v3685, %v3733
      %v3774 = vmul.f32 %v3687, %v3735
      %v3775 = vmul.f32 %v3689, %v3737
      %v3776 = vmul.f32 %v3691, %v3739
      %v3777 = vmul.f32 %v3693, %v3741
      %v3778 = vmul.f32 %v3695, %v3743
      %v3779 = vmul.f32 %v3697, %v3745
      %v3780 = vmul.f32 %v3699, %v3747
      %v3781 = vmul.f32 %v3701, %v3749
      %3798 = vrot.lane.b32.xlu0 %v3766, 64
      %v3799 = vpop.permute.xlu0 %3798
      %3800 = vrot.lane.b32.xlu0 %v3767, 64
      %v3801 = vpop.permute.xlu0 %3800
      %3802 = vrot.lane.b32.xlu0 %v3768, 64
      %v3803 = vpop.permute.xlu0 %3802
      %3804 = vrot.lane.b32.xlu0 %v3769, 64
      %v3805 = vpop.permute.xlu0 %3804
      %3806 = vrot.lane.b32.xlu0 %v3770, 64
      %v3807 = vpop.permute.xlu0 %3806
      %3808 = vrot.lane.b32.xlu0 %v3771, 64
      %v3809 = vpop.permute.xlu0 %3808
      %3810 = vrot.lane.b32.xlu0 %v3772, 64
      %v3811 = vpop.permute.xlu0 %3810
      %3812 = vrot.lane.b32.xlu0 %v3773, 64
      %v3813 = vpop.permute.xlu0 %3812
      %3814 = vrot.lane.b32.xlu0 %v3774, 64
      %v3815 = vpop.permute.xlu0 %3814
      %3816 = vrot.lane.b32.xlu0 %v3775, 64
      %v3817 = vpop.permute.xlu0 %3816
      %3818 = vrot.lane.b32.xlu0 %v3776, 64
      %v3819 = vpop.permute.xlu0 %3818
      %3820 = vrot.lane.b32.xlu0 %v3777, 64
      %v3821 = vpop.permute.xlu0 %3820
      %3822 = vrot.lane.b32.xlu0 %v3778, 64
      %v3823 = vpop.permute.xlu0 %3822
      %3824 = vrot.lane.b32.xlu0 %v3779, 64
      %v3825 = vpop.permute.xlu0 %3824
      %3826 = vrot.lane.b32.xlu0 %v3780, 64
      %v3827 = vpop.permute.xlu0 %3826
      %3828 = vrot.lane.b32.xlu0 %v3781, 64
      %v3829 = vpop.permute.xlu0 %3828
      %v3846 = vadd.f32 %v3590, %v3799
      %v3847 = vadd.f32 %v3591, %v3801
      %v3848 = vadd.f32 %v3592, %v3803
      %v3849 = vadd.f32 %v3593, %v3805
      %v3850 = vadd.f32 %v3594, %v3807
      %v3851 = vadd.f32 %v3595, %v3809
      %v3852 = vadd.f32 %v3596, %v3811
      %v3853 = vadd.f32 %v3597, %v3813
      %v3854 = vadd.f32 %v3598, %v3815
      %v3855 = vadd.f32 %v3599, %v3817
      %v3856 = vadd.f32 %v3600, %v3819
      %v3857 = vadd.f32 %v3601, %v3821
      %v3858 = vadd.f32 %v3602, %v3823
      %v3859 = vadd.f32 %v3603, %v3825
      %v3860 = vadd.f32 %v3604, %v3827
      %v3861 = vadd.f32 %v3605, %v3829
      %v3862 = vtanh.pop %v3846
      %v3863 = vtanh.pop %v3847
      %v3864 = vtanh.pop %v3848
      %v3865 = vtanh.pop %v3849
      %v3866 = vtanh.pop %v3850
      %v3867 = vtanh.pop %v3851
      %v3868 = vtanh.pop %v3852
      %v3869 = vtanh.pop %v3853
      %v3870 = vtanh.pop %v3854
      %v3871 = vtanh.pop %v3855
      %v3872 = vtanh.pop %v3856
      %v3873 = vtanh.pop %v3857
      %v3874 = vtanh.pop %v3858
      %v3875 = vtanh.pop %v3859
      %v3876 = vtanh.pop %v3860
      %v3877 = vtanh.pop %v3861
      %v3878 = vsub.f32 1.0, %v3671
      %v3879 = vsub.f32 1.0, %v3673
      %v3880 = vsub.f32 1.0, %v3675
      %v3881 = vsub.f32 1.0, %v3677
      %v3882 = vsub.f32 1.0, %v3679
      %v3883 = vsub.f32 1.0, %v3681
      %v3884 = vsub.f32 1.0, %v3683
      %v3885 = vsub.f32 1.0, %v3685
      %v3886 = vsub.f32 1.0, %v3687
      %v3887 = vsub.f32 1.0, %v3689
      %v3888 = vsub.f32 1.0, %v3691
      %v3889 = vsub.f32 1.0, %v3693
      %v3890 = vsub.f32 1.0, %v3695
      %v3891 = vsub.f32 1.0, %v3697
      %v3892 = vsub.f32 1.0, %v3699
      %v3893 = vsub.f32 1.0, %v3701
      %3910 = vrot.lane.b32.xlu0 %v3862, 96
      %v3911 = vpop.permute.xlu0 %3910
      %3912 = vrot.lane.b32.xlu0 %v3863, 96
      %v3913 = vpop.permute.xlu0 %3912
      %3914 = vrot.lane.b32.xlu0 %v3864, 96
      %v3915 = vpop.permute.xlu0 %3914
      %3916 = vrot.lane.b32.xlu0 %v3865, 96
      %v3917 = vpop.permute.xlu0 %3916
      %3918 = vrot.lane.b32.xlu0 %v3866, 96
      %v3919 = vpop.permute.xlu0 %3918
      %3920 = vrot.lane.b32.xlu0 %v3867, 96
      %v3921 = vpop.permute.xlu0 %3920
      %3922 = vrot.lane.b32.xlu0 %v3868, 96
      %v3923 = vpop.permute.xlu0 %3922
      %3924 = vrot.lane.b32.xlu0 %v3869, 96
      %v3925 = vpop.permute.xlu0 %3924
      %3926 = vrot.lane.b32.xlu0 %v3870, 96
      %v3927 = vpop.permute.xlu0 %3926
      %3928 = vrot.lane.b32.xlu0 %v3871, 96
      %v3929 = vpop.permute.xlu0 %3928
      %3930 = vrot.lane.b32.xlu0 %v3872, 96
      %v3931 = vpop.permute.xlu0 %3930
      %3932 = vrot.lane.b32.xlu0 %v3873, 96
      %v3933 = vpop.permute.xlu0 %3932
      %3934 = vrot.lane.b32.xlu0 %v3874, 96
      %v3935 = vpop.permute.xlu0 %3934
      %3936 = vrot.lane.b32.xlu0 %v3875, 96
      %v3937 = vpop.permute.xlu0 %3936
      %3938 = vrot.lane.b32.xlu0 %v3876, 96
      %v3939 = vpop.permute.xlu0 %3938
      %3940 = vrot.lane.b32.xlu0 %v3877, 96
      %v3941 = vpop.permute.xlu0 %3940
      %v3958 = vmul.f32 %v3878, %v3911
      %v3959 = vmul.f32 %v3879, %v3913
      %v3960 = vmul.f32 %v3880, %v3915
      %v3961 = vmul.f32 %v3881, %v3917
      %v3962 = vmul.f32 %v3882, %v3919
      %v3963 = vmul.f32 %v3883, %v3921
      %v3964 = vmul.f32 %v3884, %v3923
      %v3965 = vmul.f32 %v3885, %v3925
      %v3966 = vmul.f32 %v3886, %v3927
      %v3967 = vmul.f32 %v3887, %v3929
      %v3968 = vmul.f32 %v3888, %v3931
      %v3969 = vmul.f32 %v3889, %v3933
      %v3970 = vmul.f32 %v3890, %v3935
      %v3971 = vmul.f32 %v3891, %v3937
      %v3972 = vmul.f32 %v3892, %v3939
      %v3973 = vmul.f32 %v3893, %v3941
      %v3974 = vmul.f32 %v3671, %v2854
      %v3975 = vmul.f32 %v3673, %v2855
      %v3976 = vmul.f32 %v3675, %v2856
      %v3977 = vmul.f32 %v3677, %v2857
      %v3978 = vmul.f32 %v3679, %v2858
      %v3979 = vmul.f32 %v3681, %v2859
      %v3980 = vmul.f32 %v3683, %v2860
      %v3981 = vmul.f32 %v3685, %v2861
      %v3982 = vmul.f32 %v3687, %v2862
      %v3983 = vmul.f32 %v3689, %v2863
      %v3984 = vmul.f32 %v3691, %v2864
      %v3985 = vmul.f32 %v3693, %v2865
      %v3986 = vmul.f32 %v3695, %v2866
      %v3987 = vmul.f32 %v3697, %v2867
      %v3988 = vmul.f32 %v3699, %v2868
      %v3989 = vmul.f32 %v3701, %v2869
      %v3990 = vadd.f32 %v3958, %v3974
      %v3991 = vadd.f32 %v3959, %v3975
      %v3992 = vadd.f32 %v3960, %v3976
      %v3993 = vadd.f32 %v3961, %v3977
      %v3994 = vadd.f32 %v3962, %v3978
      %v3995 = vadd.f32 %v3963, %v3979
      %v3996 = vadd.f32 %v3964, %v3980
      %v3997 = vadd.f32 %v3965, %v3981
      %v3998 = vadd.f32 %v3966, %v3982
      %v3999 = vadd.f32 %v3967, %v3983
      %v4000 = vadd.f32 %v3968, %v3984
      %v4001 = vadd.f32 %v3969, %v3985
      %v4002 = vadd.f32 %v3970, %v3986
      %v4003 = vadd.f32 %v3971, %v3987
      %v4004 = vadd.f32 %v3972, %v3988
      %v4005 = vadd.f32 %v3973, %v3989
      %v4006 = vld [vmem:[%s7] sm:$0xff]
      %v4007 = vld [vmem:[%s7 + $0x8] sm:$0xff]
      %v4008 = vld [vmem:[%s7 + $0x10] sm:$0xff]
      %v4009 = vld [vmem:[%s7 + $0x18] sm:$0xff]
      %4026 = vrot.lane.b32.xlu0 %v3990, 96
      %v4027 = vpop.permute.xlu0 %4026
      %4028 = vrot.lane.b32.xlu0 %v3991, 96
      %v4029 = vpop.permute.xlu0 %4028
      %4030 = vrot.lane.b32.xlu0 %v3992, 96
      %v4031 = vpop.permute.xlu0 %4030
      %4032 = vrot.lane.b32.xlu0 %v3993, 96
      %v4033 = vpop.permute.xlu0 %4032
      %4034 = vrot.lane.b32.xlu0 %v3994, 96
      %v4035 = vpop.permute.xlu0 %4034
      %4036 = vrot.lane.b32.xlu0 %v3995, 96
      %v4037 = vpop.permute.xlu0 %4036
      %4038 = vrot.lane.b32.xlu0 %v3996, 96
      %v4039 = vpop.permute.xlu0 %4038
      %4040 = vrot.lane.b32.xlu0 %v3997, 96
      %v4041 = vpop.permute.xlu0 %4040
      %4042 = vrot.lane.b32.xlu0 %v3998, 96
      %v4043 = vpop.permute.xlu0 %4042
      %4044 = vrot.lane.b32.xlu0 %v3999, 96
      %v4045 = vpop.permute.xlu0 %4044
      %4046 = vrot.lane.b32.xlu0 %v4000, 96
      %v4047 = vpop.permute.xlu0 %4046
      %4048 = vrot.lane.b32.xlu0 %v4001, 96
      %v4049 = vpop.permute.xlu0 %4048
      %4050 = vrot.lane.b32.xlu0 %v4002, 96
      %v4051 = vpop.permute.xlu0 %4050
      %4052 = vrot.lane.b32.xlu0 %v4003, 96
      %v4053 = vpop.permute.xlu0 %4052
      %4054 = vrot.lane.b32.xlu0 %v4004, 96
      %v4055 = vpop.permute.xlu0 %4054
      %4056 = vrot.lane.b32.xlu0 %v4005, 96
      %v4057 = vpop.permute.xlu0 %4056
      %v4058 = vsel %vm589, %v4027, 0
      %v4060 = vsel %vm589, %v4029, 0
      %v4062 = vsel %vm589, %v4031, 0
      %v4064 = vsel %vm589, %v4033, 0
      %v4066 = vsel %vm589, %v4035, 0
      %v4068 = vsel %vm589, %v4037, 0
      %v4070 = vsel %vm589, %v4039, 0
      %v4072 = vsel %vm589, %v4041, 0
      %v4074 = vsel %vm589, %v4043, 0
      %v4076 = vsel %vm589, %v4045, 0
      %v4078 = vsel %vm589, %v4047, 0
      %v4080 = vsel %vm589, %v4049, 0
      %v4082 = vsel %vm589, %v4051, 0
      %v4084 = vsel %vm589, %v4053, 0
      %v4086 = vsel %vm589, %v4055, 0
      %v4088 = vsel %vm589, %v4057, 0
      %4090 = vmatprep.subr.mxu0 0.0
      %4091 = vmatpush1.msra.mxu0 %v4006
      %4092 = vmatprep.subr.mxu0 0.0
      %4093 = vmatpush1.msra.mxu0 %v4007
      %4094 = vmatprep.subr.mxu0 0.0
      %4095 = vmatpush1.msra.mxu0 %v4008
      %4096 = vmatprep.subr.mxu0 0.0
      %4097 = vmatpush1.msra.mxu0 %v4009
      %4098 = vmatprep.subr.mxu0 0.0
      %4099 = vmatpush1.msra.mxu0 0.0
      %4100 = vmatprep.subr.mxu0 0.0
      %4101 = vmatpush1.msra.mxu0 0.0
      %4102 = vmatprep.subr.mxu0 0.0
      %4103 = vmatpush1.msra.mxu0 0.0
      %4104 = vmatprep.subr.mxu0 0.0
      %4105 = vmatpush1.msra.mxu0 0.0
      %4106 = vmatprep.subr.mxu0 0.0
      %4107 = vmatpush1.msra.mxu0 0.0
      %4108 = vmatprep.subr.mxu0 0.0
      %4109 = vmatpush1.msra.mxu0 0.0
      %4110 = vmatprep.subr.mxu0 0.0
      %4111 = vmatpush1.msra.mxu0 0.0
      %4112 = vmatprep.subr.mxu0 0.0
      %4113 = vmatpush1.msra.mxu0 0.0
      %4114 = vmatprep.subr.mxu0 0.0
      %4115 = vmatpush1.msra.mxu0 0.0
      %4116 = vmatprep.subr.mxu0 0.0
      %4117 = vmatpush1.msra.mxu0 0.0
      %4118 = vmatprep.subr.mxu0 0.0
      %4119 = vmatpush1.msra.mxu0 0.0
      %4120 = vmatprep.subr.mxu0 0.0
      %4121 = vmatpush1.msra.mxu0 0.0
      %4122 = vmatprep.subr.mxu0 0.0
      %4123 = vmatpush1.msra.mxu0 0.0
      %4124 = vmatprep.subr.mxu0 0.0
      %4125 = vmatpush1.msra.mxu0 0.0
      %4126 = vmatprep.subr.mxu0 0.0
      %4127 = vmatpush1.msra.mxu0 0.0
      %4128 = vmatprep.subr.mxu0 0.0
      %4129 = vmatpush1.msra.mxu0 0.0
      %4130 = vmatprep.subr.mxu0 0.0
      %4131 = vmatpush1.msra.mxu0 0.0
      %4132 = vmatprep.subr.mxu0 0.0
      %4133 = vmatpush1.msra.mxu0 0.0
      %4134 = vmatprep.subr.mxu0 0.0
      %4135 = vmatpush1.msra.mxu0 0.0
      %4136 = vmatprep.subr.mxu0 0.0
      %4137 = vmatpush1.msra.mxu0 0.0
      %4138 = vmatprep.subr.mxu0 0.0
      %4139 = vmatpush1.msra.mxu0 0.0
      %4140 = vmatprep.subr.mxu0 0.0
      %4141 = vmatpush1.msra.mxu0 0.0
      %4142 = vmatprep.subr.mxu0 0.0
      %4143 = vmatpush1.msra.mxu0 0.0
      %4144 = vmatprep.subr.mxu0 0.0
      %4145 = vmatpush1.msra.mxu0 0.0
      %4146 = vmatprep.subr.mxu0 0.0
      %4147 = vmatpush1.msra.mxu0 0.0
      %4148 = vmatprep.subr.mxu0 0.0
      %4149 = vmatpush1.msra.mxu0 0.0
      %4150 = vmatprep.subr.mxu0 0.0
      %4151 = vmatpush1.msra.mxu0 0.0
      %4152 = vmatprep.subr.mxu0 0.0
      %4153 = vmatpush1.msra.mxu0 0.0
      %4154 = vmatprep.mubr.f32.mxu0 0.0
      %4155 = vmatmul.mubr.f32.gmra.mrb[0].mxu0 %v4058
      %v4156 = vpop.f32.mrb[0].mxu0
      %v4157 = vadd.f32 0.0, %v4156
      %v4158 = vpop.f32.mrb[0].mxu0
      %4159 = vmatprep.mubr.f32.mxu0 0.0
      %4160 = vmatmul.mubr.f32.gmra.mrb[0].mxu0 %v4060
      %v4161 = vpop.f32.mrb[0].mxu0
      %v4162 = vadd.f32 0.0, %v4161
      %v4163 = vpop.f32.mrb[0].mxu0
      %4164 = vmatprep.mubr.f32.mxu0 0.0
      %4165 = vmatmul.mubr.f32.gmra.mrb[0].mxu0 %v4062
      %v4166 = vpop.f32.mrb[0].mxu0
      %v4167 = vadd.f32 0.0, %v4166
      %v4168 = vpop.f32.mrb[0].mxu0
      %4169 = vmatprep.mubr.f32.mxu0 0.0
      %4170 = vmatmul.mubr.f32.gmra.mrb[0].mxu0 %v4064
      %v4171 = vpop.f32.mrb[0].mxu0
      %v4172 = vadd.f32 0.0, %v4171
      %v4173 = vpop.f32.mrb[0].mxu0
      %4174 = vmatprep.mubr.f32.mxu0 0.0
      %4175 = vmatmul.mubr.f32.gmra.mrb[0].mxu0 %v4066
      %v4176 = vpop.f32.mrb[0].mxu0
      %v4177 = vadd.f32 0.0, %v4176
      %v4178 = vpop.f32.mrb[0].mxu0
      %4179 = vmatprep.mubr.f32.mxu0 0.0
      %4180 = vmatmul.mubr.f32.gmra.mrb[0].mxu0 %v4068
      %v4181 = vpop.f32.mrb[0].mxu0
      %v4182 = vadd.f32 0.0, %v4181
      %v4183 = vpop.f32.mrb[0].mxu0
      %4184 = vmatprep.mubr.f32.mxu0 0.0
      %4185 = vmatmul.mubr.f32.gmra.mrb[0].mxu0 %v4070
      %v4186 = vpop.f32.mrb[0].mxu0
      %v4187 = vadd.f32 0.0, %v4186
      %v4188 = vpop.f32.mrb[0].mxu0
      %4189 = vmatprep.mubr.f32.mxu0 0.0
      %4190 = vmatmul.mubr.f32.gmra.mrb[0].mxu0 %v4072
      %v4191 = vpop.f32.mrb[0].mxu0
      %v4192 = vadd.f32 0.0, %v4191
      %v4193 = vpop.f32.mrb[0].mxu0
      %4194 = vmatprep.mubr.f32.mxu0 0.0
      %4195 = vmatmul.mubr.f32.gmra.mrb[0].mxu0 %v4074
      %v4196 = vpop.f32.mrb[0].mxu0
      %v4197 = vadd.f32 0.0, %v4196
      %v4198 = vpop.f32.mrb[0].mxu0
      %4199 = vmatprep.mubr.f32.mxu0 0.0
      %4200 = vmatmul.mubr.f32.gmra.mrb[0].mxu0 %v4076
      %v4201 = vpop.f32.mrb[0].mxu0
      %v4202 = vadd.f32 0.0, %v4201
      %v4203 = vpop.f32.mrb[0].mxu0
      %4204 = vmatprep.mubr.f32.mxu0 0.0
      %4205 = vmatmul.mubr.f32.gmra.mrb[0].mxu0 %v4078
      %v4206 = vpop.f32.mrb[0].mxu0
      %v4207 = vadd.f32 0.0, %v4206
      %v4208 = vpop.f32.mrb[0].mxu0
      %4209 = vmatprep.mubr.f32.mxu0 0.0
      %4210 = vmatmul.mubr.f32.gmra.mrb[0].mxu0 %v4080
      %v4211 = vpop.f32.mrb[0].mxu0
      %v4212 = vadd.f32 0.0, %v4211
      %v4213 = vpop.f32.mrb[0].mxu0
      %4214 = vmatprep.mubr.f32.mxu0 0.0
      %4215 = vmatmul.mubr.f32.gmra.mrb[0].mxu0 %v4082
      %v4216 = vpop.f32.mrb[0].mxu0
      %v4217 = vadd.f32 0.0, %v4216
      %v4218 = vpop.f32.mrb[0].mxu0
      %4219 = vmatprep.mubr.f32.mxu0 0.0
      %4220 = vmatmul.mubr.f32.gmra.mrb[0].mxu0 %v4084
      %v4221 = vpop.f32.mrb[0].mxu0
      %v4222 = vadd.f32 0.0, %v4221
      %v4223 = vpop.f32.mrb[0].mxu0
      %4224 = vmatprep.mubr.f32.mxu0 0.0
      %4225 = vmatmul.mubr.f32.gmra.mrb[0].mxu0 %v4086
      %v4226 = vpop.f32.mrb[0].mxu0
      %v4227 = vadd.f32 0.0, %v4226
      %v4228 = vpop.f32.mrb[0].mxu0
      %4229 = vmatprep.mubr.f32.mxu0 0.0
      %4230 = vmatmul.mubr.f32.gmra.mrb[0].mxu0 %v4088
      %v4231 = vpop.f32.mrb[0].mxu0
      %v4232 = vadd.f32 0.0, %v4231
      %v4233 = vpop.f32.mrb[0].mxu0
      %4234 = vdwg.mxu0
      %vm4235 = vcmask 64512
      %4236 = vst.msk [vmem:[%s325] sm:$0xff] %vm4235, %v4157
      %4237 = vst.msk [vmem:[%s325 + $0x8] sm:$0xff] %vm4235, %v4162
      %4238 = vst.msk [vmem:[%s325 + $0x10] sm:$0xff] %vm4235, %v4167
      %4239 = vst.msk [vmem:[%s325 + $0x18] sm:$0xff] %vm4235, %v4172
      %4240 = vst.msk [vmem:[%s325 + $0x20] sm:$0xff] %vm4235, %v4177
      %4241 = vst.msk [vmem:[%s325 + $0x28] sm:$0xff] %vm4235, %v4182
      %4242 = vst.msk [vmem:[%s325 + $0x30] sm:$0xff] %vm4235, %v4187
      %4243 = vst.msk [vmem:[%s325 + $0x38] sm:$0xff] %vm4235, %v4192
      %4244 = vst.msk [vmem:[%s325 + $0x40] sm:$0xff] %vm4235, %v4197
      %4245 = vst.msk [vmem:[%s325 + $0x48] sm:$0xff] %vm4235, %v4202
      %4246 = vst.msk [vmem:[%s325 + $0x50] sm:$0xff] %vm4235, %v4207
      %4247 = vst.msk [vmem:[%s325 + $0x58] sm:$0xff] %vm4235, %v4212
      %4248 = vst.msk [vmem:[%s325 + $0x60] sm:$0xff] %vm4235, %v4217
      %4249 = vst.msk [vmem:[%s325 + $0x68] sm:$0xff] %vm4235, %v4222
      %4250 = vst.msk [vmem:[%s325 + $0x70] sm:$0xff] %vm4235, %v4227
      %4251 = vst.msk [vmem:[%s325 + $0x78] sm:$0xff] %vm4235, %v4232
      %p4252 = scmp.lt.s32.totalorder %s19, 1
      %s4253 = scalar_select %p4252, %s19, 1
      %s4254 = smul.addr %s4253, 16
      %s4255 = smul.addr %s4254, 8
      %s4256 = scalar_lea.vmem %s8, %s4255
      // Predicated region
      $region53: #{tpu_custom_call.1} parent=51 // pred_check
        %p4257 = pneg %p215
      $region54: #{tpu_custom_call.1} parent=51 // pred_check_branch
        %4259 = sbr.rel (%p4257) target = $region56
      $region55: #{tpu_custom_call.1} parent=51 // pred_region
        _
      $region56: #{tpu_custom_call.1} parent=51 // pred_fallthru
        _
    $region52: #{tpu_custom_call.1} parent=5 // pred_fallthru
      _
    %p4260 = scmp.le.s32.totalorder 2, %s14
    // Predicated region
    $region57: #{tpu_custom_call.1} parent=5 // pred_check
      %p4261 = pneg %p4260
    $region58: #{tpu_custom_call.1} parent=5 // pred_check_branch
      %4263 = sbr.rel (%p4261) target = $region60
    $region59: #{tpu_custom_call.1} parent=5 // pred_region
      %s4264 = ssub.s32 %s14, 2
      // Predicated region
      $region61: #{tpu_custom_call.1} parent=59 // pred_check
        %p4265 = pneg %p221
      $region62: #{tpu_custom_call.1} parent=59 // pred_check_branch
        %4267 = sbr.rel (%p4265) target = $region64
      $region63: #{tpu_custom_call.1} parent=59 // pred_region
        %p4268 = scmp.lt.s32.totalorder %s20, 1
        %s4269 = scalar_select %p4268, %s20, 1
        %s4270 = smul.addr %s4269, 16
        %s4271 = smul.addr %s4270, 8
        %s4272 = scalar_lea.vmem %s8, %s4271
      $region64: #{tpu_custom_call.1} parent=59 // pred_fallthru
        _
    $region60: #{tpu_custom_call.1} parent=5 // pred_fallthru
      _
  $region6: #{tpu_custom_call.1} parent=0 // loop_footer
    %s18 = sadd.s32 1, %s14
  $region7: #{tpu_custom_call.1} parent=0 // loop_footer_branch
    %13 = sbr.rel target = $region3
  $region8: #{tpu_custom_call.1} parent=0 // loop_exit
    _

</llo_original>
